<compile_context>
chip_gen: v7x
topology: tpu7x:2x2x1
jax: 0.10.0
libtpu: 0.0.40
codegen_flags: <defaults>
</compile_context>

<pallas_src>
import jax
import jax.numpy as jnp
from jax.experimental import pallas as pl
from jax.experimental.pallas import tpu as pltpu


# ------------------------------ Pallas kernels ------------------------------ #
def _matmul_bias_prelu_kernel(a_ref, w_ref, b_ref, alpha_ref, o_ref):
    """One conv layer as im2col matmul: (M,K)f32 x (K,N)bf16 + bias, then PReLU."""
    h = jnp.dot(a_ref[...].astype(jnp.bfloat16), w_ref[...],
                preferred_element_type=jnp.float32) + b_ref[...]
    alpha = alpha_ref[0]                       # scalar PReLU slope from SMEM
    o_ref[...] = jnp.where(h >= 0.0, h, alpha * h)


def _fc_stack_l2_kernel(x_ref, w1_ref, b1_ref, a1_ref,
                        w2_ref, b2_ref, a2_ref,
                        w3_ref, b3_ref, o_ref):
    """Fused fc: Linear -> PReLU -> Linear -> PReLU -> Linear -> row-wise L2 norm."""
    def prelu(v, a):
        return jnp.where(v >= 0.0, v, a * v)

    h = jnp.dot(x_ref[...].astype(jnp.bfloat16), w1_ref[...],
                preferred_element_type=jnp.float32) + b1_ref[...]
    h = prelu(h, a1_ref[0])
    h = jnp.dot(h.astype(jnp.bfloat16), w2_ref[...],
                preferred_element_type=jnp.float32) + b2_ref[...]
    h = prelu(h, a2_ref[0])
    o = jnp.dot(h.astype(jnp.bfloat16), w3_ref[...],
                preferred_element_type=jnp.float32) + b3_ref[...]
    norm = jnp.sqrt(jnp.sum(o * o, axis=-1, keepdims=True))
    o_ref[...] = o / norm


# ----------------------------- kernel wrappers ------------------------------ #
_VMEM = pltpu.MemorySpace.VMEM
_SMEM = pltpu.MemorySpace.SMEM


def _matmul_bias_prelu(a, w_bf16, bias, alpha):
    M = a.shape[0]
    N = w_bf16.shape[1]
    return pl.pallas_call(
        _matmul_bias_prelu_kernel,
        out_shape=jax.ShapeDtypeStruct((M, N), jnp.float32),
        in_specs=[
            pl.BlockSpec(memory_space=_VMEM),   # im2col patches (M, K) f32
            pl.BlockSpec(memory_space=_VMEM),   # weight column matrix (K, N) bf16
            pl.BlockSpec(memory_space=_VMEM),   # bias (1, N) f32
            pl.BlockSpec(memory_space=_SMEM),   # PReLU slope (1,) f32
        ],
        out_specs=pl.BlockSpec(memory_space=_VMEM),
    )(a, w_bf16, bias, alpha)


def _fc_stack_l2(x, w1, b1, a1, w2, b2, a2, w3, b3):
    M = x.shape[0]
    E = w3.shape[1]
    return pl.pallas_call(
        _fc_stack_l2_kernel,
        out_shape=jax.ShapeDtypeStruct((M, E), jnp.float32),
        in_specs=[
            pl.BlockSpec(memory_space=_VMEM),   # x (M, 1024) f32
            pl.BlockSpec(memory_space=_VMEM),   # fc1 weight (1024, 256) bf16
            pl.BlockSpec(memory_space=_VMEM),   # fc1 bias (1, 256) f32
            pl.BlockSpec(memory_space=_SMEM),   # PReLU slope
            pl.BlockSpec(memory_space=_VMEM),   # fc2 weight (256, 256) bf16
            pl.BlockSpec(memory_space=_VMEM),   # fc2 bias (1, 256) f32
            pl.BlockSpec(memory_space=_SMEM),   # PReLU slope
            pl.BlockSpec(memory_space=_VMEM),   # fc3 weight (256, 2) bf16
            pl.BlockSpec(memory_space=_VMEM),   # fc3 bias (1, 2) f32
        ],
        out_specs=pl.BlockSpec(memory_space=_VMEM),
    )(x, w1, b1, a1, w2, b2, a2, w3, b3)


# --------------------------------- wrapper ---------------------------------- #
def _maxpool2x2_nchw(x):
    B, C, H, W = x.shape
    return x.reshape(B, C, H // 2, 2, W // 2, 2).max(axis=(3, 5))


def embedding_net_l2_forward(x, params):
    """Pallas implementation of EmbeddingNetL2.forward(x). x: (B, 1, 28, 28) f32."""
    B = x.shape[0]
    K = 5
    C1 = params["conv1_w"].shape[0]            # 32
    C2 = params["conv2_w"].shape[0]            # 64
    H1 = x.shape[2] - K + 1                    # 24
    W1 = x.shape[3] - K + 1                    # 24

    # ---- conv1 (im2col -> fused matmul + bias + PReLU kernel) ----
    p1 = jnp.stack([x[:, 0, dy:dy + H1, dx:dx + W1]
                    for dy in range(K) for dx in range(K)], axis=-1)      # (B,24,24,25)
    patches1 = p1.reshape(B * H1 * W1, K * K)
    w1_col = params["conv1_w"].reshape(C1, K * K).T.astype(jnp.bfloat16)  # (25,32)
    h1 = _matmul_bias_prelu(patches1, w1_col,
                            params["conv1_b"].reshape(1, C1), params["prelu1"])
    h1 = h1.reshape(B, H1, W1, C1).transpose(0, 3, 1, 2)                  # NCHW
    pool1 = _maxpool2x2_nchw(h1)                                          # (B,32,12,12)

    # ---- conv2 ----
    H2 = H1 // 2 - K + 1                                                  # 8
    W2 = W1 // 2 - K + 1                                                  # 8
    p2 = jnp.stack([pool1[:, :, dy:dy + H2, dx:dx + W2]
                    for dy in range(K) for dx in range(K)], axis=2)       # (B,32,25,8,8)
    patches2 = p2.transpose(0, 3, 4, 1, 2).reshape(B * H2 * W2, C1 * K * K)
    w2_col = params["conv2_w"].reshape(C2, C1 * K * K).T.astype(jnp.bfloat16)
    h2 = _matmul_bias_prelu(patches2, w2_col,
                            params["conv2_b"].reshape(1, C2), params["prelu2"])
    h2 = h2.reshape(B, H2, W2, C2).transpose(0, 3, 1, 2)                  # NCHW
    pool2 = _maxpool2x2_nchw(h2)                                          # (B,64,4,4)

    # ---- fc stack + L2 normalize (single fused kernel, batch padded to 8) ----
    xf = pool2.reshape(B, -1)                  # PyTorch flatten order (C, H, W)
    Bp = ((B + 7) // 8) * 8
    xf = jnp.pad(xf, ((0, Bp - B), (0, 0)), mode="edge")
    out = _fc_stack_l2(
        xf,
        params["fc1_w"].T.astype(jnp.bfloat16), params["fc1_b"].reshape(1, -1), params["prelu3"],
        params["fc2_w"].T.astype(jnp.bfloat16), params["fc2_b"].reshape(1, -1), params["prelu4"],
        params["fc3_w"].T.astype(jnp.bfloat16), params["fc3_b"].reshape(1, -1))
    return out[:B]


def get_embedding(x, params):
    """EmbeddingNetL2.get_embedding == forward."""
    return embedding_net_l2_forward(x, params)


# ----------------------------- parameter init ------------------------------- #
def init_params(key):
    """PyTorch-default-style init: U(-1/sqrt(fan_in), 1/sqrt(fan_in)); PReLU slope 0.25."""
    ks = jax.random.split(key, 10)

    def u(k, shape, fan_in):
        lim = 1.0 / jnp.sqrt(jnp.float32(fan_in))
        return jax.random.uniform(k, shape, jnp.float32, -lim, lim)

    return {
        "conv1_w": u(ks[0], (32, 1, 5, 5), 25),
        "conv1_b": u(ks[1], (32,), 25),
        "conv2_w": u(ks[2], (64, 32, 5, 5), 800),
        "conv2_b": u(ks[3], (64,), 800),
        "fc1_w": u(ks[4], (256, 1024), 1024),
        "fc1_b": u(ks[5], (256,), 1024),
        "fc2_w": u(ks[6], (256, 256), 256),
        "fc2_b": u(ks[7], (256,), 256),
        "fc3_w": u(ks[8], (2, 256), 256),
        "fc3_b": u(ks[9], (2,), 256),
        "prelu1": jnp.full((1,), 0.25, jnp.float32),
        "prelu2": jnp.full((1,), 0.25, jnp.float32),
        "prelu3": jnp.full((1,), 0.25, jnp.float32),
        "prelu4": jnp.full((1,), 0.25, jnp.float32),
    }


# ------------------------- pure-JAX reference model -------------------------- #
def ref_forward(x, params):
    """Same math as the Pallas pipeline (bf16 matmul operands, f32 accumulation),
    but using XLA's conv/dot directly — validates layout & im2col ordering."""
    def prelu(v, a):
        return jnp.where(v >= 0.0, v, a * v)

    def conv(h, w, b):
        o = jax.lax.conv_general_dilated(
            h.astype(jnp.bfloat16), w.astype(jnp.bfloat16), (1, 1), "VALID",
            dimension_numbers=("NCHW", "OIHW", "NCHW"),
            preferred_element_type=jnp.float32)
        return o + b[None, :, None, None]

    def linear(h, w, b):
        return jnp.dot(h.astype(jnp.bfloat16), w.T.astype(jnp.bfloat16),
                       preferred_element_type=jnp.float32) + b

    h = prelu(conv(x, params["conv1_w"], params["conv1_b"]), params["prelu1"][0])
    h = _maxpool2x2_nchw(h)
    h = prelu(conv(h, params["conv2_w"], params["conv2_b"]), params["prelu2"][0])
    h = _maxpool2x2_nchw(h)
    h = h.reshape(h.shape[0], -1)
    h = prelu(linear(h, params["fc1_w"], params["fc1_b"]), params["prelu3"][0])
    h = prelu(linear(h, params["fc2_w"], params["fc2_b"]), params["prelu4"][0])
    o = linear(h, params["fc3_w"], params["fc3_b"])
    return o / jnp.sqrt(jnp.sum(o * o, axis=1, keepdims=True))


# ----------------------------------- main ------------------------------------ #
if __name__ == "__main__":
    key = jax.random.PRNGKey(0)
    kx, kp = jax.random.split(key)

    B = 2
    x = jax.random.normal(kx, (B, 1, 28, 28), jnp.float32)   # MNIST-like input
    params = init_params(kp)

    fwd = jax.jit(embedding_net_l2_forward)
    out = fwd(x, params)
    jax.block_until_ready(out)

    ref = ref_forward(x, params)

    assert out.shape == (B, 2)
    # rows must be L2-normalized
    norms = jnp.sqrt(jnp.sum(out * out, axis=1))
    assert jnp.allclose(norms, 1.0, atol=1e-3)
    # matches the XLA reference (identical bf16/f32 math) to fp noise
    assert jnp.allclose(out, ref, atol=1e-2, rtol=1e-2)

    print("KERNEL_OK")
</pallas_src>

<mosaic_0001>
module attributes {stable_mosaic.version = 11 : i64} {
  func.func @_matmul_bias_prelu_kernel(%arg0: memref<1152x25xf32, #tpu.memory_space<vmem>>, %arg1: memref<25x32xbf16, #tpu.memory_space<vmem>>, %arg2: memref<1x32xf32, #tpu.memory_space<vmem>>, %arg3: memref<1xf32, #tpu.memory_space<smem>>, %arg4: memref<1152x32xf32, #tpu.memory_space<vmem>>) attributes {dimension_semantics = [], scalar_prefetch = 0 : i64, scratch_operands = 0 : i64, tpu.core_type = #tpu.core_type<tc>} {
    %c0 = arith.constant 0 : index
    %c0_0 = arith.constant 0 : index
    %0 = vector.load %arg0[%c0, %c0_0] : memref<1152x25xf32, #tpu.memory_space<vmem>>, vector<1152x25xf32>
    %1 = arith.truncf %0 : vector<1152x25xf32> to vector<1152x25xbf16>
    %c0_1 = arith.constant 0 : index
    %c0_2 = arith.constant 0 : index
    %2 = vector.load %arg1[%c0_1, %c0_2] : memref<25x32xbf16, #tpu.memory_space<vmem>>, vector<25x32xbf16>
    %cst = arith.constant dense<0.000000e+00> : vector<1152x32xf32>
    %3 = tpu.matmul %1, %2, %cst {dimension_numbers = #tpu.dot_dimension_numbers<[1], [0], [0], [1], [0, 0, 1, 1], [], []>} : vector<1152x25xbf16>, vector<25x32xbf16>, vector<1152x32xf32> -> vector<1152x32xf32>
    %c0_3 = arith.constant 0 : index
    %c0_4 = arith.constant 0 : index
    %4 = vector.load %arg2[%c0_3, %c0_4] : memref<1x32xf32, #tpu.memory_space<vmem>>, vector<1x32xf32>
    %5 = vector.broadcast %4 : vector<1x32xf32> to vector<1152x32xf32>
    %6 = arith.addf %3, %5 : vector<1152x32xf32>
    %c0_5 = arith.constant 0 : index
    %7 = memref.load %arg3[%c0_5] : memref<1xf32, #tpu.memory_space<smem>>
    %cst_6 = arith.constant 0.000000e+00 : f32
    %8 = vector.broadcast %cst_6 : f32 to vector<1152x32xf32>
    %9 = arith.cmpf oge, %6, %8 : vector<1152x32xf32>
    %10 = vector.broadcast %7 : f32 to vector<1152x32xf32>
    %11 = arith.mulf %10, %6 : vector<1152x32xf32>
    %12 = arith.select %9, %6, %11 : vector<1152x32xi1>, vector<1152x32xf32>
    %c0_7 = arith.constant 0 : index
    %c0_8 = arith.constant 0 : index
    %13 = vector.load %arg4[%c0_7, %c0_8] : memref<1152x32xf32, #tpu.memory_space<vmem>>, vector<1152x32xf32>
    tpu.vector_store %arg4[%c0_7, %c0_8], %12 {strides = array<i32>} : memref<1152x32xf32, #tpu.memory_space<vmem>>, vector<1152x32xf32>,
    return
  }
}

module attributes {stable_mosaic.version = 11 : i64} {
  func.func @_matmul_bias_prelu_kernel(%arg0: memref<128x800xf32, #tpu.memory_space<vmem>>, %arg1: memref<800x64xbf16, #tpu.memory_space<vmem>>, %arg2: memref<1x64xf32, #tpu.memory_space<vmem>>, %arg3: memref<1xf32, #tpu.memory_space<smem>>, %arg4: memref<128x64xf32, #tpu.memory_space<vmem>>) attributes {dimension_semantics = [], scalar_prefetch = 0 : i64, scratch_operands = 0 : i64, tpu.core_type = #tpu.core_type<tc>} {
    %c0 = arith.constant 0 : index
    %c0_0 = arith.constant 0 : index
    %0 = vector.load %arg0[%c0, %c0_0] : memref<128x800xf32, #tpu.memory_space<vmem>>, vector<128x800xf32>
    %1 = arith.truncf %0 : vector<128x800xf32> to vector<128x800xbf16>
    %c0_1 = arith.constant 0 : index
    %c0_2 = arith.constant 0 : index
    %2 = vector.load %arg1[%c0_1, %c0_2] : memref<800x64xbf16, #tpu.memory_space<vmem>>, vector<800x64xbf16>
    %cst = arith.constant dense<0.000000e+00> : vector<128x64xf32>
    %3 = tpu.matmul %1, %2, %cst {dimension_numbers = #tpu.dot_dimension_numbers<[1], [0], [0], [1], [0, 0, 1, 1], [], []>} : vector<128x800xbf16>, vector<800x64xbf16>, vector<128x64xf32> -> vector<128x64xf32>
    %c0_3 = arith.constant 0 : index
    %c0_4 = arith.constant 0 : index
    %4 = vector.load %arg2[%c0_3, %c0_4] : memref<1x64xf32, #tpu.memory_space<vmem>>, vector<1x64xf32>
    %5 = vector.broadcast %4 : vector<1x64xf32> to vector<128x64xf32>
    %6 = arith.addf %3, %5 : vector<128x64xf32>
    %c0_5 = arith.constant 0 : index
    %7 = memref.load %arg3[%c0_5] : memref<1xf32, #tpu.memory_space<smem>>
    %cst_6 = arith.constant 0.000000e+00 : f32
    %8 = vector.broadcast %cst_6 : f32 to vector<128x64xf32>
    %9 = arith.cmpf oge, %6, %8 : vector<128x64xf32>
    %10 = vector.broadcast %7 : f32 to vector<128x64xf32>
    %11 = arith.mulf %10, %6 : vector<128x64xf32>
    %12 = arith.select %9, %6, %11 : vector<128x64xi1>, vector<128x64xf32>
    %c0_7 = arith.constant 0 : index
    %c0_8 = arith.constant 0 : index
    %13 = vector.load %arg4[%c0_7, %c0_8] : memref<128x64xf32, #tpu.memory_space<vmem>>, vector<128x64xf32>
    tpu.vector_store %arg4[%c0_7, %c0_8], %12 {strides = array<i32>} : memref<128x64xf32, #tpu.memory_space<vmem>>, vector<128x64xf32>,
    return
  }
}

module attributes {stable_mosaic.version = 11 : i64} {
  func.func @_fc_stack_l2_kernel(%arg0: memref<8x1024xf32, #tpu.memory_space<vmem>>, %arg1: memref<1024x256xbf16, #tpu.memory_space<vmem>>, %arg2: memref<1x256xf32, #tpu.memory_space<vmem>>, %arg3: memref<1xf32, #tpu.memory_space<smem>>, %arg4: memref<256x256xbf16, #tpu.memory_space<vmem>>, %arg5: memref<1x256xf32, #tpu.memory_space<vmem>>, %arg6: memref<1xf32, #tpu.memory_space<smem>>, %arg7: memref<256x2xbf16, #tpu.memory_space<vmem>>, %arg8: memref<1x2xf32, #tpu.memory_space<vmem>>, %arg9: memref<8x2xf32, #tpu.memory_space<vmem>>) attributes {dimension_semantics = [], scalar_prefetch = 0 : i64, scratch_operands = 0 : i64, tpu.core_type = #tpu.core_type<tc>} {
    %c0 = arith.constant 0 : index
    %c0_0 = arith.constant 0 : index
    %0 = vector.load %arg0[%c0, %c0_0] : memref<8x1024xf32, #tpu.memory_space<vmem>>, vector<8x1024xf32>
    %1 = arith.truncf %0 : vector<8x1024xf32> to vector<8x1024xbf16>
    %c0_1 = arith.constant 0 : index
    %c0_2 = arith.constant 0 : index
    %2 = vector.load %arg1[%c0_1, %c0_2] : memref<1024x256xbf16, #tpu.memory_space<vmem>>, vector<1024x256xbf16>
    %cst = arith.constant dense<0.000000e+00> : vector<8x256xf32>
    %3 = tpu.matmul %1, %2, %cst {dimension_numbers = #tpu.dot_dimension_numbers<[1], [0], [0], [1], [0, 0, 1, 1], [], []>} : vector<8x1024xbf16>, vector<1024x256xbf16>, vector<8x256xf32> -> vector<8x256xf32>
    %c0_3 = arith.constant 0 : index
    %c0_4 = arith.constant 0 : index
    %4 = vector.load %arg2[%c0_3, %c0_4] : memref<1x256xf32, #tpu.memory_space<vmem>>, vector<1x256xf32>
    %5 = vector.broadcast %4 : vector<1x256xf32> to vector<8x256xf32>
    %6 = arith.addf %3, %5 : vector<8x256xf32>
    %c0_5 = arith.constant 0 : index
    %7 = memref.load %arg3[%c0_5] : memref<1xf32, #tpu.memory_space<smem>>
    %cst_6 = arith.constant 0.000000e+00 : f32
    %8 = vector.broadcast %cst_6 : f32 to vector<8x256xf32>
    %9 = arith.cmpf oge, %6, %8 : vector<8x256xf32>
    %10 = vector.broadcast %7 : f32 to vector<8x256xf32>
    %11 = arith.mulf %10, %6 : vector<8x256xf32>
    %12 = arith.select %9, %6, %11 : vector<8x256xi1>, vector<8x256xf32>
    %13 = arith.truncf %12 : vector<8x256xf32> to vector<8x256xbf16>
    %c0_7 = arith.constant 0 : index
    %c0_8 = arith.constant 0 : index
    %14 = vector.load %arg4[%c0_7, %c0_8] : memref<256x256xbf16, #tpu.memory_space<vmem>>, vector<256x256xbf16>
    %cst_9 = arith.constant dense<0.000000e+00> : vector<8x256xf32>
    %15 = tpu.matmul %13, %14, %cst_9 {dimension_numbers = #tpu.dot_dimension_numbers<[1], [0], [0], [1], [0, 0, 1, 1], [], []>} : vector<8x256xbf16>, vector<256x256xbf16>, vector<8x256xf32> -> vector<8x256xf32>
    %c0_10 = arith.constant 0 : index
    %c0_11 = arith.constant 0 : index
    %16 = vector.load %arg5[%c0_10, %c0_11] : memref<1x256xf32, #tpu.memory_space<vmem>>, vector<1x256xf32>
    %17 = vector.broadcast %16 : vector<1x256xf32> to vector<8x256xf32>
    %18 = arith.addf %15, %17 : vector<8x256xf32>
    %c0_12 = arith.constant 0 : index
    %19 = memref.load %arg6[%c0_12] : memref<1xf32, #tpu.memory_space<smem>>
    %cst_13 = arith.constant 0.000000e+00 : f32
    %20 = vector.broadcast %cst_13 : f32 to vector<8x256xf32>
    %21 = arith.cmpf oge, %18, %20 : vector<8x256xf32>
    %22 = vector.broadcast %19 : f32 to vector<8x256xf32>
    %23 = arith.mulf %22, %18 : vector<8x256xf32>
    %24 = arith.select %21, %18, %23 : vector<8x256xi1>, vector<8x256xf32>
    %25 = arith.truncf %24 : vector<8x256xf32> to vector<8x256xbf16>
    %c0_14 = arith.constant 0 : index
    %c0_15 = arith.constant 0 : index
    %26 = vector.load %arg7[%c0_14, %c0_15] : memref<256x2xbf16, #tpu.memory_space<vmem>>, vector<256x2xbf16>
    %cst_16 = arith.constant dense<0.000000e+00> : vector<8x2xf32>
    %27 = tpu.matmul %25, %26, %cst_16 {dimension_numbers = #tpu.dot_dimension_numbers<[1], [0], [0], [1], [0, 0, 1, 1], [], []>} : vector<8x256xbf16>, vector<256x2xbf16>, vector<8x2xf32> -> vector<8x2xf32>
    %c0_17 = arith.constant 0 : index
    %c0_18 = arith.constant 0 : index
    %28 = vector.load %arg8[%c0_17, %c0_18] : memref<1x2xf32, #tpu.memory_space<vmem>>, vector<1x2xf32>
    %29 = vector.broadcast %28 : vector<1x2xf32> to vector<8x2xf32>
    %30 = arith.addf %27, %29 : vector<8x2xf32>
    %31 = arith.mulf %30, %30 : vector<8x2xf32>
    %cst_19 = arith.constant dense<0.000000e+00> : vector<8xf32>
    %32 = vector.multi_reduction <add>, %31, %cst_19 [1] : vector<8x2xf32> to vector<8xf32>
    %33 = vector.shape_cast %32 : vector<8xf32> to vector<8x1xf32>
    %34 = math.sqrt %33 : vector<8x1xf32>
    %35 = vector.broadcast %34 : vector<8x1xf32> to vector<8x2xf32>
    %36 = arith.divf %30, %35 : vector<8x2xf32>
    %c0_20 = arith.constant 0 : index
    %c0_21 = arith.constant 0 : index
    %37 = vector.load %arg9[%c0_20, %c0_21] : memref<8x2xf32, #tpu.memory_space<vmem>>, vector<8x2xf32>
    tpu.vector_store %arg9[%c0_20, %c0_21], %36 {strides = array<i32>} : memref<8x2xf32, #tpu.memory_space<vmem>>, vector<8x2xf32>,
    return
  }
}

</mosaic_0001>

<llo_original>
// kernel: embedding_net_l2_forward.3
$region0: #{embedding_net_l2_forward.3}
  #allocation0 [shape = 'u32[]', space=smem, size = 0x4, offset = 0x4, fixed_abs, tag = 'smem constant byte address 0x4 - core index']
  #allocation1 [shape = 'u32[144,128]{1,0:T(1,128)}', space=vmem, size = 0x12000, scoped, tag = 'internal scratch']
  #allocation2 [shape = 'f32[1]{0:T(128)S(6)}', space=smem, size = 0x200, scoped, tag = 'scoped memory for embedding_net_l2_forward.3']
  %s0 = inlined_call_operand.vmem [shape: f32[1152,25], index: 0, kind: input, shape index: {}]
  %s1 = inlined_call_operand.vmem [shape: bf16[25,32], index: 1, kind: input, shape index: {}]
  %s2 = inlined_call_operand.vmem [shape: f32[1,32], index: 2, kind: input, shape index: {}]
  %s3 = inlined_call_operand.<no memory space> [shape: f32[1], index: 3, kind: input, shape index: {}]
  %s4 = inlined_call_operand.vmem [shape: f32[1152,32], index: 4, kind: output, shape index: {}]
  %s5 = sld [smem:[#allocation0]]
  $region26: #{embedding_net_l2_forward.3} parent=0
    _
  %s7 = ssub.s32 1, %s5
  %s8 = scalar_select 0, %s7, %s5
  %9 = sst [smem:[#allocation2]] %s3
  // Predicated region
  $region2: #{embedding_net_l2_forward.3} parent=0 // pred_check
    _
  $region3: #{embedding_net_l2_forward.3} parent=0 // pred_check_branch
    %11 = sbr.rel (0) target = $region5
  $region4: #{embedding_net_l2_forward.3} parent=0 // pred_region
    _
  $region5: #{embedding_net_l2_forward.3} parent=0 // pred_fallthru
    _
  // Predicated region
  $region6: #{embedding_net_l2_forward.3} parent=0 // pred_check
    _
  $region7: #{embedding_net_l2_forward.3} parent=0 // pred_check_branch
    %13 = sbr.rel (0) target = $region9
  $region8: #{embedding_net_l2_forward.3} parent=0 // pred_region
    _
  $region9: #{embedding_net_l2_forward.3} parent=0 // pred_fallthru
    _
  // Predicated region
  $region10: #{embedding_net_l2_forward.3} parent=0 // pred_check
    _
  $region11: #{embedding_net_l2_forward.3} parent=0 // pred_check_branch
    %15 = sbr.rel (0) target = $region13
  $region12: #{embedding_net_l2_forward.3} parent=0 // pred_region
    _
  $region13: #{embedding_net_l2_forward.3} parent=0 // pred_fallthru
    _
  // Predicated region
  $region14: #{embedding_net_l2_forward.3} parent=0 // pred_check
    _
  $region15: #{embedding_net_l2_forward.3} parent=0 // pred_check_branch
    %17 = sbr.rel (0) target = $region17
  $region16: #{embedding_net_l2_forward.3} parent=0 // pred_region
    _
  $region17: #{embedding_net_l2_forward.3} parent=0 // pred_fallthru
    _
  %v19 = vld [vmem:[%s0] sm:$0xff]
  %v20 = vld [vmem:[%s0 + $0x8] sm:$0xff]
  %v21 = vld [vmem:[%s0 + $0x10] sm:$0xff]
  %v22 = vld [vmem:[%s0 + $0x18] sm:$0xff]
  %v23 = vld [vmem:[%s0 + $0x20] sm:$0xff]
  %v24 = vld [vmem:[%s0 + $0x28] sm:$0xff]
  %v25 = vld [vmem:[%s0 + $0x30] sm:$0xff]
  %v26 = vld [vmem:[%s0 + $0x38] sm:$0xff]
  %v27 = vld [vmem:[%s0 + $0x40] sm:$0xff]
  %v28 = vld [vmem:[%s0 + $0x48] sm:$0xff]
  %v29 = vld [vmem:[%s0 + $0x50] sm:$0xff]
  %v30 = vld [vmem:[%s0 + $0x58] sm:$0xff]
  %v31 = vld [vmem:[%s0 + $0x60] sm:$0xff]
  %v32 = vld [vmem:[%s0 + $0x68] sm:$0xff]
  %v33 = vld [vmem:[%s0 + $0x70] sm:$0xff]
  %v34 = vld [vmem:[%s0 + $0x78] sm:$0xff]
  %v35 = vld [vmem:[%s0 + $0x80] sm:$0xff]
  %v36 = vld [vmem:[%s0 + $0x88] sm:$0xff]
  %v37 = vld [vmem:[%s0 + $0x90] sm:$0xff]
  %v38 = vld [vmem:[%s0 + $0x98] sm:$0xff]
  %v39 = vld [vmem:[%s0 + $0xa0] sm:$0xff]
  %v40 = vld [vmem:[%s0 + $0xa8] sm:$0xff]
  %v41 = vld [vmem:[%s0 + $0xb0] sm:$0xff]
  %v42 = vld [vmem:[%s0 + $0xb8] sm:$0xff]
  %v43 = vld [vmem:[%s0 + $0xc0] sm:$0xff]
  %v44 = vld [vmem:[%s0 + $0xc8] sm:$0xff]
  %v45 = vld [vmem:[%s0 + $0xd0] sm:$0xff]
  %v46 = vld [vmem:[%s0 + $0xd8] sm:$0xff]
  %v47 = vld [vmem:[%s0 + $0xe0] sm:$0xff]
  %v48 = vld [vmem:[%s0 + $0xe8] sm:$0xff]
  %v49 = vld [vmem:[%s0 + $0xf0] sm:$0xff]
  %v50 = vld [vmem:[%s0 + $0xf8] sm:$0xff]
  %v51 = vld [vmem:[%s0 + $0x100] sm:$0xff]
  %v52 = vld [vmem:[%s0 + $0x108] sm:$0xff]
  %v53 = vld [vmem:[%s0 + $0x110] sm:$0xff]
  %v54 = vld [vmem:[%s0 + $0x118] sm:$0xff]
  %v55 = vld [vmem:[%s0 + $0x120] sm:$0xff]
  %v56 = vld [vmem:[%s0 + $0x128] sm:$0xff]
  %v57 = vld [vmem:[%s0 + $0x130] sm:$0xff]
  %v58 = vld [vmem:[%s0 + $0x138] sm:$0xff]
  %v59 = vld [vmem:[%s0 + $0x140] sm:$0xff]
  %v60 = vld [vmem:[%s0 + $0x148] sm:$0xff]
  %v61 = vld [vmem:[%s0 + $0x150] sm:$0xff]
  %v62 = vld [vmem:[%s0 + $0x158] sm:$0xff]
  %v63 = vld [vmem:[%s0 + $0x160] sm:$0xff]
  %v64 = vld [vmem:[%s0 + $0x168] sm:$0xff]
  %v65 = vld [vmem:[%s0 + $0x170] sm:$0xff]
  %v66 = vld [vmem:[%s0 + $0x178] sm:$0xff]
  %v67 = vld [vmem:[%s0 + $0x180] sm:$0xff]
  %v68 = vld [vmem:[%s0 + $0x188] sm:$0xff]
  %v69 = vld [vmem:[%s0 + $0x190] sm:$0xff]
  %v70 = vld [vmem:[%s0 + $0x198] sm:$0xff]
  %v71 = vld [vmem:[%s0 + $0x1a0] sm:$0xff]
  %v72 = vld [vmem:[%s0 + $0x1a8] sm:$0xff]
  %v73 = vld [vmem:[%s0 + $0x1b0] sm:$0xff]
  %v74 = vld [vmem:[%s0 + $0x1b8] sm:$0xff]
  %v75 = vld [vmem:[%s0 + $0x1c0] sm:$0xff]
  %v76 = vld [vmem:[%s0 + $0x1c8] sm:$0xff]
  %v77 = vld [vmem:[%s0 + $0x1d0] sm:$0xff]
  %v78 = vld [vmem:[%s0 + $0x1d8] sm:$0xff]
  %v79 = vld [vmem:[%s0 + $0x1e0] sm:$0xff]
  %v80 = vld [vmem:[%s0 + $0x1e8] sm:$0xff]
  %v81 = vld [vmem:[%s0 + $0x1f0] sm:$0xff]
  %v82 = vld [vmem:[%s0 + $0x1f8] sm:$0xff]
  %v83 = vld [vmem:[%s0 + $0x200] sm:$0xff]
  %v84 = vld [vmem:[%s0 + $0x208] sm:$0xff]
  %v85 = vld [vmem:[%s0 + $0x210] sm:$0xff]
  %v86 = vld [vmem:[%s0 + $0x218] sm:$0xff]
  %v87 = vld [vmem:[%s0 + $0x220] sm:$0xff]
  %v88 = vld [vmem:[%s0 + $0x228] sm:$0xff]
  %v89 = vld [vmem:[%s0 + $0x230] sm:$0xff]
  %v90 = vld [vmem:[%s0 + $0x238] sm:$0xff]
  %v91 = vld [vmem:[%s0 + $0x240] sm:$0xff]
  %v92 = vld [vmem:[%s0 + $0x248] sm:$0xff]
  %v93 = vld [vmem:[%s0 + $0x250] sm:$0xff]
  %v94 = vld [vmem:[%s0 + $0x258] sm:$0xff]
  %v95 = vld [vmem:[%s0 + $0x260] sm:$0xff]
  %v96 = vld [vmem:[%s0 + $0x268] sm:$0xff]
  %v97 = vld [vmem:[%s0 + $0x270] sm:$0xff]
  %v98 = vld [vmem:[%s0 + $0x278] sm:$0xff]
  %v99 = vld [vmem:[%s0 + $0x280] sm:$0xff]
  %v100 = vld [vmem:[%s0 + $0x288] sm:$0xff]
  %v101 = vld [vmem:[%s0 + $0x290] sm:$0xff]
  %v102 = vld [vmem:[%s0 + $0x298] sm:$0xff]
  %v103 = vld [vmem:[%s0 + $0x2a0] sm:$0xff]
  %v104 = vld [vmem:[%s0 + $0x2a8] sm:$0xff]
  %v105 = vld [vmem:[%s0 + $0x2b0] sm:$0xff]
  %v106 = vld [vmem:[%s0 + $0x2b8] sm:$0xff]
  %v107 = vld [vmem:[%s0 + $0x2c0] sm:$0xff]
  %v108 = vld [vmem:[%s0 + $0x2c8] sm:$0xff]
  %v109 = vld [vmem:[%s0 + $0x2d0] sm:$0xff]
  %v110 = vld [vmem:[%s0 + $0x2d8] sm:$0xff]
  %v111 = vld [vmem:[%s0 + $0x2e0] sm:$0xff]
  %v112 = vld [vmem:[%s0 + $0x2e8] sm:$0xff]
  %v113 = vld [vmem:[%s0 + $0x2f0] sm:$0xff]
  %v114 = vld [vmem:[%s0 + $0x2f8] sm:$0xff]
  %v115 = vld [vmem:[%s0 + $0x300] sm:$0xff]
  %v116 = vld [vmem:[%s0 + $0x308] sm:$0xff]
  %v117 = vld [vmem:[%s0 + $0x310] sm:$0xff]
  %v118 = vld [vmem:[%s0 + $0x318] sm:$0xff]
  %v119 = vld [vmem:[%s0 + $0x320] sm:$0xff]
  %v120 = vld [vmem:[%s0 + $0x328] sm:$0xff]
  %v121 = vld [vmem:[%s0 + $0x330] sm:$0xff]
  %v122 = vld [vmem:[%s0 + $0x338] sm:$0xff]
  %v123 = vld [vmem:[%s0 + $0x340] sm:$0xff]
  %v124 = vld [vmem:[%s0 + $0x348] sm:$0xff]
  %v125 = vld [vmem:[%s0 + $0x350] sm:$0xff]
  %v126 = vld [vmem:[%s0 + $0x358] sm:$0xff]
  %v127 = vld [vmem:[%s0 + $0x360] sm:$0xff]
  %v128 = vld [vmem:[%s0 + $0x368] sm:$0xff]
  %v129 = vld [vmem:[%s0 + $0x370] sm:$0xff]
  %v130 = vld [vmem:[%s0 + $0x378] sm:$0xff]
  %v131 = vld [vmem:[%s0 + $0x380] sm:$0xff]
  %v132 = vld [vmem:[%s0 + $0x388] sm:$0xff]
  %v133 = vld [vmem:[%s0 + $0x390] sm:$0xff]
  %v134 = vld [vmem:[%s0 + $0x398] sm:$0xff]
  %v135 = vld [vmem:[%s0 + $0x3a0] sm:$0xff]
  %v136 = vld [vmem:[%s0 + $0x3a8] sm:$0xff]
  %v137 = vld [vmem:[%s0 + $0x3b0] sm:$0xff]
  %v138 = vld [vmem:[%s0 + $0x3b8] sm:$0xff]
  %v139 = vld [vmem:[%s0 + $0x3c0] sm:$0xff]
  %v140 = vld [vmem:[%s0 + $0x3c8] sm:$0xff]
  %v141 = vld [vmem:[%s0 + $0x3d0] sm:$0xff]
  %v142 = vld [vmem:[%s0 + $0x3d8] sm:$0xff]
  %v143 = vld [vmem:[%s0 + $0x3e0] sm:$0xff]
  %v144 = vld [vmem:[%s0 + $0x3e8] sm:$0xff]
  %v145 = vld [vmem:[%s0 + $0x3f0] sm:$0xff]
  %v146 = vld [vmem:[%s0 + $0x3f8] sm:$0xff]
  %v147 = vld [vmem:[%s0 + $0x400] sm:$0xff]
  %v148 = vld [vmem:[%s0 + $0x408] sm:$0xff]
  %v149 = vld [vmem:[%s0 + $0x410] sm:$0xff]
  %v150 = vld [vmem:[%s0 + $0x418] sm:$0xff]
  %v151 = vld [vmem:[%s0 + $0x420] sm:$0xff]
  %v152 = vld [vmem:[%s0 + $0x428] sm:$0xff]
  %v153 = vld [vmem:[%s0 + $0x430] sm:$0xff]
  %v154 = vld [vmem:[%s0 + $0x438] sm:$0xff]
  %v155 = vld [vmem:[%s0 + $0x440] sm:$0xff]
  %v156 = vld [vmem:[%s0 + $0x448] sm:$0xff]
  %v157 = vld [vmem:[%s0 + $0x450] sm:$0xff]
  %v158 = vld [vmem:[%s0 + $0x458] sm:$0xff]
  %v159 = vld [vmem:[%s0 + $0x460] sm:$0xff]
  %v160 = vld [vmem:[%s0 + $0x468] sm:$0xff]
  %v161 = vld [vmem:[%s0 + $0x470] sm:$0xff]
  %v162 = vld [vmem:[%s0 + $0x478] sm:$0xff]
  %v163 = vpack.c.bf16 %v20, %v19
  %v164 = vpack.c.bf16 %v22, %v21
  %v165 = vpack.c.bf16 %v24, %v23
  %v166 = vpack.c.bf16 %v26, %v25
  %v167 = vpack.c.bf16 %v28, %v27
  %v168 = vpack.c.bf16 %v30, %v29
  %v169 = vpack.c.bf16 %v32, %v31
  %v170 = vpack.c.bf16 %v34, %v33
  %v171 = vpack.c.bf16 %v36, %v35
  %v172 = vpack.c.bf16 %v38, %v37
  %v173 = vpack.c.bf16 %v40, %v39
  %v174 = vpack.c.bf16 %v42, %v41
  %v175 = vpack.c.bf16 %v44, %v43
  %v176 = vpack.c.bf16 %v46, %v45
  %v177 = vpack.c.bf16 %v48, %v47
  %v178 = vpack.c.bf16 %v50, %v49
  %v179 = vpack.c.bf16 %v52, %v51
  %v180 = vpack.c.bf16 %v54, %v53
  %v181 = vpack.c.bf16 %v56, %v55
  %v182 = vpack.c.bf16 %v58, %v57
  %v183 = vpack.c.bf16 %v60, %v59
  %v184 = vpack.c.bf16 %v62, %v61
  %v185 = vpack.c.bf16 %v64, %v63
  %v186 = vpack.c.bf16 %v66, %v65
  %v187 = vpack.c.bf16 %v68, %v67
  %v188 = vpack.c.bf16 %v70, %v69
  %v189 = vpack.c.bf16 %v72, %v71
  %v190 = vpack.c.bf16 %v74, %v73
  %v191 = vpack.c.bf16 %v76, %v75
  %v192 = vpack.c.bf16 %v78, %v77
  %v193 = vpack.c.bf16 %v80, %v79
  %v194 = vpack.c.bf16 %v82, %v81
  %v195 = vpack.c.bf16 %v84, %v83
  %v196 = vpack.c.bf16 %v86, %v85
  %v197 = vpack.c.bf16 %v88, %v87
  %v198 = vpack.c.bf16 %v90, %v89
  %v199 = vpack.c.bf16 %v92, %v91
  %v200 = vpack.c.bf16 %v94, %v93
  %v201 = vpack.c.bf16 %v96, %v95
  %v202 = vpack.c.bf16 %v98, %v97
  %v203 = vpack.c.bf16 %v100, %v99
  %v204 = vpack.c.bf16 %v102, %v101
  %v205 = vpack.c.bf16 %v104, %v103
  %v206 = vpack.c.bf16 %v106, %v105
  %v207 = vpack.c.bf16 %v108, %v107
  %v208 = vpack.c.bf16 %v110, %v109
  %v209 = vpack.c.bf16 %v112, %v111
  %v210 = vpack.c.bf16 %v114, %v113
  %v211 = vpack.c.bf16 %v116, %v115
  %v212 = vpack.c.bf16 %v118, %v117
  %v213 = vpack.c.bf16 %v120, %v119
  %v214 = vpack.c.bf16 %v122, %v121
  %v215 = vpack.c.bf16 %v124, %v123
  %v216 = vpack.c.bf16 %v126, %v125
  %v217 = vpack.c.bf16 %v128, %v127
  %v218 = vpack.c.bf16 %v130, %v129
  %v219 = vpack.c.bf16 %v132, %v131
  %v220 = vpack.c.bf16 %v134, %v133
  %v221 = vpack.c.bf16 %v136, %v135
  %v222 = vpack.c.bf16 %v138, %v137
  %v223 = vpack.c.bf16 %v140, %v139
  %v224 = vpack.c.bf16 %v142, %v141
  %v225 = vpack.c.bf16 %v144, %v143
  %v226 = vpack.c.bf16 %v146, %v145
  %v227 = vpack.c.bf16 %v148, %v147
  %v228 = vpack.c.bf16 %v150, %v149
  %v229 = vpack.c.bf16 %v152, %v151
  %v230 = vpack.c.bf16 %v154, %v153
  %v231 = vpack.c.bf16 %v156, %v155
  %v232 = vpack.c.bf16 %v158, %v157
  %v233 = vpack.c.bf16 %v160, %v159
  %v234 = vpack.c.bf16 %v162, %v161
  %v235 = vld [vmem:[%s1] sm:$0xf]
  %v236 = vld [vmem:[%s1 + $0x4] sm:$0xf]
  %v237 = vld [vmem:[%s1 + $0x8] sm:$0xf]
  %v238 = vld [vmem:[%s1 + $0xc] sm:$0x1]
  %v239 = vld [vmem:[%s2] sm:$0x1]
  %v241 = vlaneseq
  %v242 = vshrl.u32 %v241, 7
  %v243 = vsub.s32 0, %v242
  %v244 = vrot.slane %v239, %v243
  %v250 = vunpack.c.l.b16 %v235
  %v251 = vunpack.c.l.b16 %v236
  %v252 = vunpack.c.l.b16 %v237
  %v253 = vunpack.c.l.b16 %v238
  %v254 = vpack.c.b16 %v251, %v250
  %v255 = vpack.c.b16 %v253, %v252
  %vm257 = vcmask 203776
  %v259 = vsel %vm257, %v163, 0
  %v262 = vsel %vm257, %v164, 0
  %v265 = vsel %vm257, %v165, 0
  %v268 = vsel %vm257, %v166, 0
  %v271 = vsel %vm257, %v167, 0
  %v274 = vsel %vm257, %v168, 0
  %v277 = vsel %vm257, %v169, 0
  %v280 = vsel %vm257, %v170, 0
  %v283 = vsel %vm257, %v171, 0
  %v286 = vsel %vm257, %v172, 0
  %v289 = vsel %vm257, %v173, 0
  %v292 = vsel %vm257, %v174, 0
  %v295 = vsel %vm257, %v175, 0
  %v298 = vsel %vm257, %v176, 0
  %v301 = vsel %vm257, %v177, 0
  %v304 = vsel %vm257, %v178, 0
  %v307 = vsel %vm257, %v179, 0
  %v310 = vsel %vm257, %v180, 0
  %v313 = vsel %vm257, %v181, 0
  %v316 = vsel %vm257, %v182, 0
  %v319 = vsel %vm257, %v183, 0
  %v322 = vsel %vm257, %v184, 0
  %v325 = vsel %vm257, %v185, 0
  %v328 = vsel %vm257, %v186, 0
  %v331 = vsel %vm257, %v187, 0
  %v334 = vsel %vm257, %v188, 0
  %v337 = vsel %vm257, %v189, 0
  %v340 = vsel %vm257, %v190, 0
  %v343 = vsel %vm257, %v191, 0
  %v346 = vsel %vm257, %v192, 0
  %v349 = vsel %vm257, %v193, 0
  %v352 = vsel %vm257, %v194, 0
  %v355 = vsel %vm257, %v195, 0
  %v358 = vsel %vm257, %v196, 0
  %v361 = vsel %vm257, %v197, 0
  %v364 = vsel %vm257, %v198, 0
  %v367 = vsel %vm257, %v199, 0
  %v370 = vsel %vm257, %v200, 0
  %v373 = vsel %vm257, %v201, 0
  %v376 = vsel %vm257, %v202, 0
  %v379 = vsel %vm257, %v203, 0
  %v382 = vsel %vm257, %v204, 0
  %v385 = vsel %vm257, %v205, 0
  %v388 = vsel %vm257, %v206, 0
  %v391 = vsel %vm257, %v207, 0
  %v394 = vsel %vm257, %v208, 0
  %v397 = vsel %vm257, %v209, 0
  %v400 = vsel %vm257, %v210, 0
  %v403 = vsel %vm257, %v211, 0
  %v406 = vsel %vm257, %v212, 0
  %v409 = vsel %vm257, %v213, 0
  %v412 = vsel %vm257, %v214, 0
  %v415 = vsel %vm257, %v215, 0
  %v418 = vsel %vm257, %v216, 0
  %v421 = vsel %vm257, %v217, 0
  %v424 = vsel %vm257, %v218, 0
  %v427 = vsel %vm257, %v219, 0
  %v430 = vsel %vm257, %v220, 0
  %v433 = vsel %vm257, %v221, 0
  %v436 = vsel %vm257, %v222, 0
  %v439 = vsel %vm257, %v223, 0
  %v442 = vsel %vm257, %v224, 0
  %v445 = vsel %vm257, %v225, 0
  %v448 = vsel %vm257, %v226, 0
  %v451 = vsel %vm257, %v227, 0
  %v454 = vsel %vm257, %v228, 0
  %v457 = vsel %vm257, %v229, 0
  %v460 = vsel %vm257, %v230, 0
  %v463 = vsel %vm257, %v231, 0
  %v466 = vsel %vm257, %v232, 0
  %v469 = vsel %vm257, %v233, 0
  %v472 = vsel %vm257, %v234, 0
  %vm474 = vcmask 1043456
  %vm475 = vcmask 1044480
  %v476 = vsel %vm474, 4294967295, 65535
  %v477 = vsel %vm475, %v476, 0
  %v479 = vand.u32 %v255, %v477
  %481 = vmatprep.subr.bf16.mxu0 0
  %482 = vmatpush1.bf16.msra.mxu0 %v254
  %483 = vmatprep.subr.bf16.mxu0 0
  %484 = vmatpush1.bf16.msra.mxu0 %v479
  %485 = vmatprep.subr.bf16.mxu0 0
  %486 = vmatpush1.bf16.msra.mxu0 0
  %487 = vmatprep.subr.bf16.mxu0 0
  %488 = vmatpush1.bf16.msra.mxu0 0
  %489 = vmatprep.subr.bf16.mxu0 0
  %490 = vmatpush1.bf16.msra.mxu0 0
  %491 = vmatprep.subr.bf16.mxu0 0
  %492 = vmatpush1.bf16.msra.mxu0 0
  %493 = vmatprep.subr.bf16.mxu0 0
  %494 = vmatpush1.bf16.msra.mxu0 0
  %495 = vmatprep.subr.bf16.mxu0 0
  %496 = vmatpush1.bf16.msra.mxu0 0
  %497 = vmatprep.subr.bf16.mxu0 0
  %498 = vmatpush1.bf16.msra.mxu0 0
  %499 = vmatprep.subr.bf16.mxu0 0
  %500 = vmatpush1.bf16.msra.mxu0 0
  %501 = vmatprep.subr.bf16.mxu0 0
  %502 = vmatpush1.bf16.msra.mxu0 0
  %503 = vmatprep.subr.bf16.mxu0 0
  %504 = vmatpush1.bf16.msra.mxu0 0
  %505 = vmatprep.subr.bf16.mxu0 0
  %506 = vmatpush1.bf16.msra.mxu0 0
  %507 = vmatprep.subr.bf16.mxu0 0
  %508 = vmatpush1.bf16.msra.mxu0 0
  %509 = vmatprep.subr.bf16.mxu0 0
  %510 = vmatpush1.bf16.msra.mxu0 0
  %511 = vmatprep.subr.bf16.mxu0 0
  %512 = vmatpush1.bf16.msra.mxu0 0
  %513 = vmatprep.mubr.bf16.mxu0 0
  %514 = vmatmul.mubr.bf16.gmra.mrb[0].mxu0 %v259
  %v515 = vpop.f32.mrb[0].mxu0
  %v516 = vadd.f32 %v244, %v515
  %v517 = vpop.f32.mrb[0].mxu0
  %v518 = vpop.f32.mrb[0].mxu0
  %v519 = vadd.f32 %v244, %v518
  %v520 = vpop.f32.mrb[0].mxu0
  %521 = vmatprep.mubr.bf16.mxu0 0
  %522 = vmatmul.mubr.bf16.gmra.mrb[0].mxu0 %v262
  %v523 = vpop.f32.mrb[0].mxu0
  %v524 = vadd.f32 %v244, %v523
  %v525 = vpop.f32.mrb[0].mxu0
  %v526 = vpop.f32.mrb[0].mxu0
  %v527 = vadd.f32 %v244, %v526
  %v528 = vpop.f32.mrb[0].mxu0
  %529 = vmatprep.mubr.bf16.mxu0 0
  %530 = vmatmul.mubr.bf16.gmra.mrb[0].mxu0 %v265
  %v531 = vpop.f32.mrb[0].mxu0
  %v532 = vadd.f32 %v244, %v531
  %v533 = vpop.f32.mrb[0].mxu0
  %v534 = vpop.f32.mrb[0].mxu0
  %v535 = vadd.f32 %v244, %v534
  %v536 = vpop.f32.mrb[0].mxu0
  %537 = vmatprep.mubr.bf16.mxu0 0
  %538 = vmatmul.mubr.bf16.gmra.mrb[0].mxu0 %v268
  %v539 = vpop.f32.mrb[0].mxu0
  %v540 = vadd.f32 %v244, %v539
  %v541 = vpop.f32.mrb[0].mxu0
  %v542 = vpop.f32.mrb[0].mxu0
  %v543 = vadd.f32 %v244, %v542
  %v544 = vpop.f32.mrb[0].mxu0
  %545 = vmatprep.mubr.bf16.mxu0 0
  %546 = vmatmul.mubr.bf16.gmra.mrb[0].mxu0 %v271
  %v547 = vpop.f32.mrb[0].mxu0
  %v548 = vadd.f32 %v244, %v547
  %v549 = vpop.f32.mrb[0].mxu0
  %v550 = vpop.f32.mrb[0].mxu0
  %v551 = vadd.f32 %v244, %v550
  %v552 = vpop.f32.mrb[0].mxu0
  %553 = vmatprep.mubr.bf16.mxu0 0
  %554 = vmatmul.mubr.bf16.gmra.mrb[0].mxu0 %v274
  %v555 = vpop.f32.mrb[0].mxu0
  %v556 = vadd.f32 %v244, %v555
  %v557 = vpop.f32.mrb[0].mxu0
  %v558 = vpop.f32.mrb[0].mxu0
  %v559 = vadd.f32 %v244, %v558
  %v560 = vpop.f32.mrb[0].mxu0
  %561 = vmatprep.mubr.bf16.mxu0 0
  %562 = vmatmul.mubr.bf16.gmra.mrb[0].mxu0 %v277
  %v563 = vpop.f32.mrb[0].mxu0
  %v564 = vadd.f32 %v244, %v563
  %v565 = vpop.f32.mrb[0].mxu0
  %v566 = vpop.f32.mrb[0].mxu0
  %v567 = vadd.f32 %v244, %v566
  %v568 = vpop.f32.mrb[0].mxu0
  %569 = vmatprep.mubr.bf16.mxu0 0
  %570 = vmatmul.mubr.bf16.gmra.mrb[0].mxu0 %v280
  %v571 = vpop.f32.mrb[0].mxu0
  %v572 = vadd.f32 %v244, %v571
  %v573 = vpop.f32.mrb[0].mxu0
  %v574 = vpop.f32.mrb[0].mxu0
  %v575 = vadd.f32 %v244, %v574
  %v576 = vpop.f32.mrb[0].mxu0
  %577 = vmatprep.mubr.bf16.mxu0 0
  %578 = vmatmul.mubr.bf16.gmra.mrb[0].mxu0 %v283
  %v579 = vpop.f32.mrb[0].mxu0
  %v580 = vadd.f32 %v244, %v579
  %v581 = vpop.f32.mrb[0].mxu0
  %v582 = vpop.f32.mrb[0].mxu0
  %v583 = vadd.f32 %v244, %v582
  %v584 = vpop.f32.mrb[0].mxu0
  %585 = vmatprep.mubr.bf16.mxu0 0
  %586 = vmatmul.mubr.bf16.gmra.mrb[0].mxu0 %v286
  %v587 = vpop.f32.mrb[0].mxu0
  %v588 = vadd.f32 %v244, %v587
  %v589 = vpop.f32.mrb[0].mxu0
  %v590 = vpop.f32.mrb[0].mxu0
  %v591 = vadd.f32 %v244, %v590
  %v592 = vpop.f32.mrb[0].mxu0
  %593 = vmatprep.mubr.bf16.mxu0 0
  %594 = vmatmul.mubr.bf16.gmra.mrb[0].mxu0 %v289
  %v595 = vpop.f32.mrb[0].mxu0
  %v596 = vadd.f32 %v244, %v595
  %v597 = vpop.f32.mrb[0].mxu0
  %v598 = vpop.f32.mrb[0].mxu0
  %v599 = vadd.f32 %v244, %v598
  %v600 = vpop.f32.mrb[0].mxu0
  %601 = vmatprep.mubr.bf16.mxu0 0
  %602 = vmatmul.mubr.bf16.gmra.mrb[0].mxu0 %v292
  %v603 = vpop.f32.mrb[0].mxu0
  %v604 = vadd.f32 %v244, %v603
  %v605 = vpop.f32.mrb[0].mxu0
  %v606 = vpop.f32.mrb[0].mxu0
  %v607 = vadd.f32 %v244, %v606
  %v608 = vpop.f32.mrb[0].mxu0
  %609 = vmatprep.mubr.bf16.mxu0 0
  %610 = vmatmul.mubr.bf16.gmra.mrb[0].mxu0 %v295
  %v611 = vpop.f32.mrb[0].mxu0
  %v612 = vadd.f32 %v244, %v611
  %v613 = vpop.f32.mrb[0].mxu0
  %v614 = vpop.f32.mrb[0].mxu0
  %v615 = vadd.f32 %v244, %v614
  %v616 = vpop.f32.mrb[0].mxu0
  %617 = vmatprep.mubr.bf16.mxu0 0
  %618 = vmatmul.mubr.bf16.gmra.mrb[0].mxu0 %v298
  %v619 = vpop.f32.mrb[0].mxu0
  %v620 = vadd.f32 %v244, %v619
  %v621 = vpop.f32.mrb[0].mxu0
  %v622 = vpop.f32.mrb[0].mxu0
  %v623 = vadd.f32 %v244, %v622
  %v624 = vpop.f32.mrb[0].mxu0
  %625 = vmatprep.mubr.bf16.mxu0 0
  %626 = vmatmul.mubr.bf16.gmra.mrb[0].mxu0 %v301
  %v627 = vpop.f32.mrb[0].mxu0
  %v628 = vadd.f32 %v244, %v627
  %v629 = vpop.f32.mrb[0].mxu0
  %v630 = vpop.f32.mrb[0].mxu0
  %v631 = vadd.f32 %v244, %v630
  %v632 = vpop.f32.mrb[0].mxu0
  %633 = vmatprep.mubr.bf16.mxu0 0
  %634 = vmatmul.mubr.bf16.gmra.mrb[0].mxu0 %v304
  %v635 = vpop.f32.mrb[0].mxu0
  %v636 = vadd.f32 %v244, %v635
  %v637 = vpop.f32.mrb[0].mxu0
  %v638 = vpop.f32.mrb[0].mxu0
  %v639 = vadd.f32 %v244, %v638
  %v640 = vpop.f32.mrb[0].mxu0
  %641 = vmatprep.mubr.bf16.mxu0 0
  %642 = vmatmul.mubr.bf16.gmra.mrb[0].mxu0 %v307
  %v643 = vpop.f32.mrb[0].mxu0
  %v644 = vadd.f32 %v244, %v643
  %v645 = vpop.f32.mrb[0].mxu0
  %v646 = vpop.f32.mrb[0].mxu0
  %v647 = vadd.f32 %v244, %v646
  %v648 = vpop.f32.mrb[0].mxu0
  %649 = vmatprep.mubr.bf16.mxu0 0
  %650 = vmatmul.mubr.bf16.gmra.mrb[0].mxu0 %v310
  %v651 = vpop.f32.mrb[0].mxu0
  %v652 = vadd.f32 %v244, %v651
  %v653 = vpop.f32.mrb[0].mxu0
  %v654 = vpop.f32.mrb[0].mxu0
  %v655 = vadd.f32 %v244, %v654
  %v656 = vpop.f32.mrb[0].mxu0
  %657 = vmatprep.mubr.bf16.mxu0 0
  %658 = vmatmul.mubr.bf16.gmra.mrb[0].mxu0 %v313
  %v659 = vpop.f32.mrb[0].mxu0
  %v660 = vadd.f32 %v244, %v659
  %v661 = vpop.f32.mrb[0].mxu0
  %v662 = vpop.f32.mrb[0].mxu0
  %v663 = vadd.f32 %v244, %v662
  %v664 = vpop.f32.mrb[0].mxu0
  %665 = vmatprep.mubr.bf16.mxu0 0
  %666 = vmatmul.mubr.bf16.gmra.mrb[0].mxu0 %v316
  %v667 = vpop.f32.mrb[0].mxu0
  %v668 = vadd.f32 %v244, %v667
  %v669 = vpop.f32.mrb[0].mxu0
  %v670 = vpop.f32.mrb[0].mxu0
  %v671 = vadd.f32 %v244, %v670
  %v672 = vpop.f32.mrb[0].mxu0
  %673 = vmatprep.mubr.bf16.mxu0 0
  %674 = vmatmul.mubr.bf16.gmra.mrb[0].mxu0 %v319
  %v675 = vpop.f32.mrb[0].mxu0
  %v676 = vadd.f32 %v244, %v675
  %v677 = vpop.f32.mrb[0].mxu0
  %v678 = vpop.f32.mrb[0].mxu0
  %v679 = vadd.f32 %v244, %v678
  %v680 = vpop.f32.mrb[0].mxu0
  %681 = vmatprep.mubr.bf16.mxu0 0
  %682 = vmatmul.mubr.bf16.gmra.mrb[0].mxu0 %v322
  %v683 = vpop.f32.mrb[0].mxu0
  %v684 = vadd.f32 %v244, %v683
  %v685 = vpop.f32.mrb[0].mxu0
  %v686 = vpop.f32.mrb[0].mxu0
  %v687 = vadd.f32 %v244, %v686
  %v688 = vpop.f32.mrb[0].mxu0
  %689 = vmatprep.mubr.bf16.mxu0 0
  %690 = vmatmul.mubr.bf16.gmra.mrb[0].mxu0 %v325
  %v691 = vpop.f32.mrb[0].mxu0
  %v692 = vadd.f32 %v244, %v691
  %v693 = vpop.f32.mrb[0].mxu0
  %v694 = vpop.f32.mrb[0].mxu0
  %v695 = vadd.f32 %v244, %v694
  %v696 = vpop.f32.mrb[0].mxu0
  %697 = vmatprep.mubr.bf16.mxu0 0
  %698 = vmatmul.mubr.bf16.gmra.mrb[0].mxu0 %v328
  %v699 = vpop.f32.mrb[0].mxu0
  %v700 = vadd.f32 %v244, %v699
  %v701 = vpop.f32.mrb[0].mxu0
  %v702 = vpop.f32.mrb[0].mxu0
  %v703 = vadd.f32 %v244, %v702
  %v704 = vpop.f32.mrb[0].mxu0
  %705 = vmatprep.mubr.bf16.mxu0 0
  %706 = vmatmul.mubr.bf16.gmra.mrb[0].mxu0 %v331
  %v707 = vpop.f32.mrb[0].mxu0
  %v708 = vadd.f32 %v244, %v707
  %v709 = vpop.f32.mrb[0].mxu0
  %v710 = vpop.f32.mrb[0].mxu0
  %v711 = vadd.f32 %v244, %v710
  %v712 = vpop.f32.mrb[0].mxu0
  %713 = vmatprep.mubr.bf16.mxu0 0
  %714 = vmatmul.mubr.bf16.gmra.mrb[0].mxu0 %v334
  %v715 = vpop.f32.mrb[0].mxu0
  %v716 = vadd.f32 %v244, %v715
  %v717 = vpop.f32.mrb[0].mxu0
  %v718 = vpop.f32.mrb[0].mxu0
  %v719 = vadd.f32 %v244, %v718
  %v720 = vpop.f32.mrb[0].mxu0
  %721 = vmatprep.mubr.bf16.mxu0 0
  %722 = vmatmul.mubr.bf16.gmra.mrb[0].mxu0 %v337
  %v723 = vpop.f32.mrb[0].mxu0
  %v724 = vadd.f32 %v244, %v723
  %v725 = vpop.f32.mrb[0].mxu0
  %v726 = vpop.f32.mrb[0].mxu0
  %v727 = vadd.f32 %v244, %v726
  %v728 = vpop.f32.mrb[0].mxu0
  %729 = vmatprep.mubr.bf16.mxu0 0
  %730 = vmatmul.mubr.bf16.gmra.mrb[0].mxu0 %v340
  %v731 = vpop.f32.mrb[0].mxu0
  %v732 = vadd.f32 %v244, %v731
  %v733 = vpop.f32.mrb[0].mxu0
  %v734 = vpop.f32.mrb[0].mxu0
  %v735 = vadd.f32 %v244, %v734
  %v736 = vpop.f32.mrb[0].mxu0
  %737 = vmatprep.mubr.bf16.mxu0 0
  %738 = vmatmul.mubr.bf16.gmra.mrb[0].mxu0 %v343
  %v739 = vpop.f32.mrb[0].mxu0
  %v740 = vadd.f32 %v244, %v739
  %v741 = vpop.f32.mrb[0].mxu0
  %v742 = vpop.f32.mrb[0].mxu0
  %v743 = vadd.f32 %v244, %v742
  %v744 = vpop.f32.mrb[0].mxu0
  %745 = vmatprep.mubr.bf16.mxu0 0
  %746 = vmatmul.mubr.bf16.gmra.mrb[0].mxu0 %v346
  %v747 = vpop.f32.mrb[0].mxu0
  %v748 = vadd.f32 %v244, %v747
  %v749 = vpop.f32.mrb[0].mxu0
  %v750 = vpop.f32.mrb[0].mxu0
  %v751 = vadd.f32 %v244, %v750
  %v752 = vpop.f32.mrb[0].mxu0
  %753 = vmatprep.mubr.bf16.mxu0 0
  %754 = vmatmul.mubr.bf16.gmra.mrb[0].mxu0 %v349
  %v755 = vpop.f32.mrb[0].mxu0
  %v756 = vadd.f32 %v244, %v755
  %v757 = vpop.f32.mrb[0].mxu0
  %v758 = vpop.f32.mrb[0].mxu0
  %v759 = vadd.f32 %v244, %v758
  %v760 = vpop.f32.mrb[0].mxu0
  %761 = vmatprep.mubr.bf16.mxu0 0
  %762 = vmatmul.mubr.bf16.gmra.mrb[0].mxu0 %v352
  %v763 = vpop.f32.mrb[0].mxu0
  %v764 = vadd.f32 %v244, %v763
  %v765 = vpop.f32.mrb[0].mxu0
  %v766 = vpop.f32.mrb[0].mxu0
  %v767 = vadd.f32 %v244, %v766
  %v768 = vpop.f32.mrb[0].mxu0
  %769 = vmatprep.mubr.bf16.mxu0 0
  %770 = vmatmul.mubr.bf16.gmra.mrb[0].mxu0 %v355
  %v771 = vpop.f32.mrb[0].mxu0
  %v772 = vadd.f32 %v244, %v771
  %v773 = vpop.f32.mrb[0].mxu0
  %v774 = vpop.f32.mrb[0].mxu0
  %v775 = vadd.f32 %v244, %v774
  %v776 = vpop.f32.mrb[0].mxu0
  %777 = vmatprep.mubr.bf16.mxu0 0
  %778 = vmatmul.mubr.bf16.gmra.mrb[0].mxu0 %v358
  %v779 = vpop.f32.mrb[0].mxu0
  %v780 = vadd.f32 %v244, %v779
  %v781 = vpop.f32.mrb[0].mxu0
  %v782 = vpop.f32.mrb[0].mxu0
  %v783 = vadd.f32 %v244, %v782
  %v784 = vpop.f32.mrb[0].mxu0
  %785 = vmatprep.mubr.bf16.mxu0 0
  %786 = vmatmul.mubr.bf16.gmra.mrb[0].mxu0 %v361
  %v787 = vpop.f32.mrb[0].mxu0
  %v788 = vadd.f32 %v244, %v787
  %v789 = vpop.f32.mrb[0].mxu0
  %v790 = vpop.f32.mrb[0].mxu0
  %v791 = vadd.f32 %v244, %v790
  %v792 = vpop.f32.mrb[0].mxu0
  %793 = vmatprep.mubr.bf16.mxu0 0
  %794 = vmatmul.mubr.bf16.gmra.mrb[0].mxu0 %v364
  %v795 = vpop.f32.mrb[0].mxu0
  %v796 = vadd.f32 %v244, %v795
  %v797 = vpop.f32.mrb[0].mxu0
  %v798 = vpop.f32.mrb[0].mxu0
  %v799 = vadd.f32 %v244, %v798
  %v800 = vpop.f32.mrb[0].mxu0
  %801 = vmatprep.mubr.bf16.mxu0 0
  %802 = vmatmul.mubr.bf16.gmra.mrb[0].mxu0 %v367
  %v803 = vpop.f32.mrb[0].mxu0
  %v804 = vadd.f32 %v244, %v803
  %v805 = vpop.f32.mrb[0].mxu0
  %v806 = vpop.f32.mrb[0].mxu0
  %v807 = vadd.f32 %v244, %v806
  %v808 = vpop.f32.mrb[0].mxu0
  %809 = vmatprep.mubr.bf16.mxu0 0
  %810 = vmatmul.mubr.bf16.gmra.mrb[0].mxu0 %v370
  %v811 = vpop.f32.mrb[0].mxu0
  %v812 = vadd.f32 %v244, %v811
  %v813 = vpop.f32.mrb[0].mxu0
  %v814 = vpop.f32.mrb[0].mxu0
  %v815 = vadd.f32 %v244, %v814
  %v816 = vpop.f32.mrb[0].mxu0
  %817 = vmatprep.mubr.bf16.mxu0 0
  %818 = vmatmul.mubr.bf16.gmra.mrb[0].mxu0 %v373
  %v819 = vpop.f32.mrb[0].mxu0
  %v820 = vadd.f32 %v244, %v819
  %v821 = vpop.f32.mrb[0].mxu0
  %v822 = vpop.f32.mrb[0].mxu0
  %v823 = vadd.f32 %v244, %v822
  %v824 = vpop.f32.mrb[0].mxu0
  %825 = vmatprep.mubr.bf16.mxu0 0
  %826 = vmatmul.mubr.bf16.gmra.mrb[0].mxu0 %v376
  %v827 = vpop.f32.mrb[0].mxu0
  %v828 = vadd.f32 %v244, %v827
  %v829 = vpop.f32.mrb[0].mxu0
  %v830 = vpop.f32.mrb[0].mxu0
  %v831 = vadd.f32 %v244, %v830
  %v832 = vpop.f32.mrb[0].mxu0
  %833 = vmatprep.mubr.bf16.mxu0 0
  %834 = vmatmul.mubr.bf16.gmra.mrb[0].mxu0 %v379
  %v835 = vpop.f32.mrb[0].mxu0
  %v836 = vadd.f32 %v244, %v835
  %v837 = vpop.f32.mrb[0].mxu0
  %v838 = vpop.f32.mrb[0].mxu0
  %v839 = vadd.f32 %v244, %v838
  %v840 = vpop.f32.mrb[0].mxu0
  %841 = vmatprep.mubr.bf16.mxu0 0
  %842 = vmatmul.mubr.bf16.gmra.mrb[0].mxu0 %v382
  %v843 = vpop.f32.mrb[0].mxu0
  %v844 = vadd.f32 %v244, %v843
  %v845 = vpop.f32.mrb[0].mxu0
  %v846 = vpop.f32.mrb[0].mxu0
  %v847 = vadd.f32 %v244, %v846
  %v848 = vpop.f32.mrb[0].mxu0
  %849 = vmatprep.mubr.bf16.mxu0 0
  %850 = vmatmul.mubr.bf16.gmra.mrb[0].mxu0 %v385
  %v851 = vpop.f32.mrb[0].mxu0
  %v852 = vadd.f32 %v244, %v851
  %v853 = vpop.f32.mrb[0].mxu0
  %v854 = vpop.f32.mrb[0].mxu0
  %v855 = vadd.f32 %v244, %v854
  %v856 = vpop.f32.mrb[0].mxu0
  %857 = vmatprep.mubr.bf16.mxu0 0
  %858 = vmatmul.mubr.bf16.gmra.mrb[0].mxu0 %v388
  %v859 = vpop.f32.mrb[0].mxu0
  %v860 = vadd.f32 %v244, %v859
  %v861 = vpop.f32.mrb[0].mxu0
  %v862 = vpop.f32.mrb[0].mxu0
  %v863 = vadd.f32 %v244, %v862
  %v864 = vpop.f32.mrb[0].mxu0
  %865 = vmatprep.mubr.bf16.mxu0 0
  %866 = vmatmul.mubr.bf16.gmra.mrb[0].mxu0 %v391
  %v867 = vpop.f32.mrb[0].mxu0
  %v868 = vadd.f32 %v244, %v867
  %v869 = vpop.f32.mrb[0].mxu0
  %v870 = vpop.f32.mrb[0].mxu0
  %v871 = vadd.f32 %v244, %v870
  %v872 = vpop.f32.mrb[0].mxu0
  %873 = vmatprep.mubr.bf16.mxu0 0
  %874 = vmatmul.mubr.bf16.gmra.mrb[0].mxu0 %v394
  %v875 = vpop.f32.mrb[0].mxu0
  %v876 = vadd.f32 %v244, %v875
  %v877 = vpop.f32.mrb[0].mxu0
  %v878 = vpop.f32.mrb[0].mxu0
  %v879 = vadd.f32 %v244, %v878
  %v880 = vpop.f32.mrb[0].mxu0
  %881 = vmatprep.mubr.bf16.mxu0 0
  %882 = vmatmul.mubr.bf16.gmra.mrb[0].mxu0 %v397
  %v883 = vpop.f32.mrb[0].mxu0
  %v884 = vadd.f32 %v244, %v883
  %v885 = vpop.f32.mrb[0].mxu0
  %v886 = vpop.f32.mrb[0].mxu0
  %v887 = vadd.f32 %v244, %v886
  %v888 = vpop.f32.mrb[0].mxu0
  %889 = vmatprep.mubr.bf16.mxu0 0
  %890 = vmatmul.mubr.bf16.gmra.mrb[0].mxu0 %v400
  %v891 = vpop.f32.mrb[0].mxu0
  %v892 = vadd.f32 %v244, %v891
  %v893 = vpop.f32.mrb[0].mxu0
  %v894 = vpop.f32.mrb[0].mxu0
  %v895 = vadd.f32 %v244, %v894
  %v896 = vpop.f32.mrb[0].mxu0
  %897 = vmatprep.mubr.bf16.mxu0 0
  %898 = vmatmul.mubr.bf16.gmra.mrb[0].mxu0 %v403
  %v899 = vpop.f32.mrb[0].mxu0
  %v900 = vadd.f32 %v244, %v899
  %v901 = vpop.f32.mrb[0].mxu0
  %v902 = vpop.f32.mrb[0].mxu0
  %v903 = vadd.f32 %v244, %v902
  %v904 = vpop.f32.mrb[0].mxu0
  %905 = vmatprep.mubr.bf16.mxu0 0
  %906 = vmatmul.mubr.bf16.gmra.mrb[0].mxu0 %v406
  %v907 = vpop.f32.mrb[0].mxu0
  %v908 = vadd.f32 %v244, %v907
  %v909 = vpop.f32.mrb[0].mxu0
  %v910 = vpop.f32.mrb[0].mxu0
  %v911 = vadd.f32 %v244, %v910
  %v912 = vpop.f32.mrb[0].mxu0
  %913 = vmatprep.mubr.bf16.mxu0 0
  %914 = vmatmul.mubr.bf16.gmra.mrb[0].mxu0 %v409
  %v915 = vpop.f32.mrb[0].mxu0
  %v916 = vadd.f32 %v244, %v915
  %v917 = vpop.f32.mrb[0].mxu0
  %v918 = vpop.f32.mrb[0].mxu0
  %v919 = vadd.f32 %v244, %v918
  %v920 = vpop.f32.mrb[0].mxu0
  %921 = vmatprep.mubr.bf16.mxu0 0
  %922 = vmatmul.mubr.bf16.gmra.mrb[0].mxu0 %v412
  %v923 = vpop.f32.mrb[0].mxu0
  %v924 = vadd.f32 %v244, %v923
  %v925 = vpop.f32.mrb[0].mxu0
  %v926 = vpop.f32.mrb[0].mxu0
  %v927 = vadd.f32 %v244, %v926
  %v928 = vpop.f32.mrb[0].mxu0
  %929 = vmatprep.mubr.bf16.mxu0 0
  %930 = vmatmul.mubr.bf16.gmra.mrb[0].mxu0 %v415
  %v931 = vpop.f32.mrb[0].mxu0
  %v932 = vadd.f32 %v244, %v931
  %v933 = vpop.f32.mrb[0].mxu0
  %v934 = vpop.f32.mrb[0].mxu0
  %v935 = vadd.f32 %v244, %v934
  %v936 = vpop.f32.mrb[0].mxu0
  %937 = vmatprep.mubr.bf16.mxu0 0
  %938 = vmatmul.mubr.bf16.gmra.mrb[0].mxu0 %v418
  %v939 = vpop.f32.mrb[0].mxu0
  %v940 = vadd.f32 %v244, %v939
  %v941 = vpop.f32.mrb[0].mxu0
  %v942 = vpop.f32.mrb[0].mxu0
  %v943 = vadd.f32 %v244, %v942
  %v944 = vpop.f32.mrb[0].mxu0
  %945 = vmatprep.mubr.bf16.mxu0 0
  %946 = vmatmul.mubr.bf16.gmra.mrb[0].mxu0 %v421
  %v947 = vpop.f32.mrb[0].mxu0
  %v948 = vadd.f32 %v244, %v947
  %v949 = vpop.f32.mrb[0].mxu0
  %v950 = vpop.f32.mrb[0].mxu0
  %v951 = vadd.f32 %v244, %v950
  %v952 = vpop.f32.mrb[0].mxu0
  %953 = vmatprep.mubr.bf16.mxu0 0
  %954 = vmatmul.mubr.bf16.gmra.mrb[0].mxu0 %v424
  %v955 = vpop.f32.mrb[0].mxu0
  %v956 = vadd.f32 %v244, %v955
  %v957 = vpop.f32.mrb[0].mxu0
  %v958 = vpop.f32.mrb[0].mxu0
  %v959 = vadd.f32 %v244, %v958
  %v960 = vpop.f32.mrb[0].mxu0
  %961 = vmatprep.mubr.bf16.mxu0 0
  %962 = vmatmul.mubr.bf16.gmra.mrb[0].mxu0 %v427
  %v963 = vpop.f32.mrb[0].mxu0
  %v964 = vadd.f32 %v244, %v963
  %v965 = vpop.f32.mrb[0].mxu0
  %v966 = vpop.f32.mrb[0].mxu0
  %v967 = vadd.f32 %v244, %v966
  %v968 = vpop.f32.mrb[0].mxu0
  %969 = vmatprep.mubr.bf16.mxu0 0
  %970 = vmatmul.mubr.bf16.gmra.mrb[0].mxu0 %v430
  %v971 = vpop.f32.mrb[0].mxu0
  %v972 = vadd.f32 %v244, %v971
  %v973 = vpop.f32.mrb[0].mxu0
  %v974 = vpop.f32.mrb[0].mxu0
  %v975 = vadd.f32 %v244, %v974
  %v976 = vpop.f32.mrb[0].mxu0
  %977 = vmatprep.mubr.bf16.mxu0 0
  %978 = vmatmul.mubr.bf16.gmra.mrb[0].mxu0 %v433
  %v979 = vpop.f32.mrb[0].mxu0
  %v980 = vadd.f32 %v244, %v979
  %v981 = vpop.f32.mrb[0].mxu0
  %v982 = vpop.f32.mrb[0].mxu0
  %v983 = vadd.f32 %v244, %v982
  %v984 = vpop.f32.mrb[0].mxu0
  %985 = vmatprep.mubr.bf16.mxu0 0
  %986 = vmatmul.mubr.bf16.gmra.mrb[0].mxu0 %v436
  %v987 = vpop.f32.mrb[0].mxu0
  %v988 = vadd.f32 %v244, %v987
  %v989 = vpop.f32.mrb[0].mxu0
  %v990 = vpop.f32.mrb[0].mxu0
  %v991 = vadd.f32 %v244, %v990
  %v992 = vpop.f32.mrb[0].mxu0
  %993 = vmatprep.mubr.bf16.mxu0 0
  %994 = vmatmul.mubr.bf16.gmra.mrb[0].mxu0 %v439
  %v995 = vpop.f32.mrb[0].mxu0
  %v996 = vadd.f32 %v244, %v995
  %v997 = vpop.f32.mrb[0].mxu0
  %v998 = vpop.f32.mrb[0].mxu0
  %v999 = vadd.f32 %v244, %v998
  %v1000 = vpop.f32.mrb[0].mxu0
  %1001 = vmatprep.mubr.bf16.mxu0 0
  %1002 = vmatmul.mubr.bf16.gmra.mrb[0].mxu0 %v442
  %v1003 = vpop.f32.mrb[0].mxu0
  %v1004 = vadd.f32 %v244, %v1003
  %v1005 = vpop.f32.mrb[0].mxu0
  %v1006 = vpop.f32.mrb[0].mxu0
  %v1007 = vadd.f32 %v244, %v1006
  %v1008 = vpop.f32.mrb[0].mxu0
  %1009 = vmatprep.mubr.bf16.mxu0 0
  %1010 = vmatmul.mubr.bf16.gmra.mrb[0].mxu0 %v445
  %v1011 = vpop.f32.mrb[0].mxu0
  %v1012 = vadd.f32 %v244, %v1011
  %v1013 = vpop.f32.mrb[0].mxu0
  %v1014 = vpop.f32.mrb[0].mxu0
  %v1015 = vadd.f32 %v244, %v1014
  %v1016 = vpop.f32.mrb[0].mxu0
  %1017 = vmatprep.mubr.bf16.mxu0 0
  %1018 = vmatmul.mubr.bf16.gmra.mrb[0].mxu0 %v448
  %v1019 = vpop.f32.mrb[0].mxu0
  %v1020 = vadd.f32 %v244, %v1019
  %v1021 = vpop.f32.mrb[0].mxu0
  %v1022 = vpop.f32.mrb[0].mxu0
  %v1023 = vadd.f32 %v244, %v1022
  %v1024 = vpop.f32.mrb[0].mxu0
  %1025 = vmatprep.mubr.bf16.mxu0 0
  %1026 = vmatmul.mubr.bf16.gmra.mrb[0].mxu0 %v451
  %v1027 = vpop.f32.mrb[0].mxu0
  %v1028 = vadd.f32 %v244, %v1027
  %v1029 = vpop.f32.mrb[0].mxu0
  %v1030 = vpop.f32.mrb[0].mxu0
  %v1031 = vadd.f32 %v244, %v1030
  %v1032 = vpop.f32.mrb[0].mxu0
  %1033 = vmatprep.mubr.bf16.mxu0 0
  %1034 = vmatmul.mubr.bf16.gmra.mrb[0].mxu0 %v454
  %v1035 = vpop.f32.mrb[0].mxu0
  %v1036 = vadd.f32 %v244, %v1035
  %v1037 = vpop.f32.mrb[0].mxu0
  %v1038 = vpop.f32.mrb[0].mxu0
  %v1039 = vadd.f32 %v244, %v1038
  %v1040 = vpop.f32.mrb[0].mxu0
  %1041 = vmatprep.mubr.bf16.mxu0 0
  %1042 = vmatmul.mubr.bf16.gmra.mrb[0].mxu0 %v457
  %v1043 = vpop.f32.mrb[0].mxu0
  %v1044 = vadd.f32 %v244, %v1043
  %v1045 = vpop.f32.mrb[0].mxu0
  %v1046 = vpop.f32.mrb[0].mxu0
  %v1047 = vadd.f32 %v244, %v1046
  %v1048 = vpop.f32.mrb[0].mxu0
  %1049 = vmatprep.mubr.bf16.mxu0 0
  %1050 = vmatmul.mubr.bf16.gmra.mrb[0].mxu0 %v460
  %v1051 = vpop.f32.mrb[0].mxu0
  %v1052 = vadd.f32 %v244, %v1051
  %v1053 = vpop.f32.mrb[0].mxu0
  %v1054 = vpop.f32.mrb[0].mxu0
  %v1055 = vadd.f32 %v244, %v1054
  %v1056 = vpop.f32.mrb[0].mxu0
  %1057 = vmatprep.mubr.bf16.mxu0 0
  %1058 = vmatmul.mubr.bf16.gmra.mrb[0].mxu0 %v463
  %v1059 = vpop.f32.mrb[0].mxu0
  %v1060 = vadd.f32 %v244, %v1059
  %v1061 = vpop.f32.mrb[0].mxu0
  %v1062 = vpop.f32.mrb[0].mxu0
  %v1063 = vadd.f32 %v244, %v1062
  %v1064 = vpop.f32.mrb[0].mxu0
  %1065 = vmatprep.mubr.bf16.mxu0 0
  %1066 = vmatmul.mubr.bf16.gmra.mrb[0].mxu0 %v466
  %v1067 = vpop.f32.mrb[0].mxu0
  %v1068 = vadd.f32 %v244, %v1067
  %v1069 = vpop.f32.mrb[0].mxu0
  %v1070 = vpop.f32.mrb[0].mxu0
  %v1071 = vadd.f32 %v244, %v1070
  %v1072 = vpop.f32.mrb[0].mxu0
  %1073 = vmatprep.mubr.bf16.mxu0 0
  %1074 = vmatmul.mubr.bf16.gmra.mrb[0].mxu0 %v469
  %v1075 = vpop.f32.mrb[0].mxu0
  %v1076 = vadd.f32 %v244, %v1075
  %v1077 = vpop.f32.mrb[0].mxu0
  %v1078 = vpop.f32.mrb[0].mxu0
  %v1079 = vadd.f32 %v244, %v1078
  %v1080 = vpop.f32.mrb[0].mxu0
  %1081 = vmatprep.mubr.bf16.mxu0 0
  %1082 = vmatmul.mubr.bf16.gmra.mrb[0].mxu0 %v472
  %v1083 = vpop.f32.mrb[0].mxu0
  %v1084 = vadd.f32 %v244, %v1083
  %v1085 = vpop.f32.mrb[0].mxu0
  %v1086 = vpop.f32.mrb[0].mxu0
  %v1087 = vadd.f32 %v244, %v1086
  %v1088 = vpop.f32.mrb[0].mxu0
  %1089 = vdwg.mxu0
  %s1090 = sld [smem:[#allocation2]]
  %vm1091 = vcmp.ge.f32.partialorder %v516, 0.0
  %vm1092 = vcmp.ge.f32.partialorder %v519, 0.0
  %vm1093 = vcmp.ge.f32.partialorder %v524, 0.0
  %vm1094 = vcmp.ge.f32.partialorder %v527, 0.0
  %vm1095 = vcmp.ge.f32.partialorder %v532, 0.0
  %vm1096 = vcmp.ge.f32.partialorder %v535, 0.0
  %vm1097 = vcmp.ge.f32.partialorder %v540, 0.0
  %vm1098 = vcmp.ge.f32.partialorder %v543, 0.0
  %vm1099 = vcmp.ge.f32.partialorder %v548, 0.0
  %vm1100 = vcmp.ge.f32.partialorder %v551, 0.0
  %vm1101 = vcmp.ge.f32.partialorder %v556, 0.0
  %vm1102 = vcmp.ge.f32.partialorder %v559, 0.0
  %vm1103 = vcmp.ge.f32.partialorder %v564, 0.0
  %vm1104 = vcmp.ge.f32.partialorder %v567, 0.0
  %vm1105 = vcmp.ge.f32.partialorder %v572, 0.0
  %vm1106 = vcmp.ge.f32.partialorder %v575, 0.0
  %vm1107 = vcmp.ge.f32.partialorder %v580, 0.0
  %vm1108 = vcmp.ge.f32.partialorder %v583, 0.0
  %vm1109 = vcmp.ge.f32.partialorder %v588, 0.0
  %vm1110 = vcmp.ge.f32.partialorder %v591, 0.0
  %vm1111 = vcmp.ge.f32.partialorder %v596, 0.0
  %vm1112 = vcmp.ge.f32.partialorder %v599, 0.0
  %vm1113 = vcmp.ge.f32.partialorder %v604, 0.0
  %vm1114 = vcmp.ge.f32.partialorder %v607, 0.0
  %vm1115 = vcmp.ge.f32.partialorder %v612, 0.0
  %vm1116 = vcmp.ge.f32.partialorder %v615, 0.0
  %vm1117 = vcmp.ge.f32.partialorder %v620, 0.0
  %vm1118 = vcmp.ge.f32.partialorder %v623, 0.0
  %vm1119 = vcmp.ge.f32.partialorder %v628, 0.0
  %vm1120 = vcmp.ge.f32.partialorder %v631, 0.0
  %vm1121 = vcmp.ge.f32.partialorder %v636, 0.0
  %vm1122 = vcmp.ge.f32.partialorder %v639, 0.0
  %vm1123 = vcmp.ge.f32.partialorder %v644, 0.0
  %vm1124 = vcmp.ge.f32.partialorder %v647, 0.0
  %vm1125 = vcmp.ge.f32.partialorder %v652, 0.0
  %vm1126 = vcmp.ge.f32.partialorder %v655, 0.0
  %vm1127 = vcmp.ge.f32.partialorder %v660, 0.0
  %vm1128 = vcmp.ge.f32.partialorder %v663, 0.0
  %vm1129 = vcmp.ge.f32.partialorder %v668, 0.0
  %vm1130 = vcmp.ge.f32.partialorder %v671, 0.0
  %vm1131 = vcmp.ge.f32.partialorder %v676, 0.0
  %vm1132 = vcmp.ge.f32.partialorder %v679, 0.0
  %vm1133 = vcmp.ge.f32.partialorder %v684, 0.0
  %vm1134 = vcmp.ge.f32.partialorder %v687, 0.0
  %vm1135 = vcmp.ge.f32.partialorder %v692, 0.0
  %vm1136 = vcmp.ge.f32.partialorder %v695, 0.0
  %vm1137 = vcmp.ge.f32.partialorder %v700, 0.0
  %vm1138 = vcmp.ge.f32.partialorder %v703, 0.0
  %vm1139 = vcmp.ge.f32.partialorder %v708, 0.0
  %vm1140 = vcmp.ge.f32.partialorder %v711, 0.0
  %vm1141 = vcmp.ge.f32.partialorder %v716, 0.0
  %vm1142 = vcmp.ge.f32.partialorder %v719, 0.0
  %vm1143 = vcmp.ge.f32.partialorder %v724, 0.0
  %vm1144 = vcmp.ge.f32.partialorder %v727, 0.0
  %vm1145 = vcmp.ge.f32.partialorder %v732, 0.0
  %vm1146 = vcmp.ge.f32.partialorder %v735, 0.0
  %vm1147 = vcmp.ge.f32.partialorder %v740, 0.0
  %vm1148 = vcmp.ge.f32.partialorder %v743, 0.0
  %vm1149 = vcmp.ge.f32.partialorder %v748, 0.0
  %vm1150 = vcmp.ge.f32.partialorder %v751, 0.0
  %vm1151 = vcmp.ge.f32.partialorder %v756, 0.0
  %vm1152 = vcmp.ge.f32.partialorder %v759, 0.0
  %vm1153 = vcmp.ge.f32.partialorder %v764, 0.0
  %vm1154 = vcmp.ge.f32.partialorder %v767, 0.0
  %vm1155 = vcmp.ge.f32.partialorder %v772, 0.0
  %vm1156 = vcmp.ge.f32.partialorder %v775, 0.0
  %vm1157 = vcmp.ge.f32.partialorder %v780, 0.0
  %vm1158 = vcmp.ge.f32.partialorder %v783, 0.0
  %vm1159 = vcmp.ge.f32.partialorder %v788, 0.0
  %vm1160 = vcmp.ge.f32.partialorder %v791, 0.0
  %vm1161 = vcmp.ge.f32.partialorder %v796, 0.0
  %vm1162 = vcmp.ge.f32.partialorder %v799, 0.0
  %vm1163 = vcmp.ge.f32.partialorder %v804, 0.0
  %vm1164 = vcmp.ge.f32.partialorder %v807, 0.0
  %vm1165 = vcmp.ge.f32.partialorder %v812, 0.0
  %vm1166 = vcmp.ge.f32.partialorder %v815, 0.0
  %vm1167 = vcmp.ge.f32.partialorder %v820, 0.0
  %vm1168 = vcmp.ge.f32.partialorder %v823, 0.0
  %vm1169 = vcmp.ge.f32.partialorder %v828, 0.0
  %vm1170 = vcmp.ge.f32.partialorder %v831, 0.0
  %vm1171 = vcmp.ge.f32.partialorder %v836, 0.0
  %vm1172 = vcmp.ge.f32.partialorder %v839, 0.0
  %vm1173 = vcmp.ge.f32.partialorder %v844, 0.0
  %vm1174 = vcmp.ge.f32.partialorder %v847, 0.0
  %vm1175 = vcmp.ge.f32.partialorder %v852, 0.0
  %vm1176 = vcmp.ge.f32.partialorder %v855, 0.0
  %vm1177 = vcmp.ge.f32.partialorder %v860, 0.0
  %vm1178 = vcmp.ge.f32.partialorder %v863, 0.0
  %vm1179 = vcmp.ge.f32.partialorder %v868, 0.0
  %vm1180 = vcmp.ge.f32.partialorder %v871, 0.0
  %vm1181 = vcmp.ge.f32.partialorder %v876, 0.0
  %vm1182 = vcmp.ge.f32.partialorder %v879, 0.0
  %vm1183 = vcmp.ge.f32.partialorder %v884, 0.0
  %vm1184 = vcmp.ge.f32.partialorder %v887, 0.0
  %vm1185 = vcmp.ge.f32.partialorder %v892, 0.0
  %vm1186 = vcmp.ge.f32.partialorder %v895, 0.0
  %vm1187 = vcmp.ge.f32.partialorder %v900, 0.0
  %vm1188 = vcmp.ge.f32.partialorder %v903, 0.0
  %vm1189 = vcmp.ge.f32.partialorder %v908, 0.0
  %vm1190 = vcmp.ge.f32.partialorder %v911, 0.0
  %vm1191 = vcmp.ge.f32.partialorder %v916, 0.0
  %vm1192 = vcmp.ge.f32.partialorder %v919, 0.0
  %vm1193 = vcmp.ge.f32.partialorder %v924, 0.0
  %vm1194 = vcmp.ge.f32.partialorder %v927, 0.0
  %vm1195 = vcmp.ge.f32.partialorder %v932, 0.0
  %vm1196 = vcmp.ge.f32.partialorder %v935, 0.0
  %vm1197 = vcmp.ge.f32.partialorder %v940, 0.0
  %vm1198 = vcmp.ge.f32.partialorder %v943, 0.0
  %vm1199 = vcmp.ge.f32.partialorder %v948, 0.0
  %vm1200 = vcmp.ge.f32.partialorder %v951, 0.0
  %vm1201 = vcmp.ge.f32.partialorder %v956, 0.0
  %vm1202 = vcmp.ge.f32.partialorder %v959, 0.0
  %vm1203 = vcmp.ge.f32.partialorder %v964, 0.0
  %vm1204 = vcmp.ge.f32.partialorder %v967, 0.0
  %vm1205 = vcmp.ge.f32.partialorder %v972, 0.0
  %vm1206 = vcmp.ge.f32.partialorder %v975, 0.0
  %vm1207 = vcmp.ge.f32.partialorder %v980, 0.0
  %vm1208 = vcmp.ge.f32.partialorder %v983, 0.0
  %vm1209 = vcmp.ge.f32.partialorder %v988, 0.0
  %vm1210 = vcmp.ge.f32.partialorder %v991, 0.0
  %vm1211 = vcmp.ge.f32.partialorder %v996, 0.0
  %vm1212 = vcmp.ge.f32.partialorder %v999, 0.0
  %vm1213 = vcmp.ge.f32.partialorder %v1004, 0.0
  %vm1214 = vcmp.ge.f32.partialorder %v1007, 0.0
  %vm1215 = vcmp.ge.f32.partialorder %v1012, 0.0
  %vm1216 = vcmp.ge.f32.partialorder %v1015, 0.0
  %vm1217 = vcmp.ge.f32.partialorder %v1020, 0.0
  %vm1218 = vcmp.ge.f32.partialorder %v1023, 0.0
  %vm1219 = vcmp.ge.f32.partialorder %v1028, 0.0
  %vm1220 = vcmp.ge.f32.partialorder %v1031, 0.0
  %vm1221 = vcmp.ge.f32.partialorder %v1036, 0.0
  %vm1222 = vcmp.ge.f32.partialorder %v1039, 0.0
  %vm1223 = vcmp.ge.f32.partialorder %v1044, 0.0
  %vm1224 = vcmp.ge.f32.partialorder %v1047, 0.0
  %vm1225 = vcmp.ge.f32.partialorder %v1052, 0.0
  %vm1226 = vcmp.ge.f32.partialorder %v1055, 0.0
  %vm1227 = vcmp.ge.f32.partialorder %v1060, 0.0
  %vm1228 = vcmp.ge.f32.partialorder %v1063, 0.0
  %vm1229 = vcmp.ge.f32.partialorder %v1068, 0.0
  %vm1230 = vcmp.ge.f32.partialorder %v1071, 0.0
  %vm1231 = vcmp.ge.f32.partialorder %v1076, 0.0
  %vm1232 = vcmp.ge.f32.partialorder %v1079, 0.0
  %vm1233 = vcmp.ge.f32.partialorder %v1084, 0.0
  %vm1234 = vcmp.ge.f32.partialorder %v1087, 0.0
  %v1235 = vstv %s1090
  %v1236 = vmul.f32 %v1235, %v516
  %v1237 = vmul.f32 %v1235, %v519
  %v1238 = vmul.f32 %v1235, %v524
  %v1239 = vmul.f32 %v1235, %v527
  %v1240 = vmul.f32 %v1235, %v532
  %v1241 = vmul.f32 %v1235, %v535
  %v1242 = vmul.f32 %v1235, %v540
  %v1243 = vmul.f32 %v1235, %v543
  %v1244 = vmul.f32 %v1235, %v548
  %v1245 = vmul.f32 %v1235, %v551
  %v1246 = vmul.f32 %v1235, %v556
  %v1247 = vmul.f32 %v1235, %v559
  %v1248 = vmul.f32 %v1235, %v564
  %v1249 = vmul.f32 %v1235, %v567
  %v1250 = vmul.f32 %v1235, %v572
  %v1251 = vmul.f32 %v1235, %v575
  %v1252 = vmul.f32 %v1235, %v580
  %v1253 = vmul.f32 %v1235, %v583
  %v1254 = vmul.f32 %v1235, %v588
  %v1255 = vmul.f32 %v1235, %v591
  %v1256 = vmul.f32 %v1235, %v596
  %v1257 = vmul.f32 %v1235, %v599
  %v1258 = vmul.f32 %v1235, %v604
  %v1259 = vmul.f32 %v1235, %v607
  %v1260 = vmul.f32 %v1235, %v612
  %v1261 = vmul.f32 %v1235, %v615
  %v1262 = vmul.f32 %v1235, %v620
  %v1263 = vmul.f32 %v1235, %v623
  %v1264 = vmul.f32 %v1235, %v628
  %v1265 = vmul.f32 %v1235, %v631
  %v1266 = vmul.f32 %v1235, %v636
  %v1267 = vmul.f32 %v1235, %v639
  %v1268 = vmul.f32 %v1235, %v644
  %v1269 = vmul.f32 %v1235, %v647
  %v1270 = vmul.f32 %v1235, %v652
  %v1271 = vmul.f32 %v1235, %v655
  %v1272 = vmul.f32 %v1235, %v660
  %v1273 = vmul.f32 %v1235, %v663
  %v1274 = vmul.f32 %v1235, %v668
  %v1275 = vmul.f32 %v1235, %v671
  %v1276 = vmul.f32 %v1235, %v676
  %v1277 = vmul.f32 %v1235, %v679
  %v1278 = vmul.f32 %v1235, %v684
  %v1279 = vmul.f32 %v1235, %v687
  %v1280 = vmul.f32 %v1235, %v692
  %v1281 = vmul.f32 %v1235, %v695
  %v1282 = vmul.f32 %v1235, %v700
  %v1283 = vmul.f32 %v1235, %v703
  %v1284 = vmul.f32 %v1235, %v708
  %v1285 = vmul.f32 %v1235, %v711
  %v1286 = vmul.f32 %v1235, %v716
  %v1287 = vmul.f32 %v1235, %v719
  %v1288 = vmul.f32 %v1235, %v724
  %v1289 = vmul.f32 %v1235, %v727
  %v1290 = vmul.f32 %v1235, %v732
  %v1291 = vmul.f32 %v1235, %v735
  %v1292 = vmul.f32 %v1235, %v740
  %v1293 = vmul.f32 %v1235, %v743
  %v1294 = vmul.f32 %v1235, %v748
  %v1295 = vmul.f32 %v1235, %v751
  %v1296 = vmul.f32 %v1235, %v756
  %v1297 = vmul.f32 %v1235, %v759
  %v1298 = vmul.f32 %v1235, %v764
  %v1299 = vmul.f32 %v1235, %v767
  %v1300 = vmul.f32 %v1235, %v772
  %v1301 = vmul.f32 %v1235, %v775
  %v1302 = vmul.f32 %v1235, %v780
  %v1303 = vmul.f32 %v1235, %v783
  %v1304 = vmul.f32 %v1235, %v788
  %v1305 = vmul.f32 %v1235, %v791
  %v1306 = vmul.f32 %v1235, %v796
  %v1307 = vmul.f32 %v1235, %v799
  %v1308 = vmul.f32 %v1235, %v804
  %v1309 = vmul.f32 %v1235, %v807
  %v1310 = vmul.f32 %v1235, %v812
  %v1311 = vmul.f32 %v1235, %v815
  %v1312 = vmul.f32 %v1235, %v820
  %v1313 = vmul.f32 %v1235, %v823
  %v1314 = vmul.f32 %v1235, %v828
  %v1315 = vmul.f32 %v1235, %v831
  %v1316 = vmul.f32 %v1235, %v836
  %v1317 = vmul.f32 %v1235, %v839
  %v1318 = vmul.f32 %v1235, %v844
  %v1319 = vmul.f32 %v1235, %v847
  %v1320 = vmul.f32 %v1235, %v852
  %v1321 = vmul.f32 %v1235, %v855
  %v1322 = vmul.f32 %v1235, %v860
  %v1323 = vmul.f32 %v1235, %v863
  %v1324 = vmul.f32 %v1235, %v868
  %v1325 = vmul.f32 %v1235, %v871
  %v1326 = vmul.f32 %v1235, %v876
  %v1327 = vmul.f32 %v1235, %v879
  %v1328 = vmul.f32 %v1235, %v884
  %v1329 = vmul.f32 %v1235, %v887
  %v1330 = vmul.f32 %v1235, %v892
  %v1331 = vmul.f32 %v1235, %v895
  %v1332 = vmul.f32 %v1235, %v900
  %v1333 = vmul.f32 %v1235, %v903
  %v1334 = vmul.f32 %v1235, %v908
  %v1335 = vmul.f32 %v1235, %v911
  %v1336 = vmul.f32 %v1235, %v916
  %v1337 = vmul.f32 %v1235, %v919
  %v1338 = vmul.f32 %v1235, %v924
  %v1339 = vmul.f32 %v1235, %v927
  %v1340 = vmul.f32 %v1235, %v932
  %v1341 = vmul.f32 %v1235, %v935
  %v1342 = vmul.f32 %v1235, %v940
  %v1343 = vmul.f32 %v1235, %v943
  %v1344 = vmul.f32 %v1235, %v948
  %v1345 = vmul.f32 %v1235, %v951
  %v1346 = vmul.f32 %v1235, %v956
  %v1347 = vmul.f32 %v1235, %v959
  %v1348 = vmul.f32 %v1235, %v964
  %v1349 = vmul.f32 %v1235, %v967
  %v1350 = vmul.f32 %v1235, %v972
  %v1351 = vmul.f32 %v1235, %v975
  %v1352 = vmul.f32 %v1235, %v980
  %v1353 = vmul.f32 %v1235, %v983
  %v1354 = vmul.f32 %v1235, %v988
  %v1355 = vmul.f32 %v1235, %v991
  %v1356 = vmul.f32 %v1235, %v996
  %v1357 = vmul.f32 %v1235, %v999
  %v1358 = vmul.f32 %v1235, %v1004
  %v1359 = vmul.f32 %v1235, %v1007
  %v1360 = vmul.f32 %v1235, %v1012
  %v1361 = vmul.f32 %v1235, %v1015
  %v1362 = vmul.f32 %v1235, %v1020
  %v1363 = vmul.f32 %v1235, %v1023
  %v1364 = vmul.f32 %v1235, %v1028
  %v1365 = vmul.f32 %v1235, %v1031
  %v1366 = vmul.f32 %v1235, %v1036
  %v1367 = vmul.f32 %v1235, %v1039
  %v1368 = vmul.f32 %v1235, %v1044
  %v1369 = vmul.f32 %v1235, %v1047
  %v1370 = vmul.f32 %v1235, %v1052
  %v1371 = vmul.f32 %v1235, %v1055
  %v1372 = vmul.f32 %v1235, %v1060
  %v1373 = vmul.f32 %v1235, %v1063
  %v1374 = vmul.f32 %v1235, %v1068
  %v1375 = vmul.f32 %v1235, %v1071
  %v1376 = vmul.f32 %v1235, %v1076
  %v1377 = vmul.f32 %v1235, %v1079
  %v1378 = vmul.f32 %v1235, %v1084
  %v1379 = vmul.f32 %v1235, %v1087
  %v1380 = vsel %vm1091, %v516, %v1236
  %v1381 = vsel %vm1092, %v519, %v1237
  %v1382 = vsel %vm1093, %v524, %v1238
  %v1383 = vsel %vm1094, %v527, %v1239
  %v1384 = vsel %vm1095, %v532, %v1240
  %v1385 = vsel %vm1096, %v535, %v1241
  %v1386 = vsel %vm1097, %v540, %v1242
  %v1387 = vsel %vm1098, %v543, %v1243
  %v1388 = vsel %vm1099, %v548, %v1244
  %v1389 = vsel %vm1100, %v551, %v1245
  %v1390 = vsel %vm1101, %v556, %v1246
  %v1391 = vsel %vm1102, %v559, %v1247
  %v1392 = vsel %vm1103, %v564, %v1248
  %v1393 = vsel %vm1104, %v567, %v1249
  %v1394 = vsel %vm1105, %v572, %v1250
  %v1395 = vsel %vm1106, %v575, %v1251
  %v1396 = vsel %vm1107, %v580, %v1252
  %v1397 = vsel %vm1108, %v583, %v1253
  %v1398 = vsel %vm1109, %v588, %v1254
  %v1399 = vsel %vm1110, %v591, %v1255
  %v1400 = vsel %vm1111, %v596, %v1256
  %v1401 = vsel %vm1112, %v599, %v1257
  %v1402 = vsel %vm1113, %v604, %v1258
  %v1403 = vsel %vm1114, %v607, %v1259
  %v1404 = vsel %vm1115, %v612, %v1260
  %v1405 = vsel %vm1116, %v615, %v1261
  %v1406 = vsel %vm1117, %v620, %v1262
  %v1407 = vsel %vm1118, %v623, %v1263
  %v1408 = vsel %vm1119, %v628, %v1264
  %v1409 = vsel %vm1120, %v631, %v1265
  %v1410 = vsel %vm1121, %v636, %v1266
  %v1411 = vsel %vm1122, %v639, %v1267
  %v1412 = vsel %vm1123, %v644, %v1268
  %v1413 = vsel %vm1124, %v647, %v1269
  %v1414 = vsel %vm1125, %v652, %v1270
  %v1415 = vsel %vm1126, %v655, %v1271
  %v1416 = vsel %vm1127, %v660, %v1272
  %v1417 = vsel %vm1128, %v663, %v1273
  %v1418 = vsel %vm1129, %v668, %v1274
  %v1419 = vsel %vm1130, %v671, %v1275
  %v1420 = vsel %vm1131, %v676, %v1276
  %v1421 = vsel %vm1132, %v679, %v1277
  %v1422 = vsel %vm1133, %v684, %v1278
  %v1423 = vsel %vm1134, %v687, %v1279
  %v1424 = vsel %vm1135, %v692, %v1280
  %v1425 = vsel %vm1136, %v695, %v1281
  %v1426 = vsel %vm1137, %v700, %v1282
  %v1427 = vsel %vm1138, %v703, %v1283
  %v1428 = vsel %vm1139, %v708, %v1284
  %v1429 = vsel %vm1140, %v711, %v1285
  %v1430 = vsel %vm1141, %v716, %v1286
  %v1431 = vsel %vm1142, %v719, %v1287
  %v1432 = vsel %vm1143, %v724, %v1288
  %v1433 = vsel %vm1144, %v727, %v1289
  %v1434 = vsel %vm1145, %v732, %v1290
  %v1435 = vsel %vm1146, %v735, %v1291
  %v1436 = vsel %vm1147, %v740, %v1292
  %v1437 = vsel %vm1148, %v743, %v1293
  %v1438 = vsel %vm1149, %v748, %v1294
  %v1439 = vsel %vm1150, %v751, %v1295
  %v1440 = vsel %vm1151, %v756, %v1296
  %v1441 = vsel %vm1152, %v759, %v1297
  %v1442 = vsel %vm1153, %v764, %v1298
  %v1443 = vsel %vm1154, %v767, %v1299
  %v1444 = vsel %vm1155, %v772, %v1300
  %v1445 = vsel %vm1156, %v775, %v1301
  %v1446 = vsel %vm1157, %v780, %v1302
  %v1447 = vsel %vm1158, %v783, %v1303
  %v1448 = vsel %vm1159, %v788, %v1304
  %v1449 = vsel %vm1160, %v791, %v1305
  %v1450 = vsel %vm1161, %v796, %v1306
  %v1451 = vsel %vm1162, %v799, %v1307
  %v1452 = vsel %vm1163, %v804, %v1308
  %v1453 = vsel %vm1164, %v807, %v1309
  %v1454 = vsel %vm1165, %v812, %v1310
  %v1455 = vsel %vm1166, %v815, %v1311
  %v1456 = vsel %vm1167, %v820, %v1312
  %v1457 = vsel %vm1168, %v823, %v1313
  %v1458 = vsel %vm1169, %v828, %v1314
  %v1459 = vsel %vm1170, %v831, %v1315
  %v1460 = vsel %vm1171, %v836, %v1316
  %v1461 = vsel %vm1172, %v839, %v1317
  %v1462 = vsel %vm1173, %v844, %v1318
  %v1463 = vsel %vm1174, %v847, %v1319
  %v1464 = vsel %vm1175, %v852, %v1320
  %v1465 = vsel %vm1176, %v855, %v1321
  %v1466 = vsel %vm1177, %v860, %v1322
  %v1467 = vsel %vm1178, %v863, %v1323
  %v1468 = vsel %vm1179, %v868, %v1324
  %v1469 = vsel %vm1180, %v871, %v1325
  %v1470 = vsel %vm1181, %v876, %v1326
  %v1471 = vsel %vm1182, %v879, %v1327
  %v1472 = vsel %vm1183, %v884, %v1328
  %v1473 = vsel %vm1184, %v887, %v1329
  %v1474 = vsel %vm1185, %v892, %v1330
  %v1475 = vsel %vm1186, %v895, %v1331
  %v1476 = vsel %vm1187, %v900, %v1332
  %v1477 = vsel %vm1188, %v903, %v1333
  %v1478 = vsel %vm1189, %v908, %v1334
  %v1479 = vsel %vm1190, %v911, %v1335
  %v1480 = vsel %vm1191, %v916, %v1336
  %v1481 = vsel %vm1192, %v919, %v1337
  %v1482 = vsel %vm1193, %v924, %v1338
  %v1483 = vsel %vm1194, %v927, %v1339
  %v1484 = vsel %vm1195, %v932, %v1340
  %v1485 = vsel %vm1196, %v935, %v1341
  %v1486 = vsel %vm1197, %v940, %v1342
  %v1487 = vsel %vm1198, %v943, %v1343
  %v1488 = vsel %vm1199, %v948, %v1344
  %v1489 = vsel %vm1200, %v951, %v1345
  %v1490 = vsel %vm1201, %v956, %v1346
  %v1491 = vsel %vm1202, %v959, %v1347
  %v1492 = vsel %vm1203, %v964, %v1348
  %v1493 = vsel %vm1204, %v967, %v1349
  %v1494 = vsel %vm1205, %v972, %v1350
  %v1495 = vsel %vm1206, %v975, %v1351
  %v1496 = vsel %vm1207, %v980, %v1352
  %v1497 = vsel %vm1208, %v983, %v1353
  %v1498 = vsel %vm1209, %v988, %v1354
  %v1499 = vsel %vm1210, %v991, %v1355
  %v1500 = vsel %vm1211, %v996, %v1356
  %v1501 = vsel %vm1212, %v999, %v1357
  %v1502 = vsel %vm1213, %v1004, %v1358
  %v1503 = vsel %vm1214, %v1007, %v1359
  %v1504 = vsel %vm1215, %v1012, %v1360
  %v1505 = vsel %vm1216, %v1015, %v1361
  %v1506 = vsel %vm1217, %v1020, %v1362
  %v1507 = vsel %vm1218, %v1023, %v1363
  %v1508 = vsel %vm1219, %v1028, %v1364
  %v1509 = vsel %vm1220, %v1031, %v1365
  %v1510 = vsel %vm1221, %v1036, %v1366
  %v1511 = vsel %vm1222, %v1039, %v1367
  %v1512 = vsel %vm1223, %v1044, %v1368
  %v1513 = vsel %vm1224, %v1047, %v1369
  %v1514 = vsel %vm1225, %v1052, %v1370
  %v1515 = vsel %vm1226, %v1055, %v1371
  %v1516 = vsel %vm1227, %v1060, %v1372
  %v1517 = vsel %vm1228, %v1063, %v1373
  %v1518 = vsel %vm1229, %v1068, %v1374
  %v1519 = vsel %vm1230, %v1071, %v1375
  %v1520 = vsel %vm1231, %v1076, %v1376
  %v1521 = vsel %vm1232, %v1079, %v1377
  %v1522 = vsel %vm1233, %v1084, %v1378
  %v1523 = vsel %vm1234, %v1087, %v1379
  %vm1524 = vcmask 261120
  %1525 = vst.msk [vmem:[%s4] sm:$0xff] %vm1524, %v1380
  %1526 = vst.msk [vmem:[%s4 + $0x8] sm:$0xff] %vm1524, %v1381
  %1527 = vst.msk [vmem:[%s4 + $0x10] sm:$0xff] %vm1524, %v1382
  %1528 = vst.msk [vmem:[%s4 + $0x18] sm:$0xff] %vm1524, %v1383
  %1529 = vst.msk [vmem:[%s4 + $0x20] sm:$0xff] %vm1524, %v1384
  %1530 = vst.msk [vmem:[%s4 + $0x28] sm:$0xff] %vm1524, %v1385
  %1531 = vst.msk [vmem:[%s4 + $0x30] sm:$0xff] %vm1524, %v1386
  %1532 = vst.msk [vmem:[%s4 + $0x38] sm:$0xff] %vm1524, %v1387
  %1533 = vst.msk [vmem:[%s4 + $0x40] sm:$0xff] %vm1524, %v1388
  %1534 = vst.msk [vmem:[%s4 + $0x48] sm:$0xff] %vm1524, %v1389
  %1535 = vst.msk [vmem:[%s4 + $0x50] sm:$0xff] %vm1524, %v1390
  %1536 = vst.msk [vmem:[%s4 + $0x58] sm:$0xff] %vm1524, %v1391
  %1537 = vst.msk [vmem:[%s4 + $0x60] sm:$0xff] %vm1524, %v1392
  %1538 = vst.msk [vmem:[%s4 + $0x68] sm:$0xff] %vm1524, %v1393
  %1539 = vst.msk [vmem:[%s4 + $0x70] sm:$0xff] %vm1524, %v1394
  %1540 = vst.msk [vmem:[%s4 + $0x78] sm:$0xff] %vm1524, %v1395
  %1541 = vst.msk [vmem:[%s4 + $0x80] sm:$0xff] %vm1524, %v1396
  %1542 = vst.msk [vmem:[%s4 + $0x88] sm:$0xff] %vm1524, %v1397
  %1543 = vst.msk [vmem:[%s4 + $0x90] sm:$0xff] %vm1524, %v1398
  %1544 = vst.msk [vmem:[%s4 + $0x98] sm:$0xff] %vm1524, %v1399
  %1545 = vst.msk [vmem:[%s4 + $0xa0] sm:$0xff] %vm1524, %v1400
  %1546 = vst.msk [vmem:[%s4 + $0xa8] sm:$0xff] %vm1524, %v1401
  %1547 = vst.msk [vmem:[%s4 + $0xb0] sm:$0xff] %vm1524, %v1402
  %1548 = vst.msk [vmem:[%s4 + $0xb8] sm:$0xff] %vm1524, %v1403
  %1549 = vst.msk [vmem:[%s4 + $0xc0] sm:$0xff] %vm1524, %v1404
  %1550 = vst.msk [vmem:[%s4 + $0xc8] sm:$0xff] %vm1524, %v1405
  %1551 = vst.msk [vmem:[%s4 + $0xd0] sm:$0xff] %vm1524, %v1406
  %1552 = vst.msk [vmem:[%s4 + $0xd8] sm:$0xff] %vm1524, %v1407
  %1553 = vst.msk [vmem:[%s4 + $0xe0] sm:$0xff] %vm1524, %v1408
  %1554 = vst.msk [vmem:[%s4 + $0xe8] sm:$0xff] %vm1524, %v1409
  %1555 = vst.msk [vmem:[%s4 + $0xf0] sm:$0xff] %vm1524, %v1410
  %1556 = vst.msk [vmem:[%s4 + $0xf8] sm:$0xff] %vm1524, %v1411
  %1557 = vst.msk [vmem:[%s4 + $0x100] sm:$0xff] %vm1524, %v1412
  %1558 = vst.msk [vmem:[%s4 + $0x108] sm:$0xff] %vm1524, %v1413
  %1559 = vst.msk [vmem:[%s4 + $0x110] sm:$0xff] %vm1524, %v1414
  %1560 = vst.msk [vmem:[%s4 + $0x118] sm:$0xff] %vm1524, %v1415
  %1561 = vst.msk [vmem:[%s4 + $0x120] sm:$0xff] %vm1524, %v1416
  %1562 = vst.msk [vmem:[%s4 + $0x128] sm:$0xff] %vm1524, %v1417
  %1563 = vst.msk [vmem:[%s4 + $0x130] sm:$0xff] %vm1524, %v1418
  %1564 = vst.msk [vmem:[%s4 + $0x138] sm:$0xff] %vm1524, %v1419
  %1565 = vst.msk [vmem:[%s4 + $0x140] sm:$0xff] %vm1524, %v1420
  %1566 = vst.msk [vmem:[%s4 + $0x148] sm:$0xff] %vm1524, %v1421
  %1567 = vst.msk [vmem:[%s4 + $0x150] sm:$0xff] %vm1524, %v1422
  %1568 = vst.msk [vmem:[%s4 + $0x158] sm:$0xff] %vm1524, %v1423
  %1569 = vst.msk [vmem:[%s4 + $0x160] sm:$0xff] %vm1524, %v1424
  %1570 = vst.msk [vmem:[%s4 + $0x168] sm:$0xff] %vm1524, %v1425
  %1571 = vst.msk [vmem:[%s4 + $0x170] sm:$0xff] %vm1524, %v1426
  %1572 = vst.msk [vmem:[%s4 + $0x178] sm:$0xff] %vm1524, %v1427
  %1573 = vst.msk [vmem:[%s4 + $0x180] sm:$0xff] %vm1524, %v1428
  %1574 = vst.msk [vmem:[%s4 + $0x188] sm:$0xff] %vm1524, %v1429
  %1575 = vst.msk [vmem:[%s4 + $0x190] sm:$0xff] %vm1524, %v1430
  %1576 = vst.msk [vmem:[%s4 + $0x198] sm:$0xff] %vm1524, %v1431
  %1577 = vst.msk [vmem:[%s4 + $0x1a0] sm:$0xff] %vm1524, %v1432
  %1578 = vst.msk [vmem:[%s4 + $0x1a8] sm:$0xff] %vm1524, %v1433
  %1579 = vst.msk [vmem:[%s4 + $0x1b0] sm:$0xff] %vm1524, %v1434
  %1580 = vst.msk [vmem:[%s4 + $0x1b8] sm:$0xff] %vm1524, %v1435
  %1581 = vst.msk [vmem:[%s4 + $0x1c0] sm:$0xff] %vm1524, %v1436
  %1582 = vst.msk [vmem:[%s4 + $0x1c8] sm:$0xff] %vm1524, %v1437
  %1583 = vst.msk [vmem:[%s4 + $0x1d0] sm:$0xff] %vm1524, %v1438
  %1584 = vst.msk [vmem:[%s4 + $0x1d8] sm:$0xff] %vm1524, %v1439
  %1585 = vst.msk [vmem:[%s4 + $0x1e0] sm:$0xff] %vm1524, %v1440
  %1586 = vst.msk [vmem:[%s4 + $0x1e8] sm:$0xff] %vm1524, %v1441
  %1587 = vst.msk [vmem:[%s4 + $0x1f0] sm:$0xff] %vm1524, %v1442
  %1588 = vst.msk [vmem:[%s4 + $0x1f8] sm:$0xff] %vm1524, %v1443
  %1589 = vst.msk [vmem:[%s4 + $0x200] sm:$0xff] %vm1524, %v1444
  %1590 = vst.msk [vmem:[%s4 + $0x208] sm:$0xff] %vm1524, %v1445
  %1591 = vst.msk [vmem:[%s4 + $0x210] sm:$0xff] %vm1524, %v1446
  %1592 = vst.msk [vmem:[%s4 + $0x218] sm:$0xff] %vm1524, %v1447
  %1593 = vst.msk [vmem:[%s4 + $0x220] sm:$0xff] %vm1524, %v1448
  %1594 = vst.msk [vmem:[%s4 + $0x228] sm:$0xff] %vm1524, %v1449
  %1595 = vst.msk [vmem:[%s4 + $0x230] sm:$0xff] %vm1524, %v1450
  %1596 = vst.msk [vmem:[%s4 + $0x238] sm:$0xff] %vm1524, %v1451
  %1597 = vst.msk [vmem:[%s4 + $0x240] sm:$0xff] %vm1524, %v1452
  %1598 = vst.msk [vmem:[%s4 + $0x248] sm:$0xff] %vm1524, %v1453
  %1599 = vst.msk [vmem:[%s4 + $0x250] sm:$0xff] %vm1524, %v1454
  %1600 = vst.msk [vmem:[%s4 + $0x258] sm:$0xff] %vm1524, %v1455
  %1601 = vst.msk [vmem:[%s4 + $0x260] sm:$0xff] %vm1524, %v1456
  %1602 = vst.msk [vmem:[%s4 + $0x268] sm:$0xff] %vm1524, %v1457
  %1603 = vst.msk [vmem:[%s4 + $0x270] sm:$0xff] %vm1524, %v1458
  %1604 = vst.msk [vmem:[%s4 + $0x278] sm:$0xff] %vm1524, %v1459
  %1605 = vst.msk [vmem:[%s4 + $0x280] sm:$0xff] %vm1524, %v1460
  %1606 = vst.msk [vmem:[%s4 + $0x288] sm:$0xff] %vm1524, %v1461
  %1607 = vst.msk [vmem:[%s4 + $0x290] sm:$0xff] %vm1524, %v1462
  %1608 = vst.msk [vmem:[%s4 + $0x298] sm:$0xff] %vm1524, %v1463
  %1609 = vst.msk [vmem:[%s4 + $0x2a0] sm:$0xff] %vm1524, %v1464
  %1610 = vst.msk [vmem:[%s4 + $0x2a8] sm:$0xff] %vm1524, %v1465
  %1611 = vst.msk [vmem:[%s4 + $0x2b0] sm:$0xff] %vm1524, %v1466
  %1612 = vst.msk [vmem:[%s4 + $0x2b8] sm:$0xff] %vm1524, %v1467
  %1613 = vst.msk [vmem:[%s4 + $0x2c0] sm:$0xff] %vm1524, %v1468
  %1614 = vst.msk [vmem:[%s4 + $0x2c8] sm:$0xff] %vm1524, %v1469
  %1615 = vst.msk [vmem:[%s4 + $0x2d0] sm:$0xff] %vm1524, %v1470
  %1616 = vst.msk [vmem:[%s4 + $0x2d8] sm:$0xff] %vm1524, %v1471
  %1617 = vst.msk [vmem:[%s4 + $0x2e0] sm:$0xff] %vm1524, %v1472
  %1618 = vst.msk [vmem:[%s4 + $0x2e8] sm:$0xff] %vm1524, %v1473
  %1619 = vst.msk [vmem:[%s4 + $0x2f0] sm:$0xff] %vm1524, %v1474
  %1620 = vst.msk [vmem:[%s4 + $0x2f8] sm:$0xff] %vm1524, %v1475
  %1621 = vst.msk [vmem:[%s4 + $0x300] sm:$0xff] %vm1524, %v1476
  %1622 = vst.msk [vmem:[%s4 + $0x308] sm:$0xff] %vm1524, %v1477
  %1623 = vst.msk [vmem:[%s4 + $0x310] sm:$0xff] %vm1524, %v1478
  %1624 = vst.msk [vmem:[%s4 + $0x318] sm:$0xff] %vm1524, %v1479
  %1625 = vst.msk [vmem:[%s4 + $0x320] sm:$0xff] %vm1524, %v1480
  %1626 = vst.msk [vmem:[%s4 + $0x328] sm:$0xff] %vm1524, %v1481
  %1627 = vst.msk [vmem:[%s4 + $0x330] sm:$0xff] %vm1524, %v1482
  %1628 = vst.msk [vmem:[%s4 + $0x338] sm:$0xff] %vm1524, %v1483
  %1629 = vst.msk [vmem:[%s4 + $0x340] sm:$0xff] %vm1524, %v1484
  %1630 = vst.msk [vmem:[%s4 + $0x348] sm:$0xff] %vm1524, %v1485
  %1631 = vst.msk [vmem:[%s4 + $0x350] sm:$0xff] %vm1524, %v1486
  %1632 = vst.msk [vmem:[%s4 + $0x358] sm:$0xff] %vm1524, %v1487
  %1633 = vst.msk [vmem:[%s4 + $0x360] sm:$0xff] %vm1524, %v1488
  %1634 = vst.msk [vmem:[%s4 + $0x368] sm:$0xff] %vm1524, %v1489
  %1635 = vst.msk [vmem:[%s4 + $0x370] sm:$0xff] %vm1524, %v1490
  %1636 = vst.msk [vmem:[%s4 + $0x378] sm:$0xff] %vm1524, %v1491
  %1637 = vst.msk [vmem:[%s4 + $0x380] sm:$0xff] %vm1524, %v1492
  %1638 = vst.msk [vmem:[%s4 + $0x388] sm:$0xff] %vm1524, %v1493
  %1639 = vst.msk [vmem:[%s4 + $0x390] sm:$0xff] %vm1524, %v1494
  %1640 = vst.msk [vmem:[%s4 + $0x398] sm:$0xff] %vm1524, %v1495
  %1641 = vst.msk [vmem:[%s4 + $0x3a0] sm:$0xff] %vm1524, %v1496
  %1642 = vst.msk [vmem:[%s4 + $0x3a8] sm:$0xff] %vm1524, %v1497
  %1643 = vst.msk [vmem:[%s4 + $0x3b0] sm:$0xff] %vm1524, %v1498
  %1644 = vst.msk [vmem:[%s4 + $0x3b8] sm:$0xff] %vm1524, %v1499
  %1645 = vst.msk [vmem:[%s4 + $0x3c0] sm:$0xff] %vm1524, %v1500
  %1646 = vst.msk [vmem:[%s4 + $0x3c8] sm:$0xff] %vm1524, %v1501
  %1647 = vst.msk [vmem:[%s4 + $0x3d0] sm:$0xff] %vm1524, %v1502
  %1648 = vst.msk [vmem:[%s4 + $0x3d8] sm:$0xff] %vm1524, %v1503
  %1649 = vst.msk [vmem:[%s4 + $0x3e0] sm:$0xff] %vm1524, %v1504
  %1650 = vst.msk [vmem:[%s4 + $0x3e8] sm:$0xff] %vm1524, %v1505
  %1651 = vst.msk [vmem:[%s4 + $0x3f0] sm:$0xff] %vm1524, %v1506
  %1652 = vst.msk [vmem:[%s4 + $0x3f8] sm:$0xff] %vm1524, %v1507
  %1653 = vst.msk [vmem:[%s4 + $0x400] sm:$0xff] %vm1524, %v1508
  %1654 = vst.msk [vmem:[%s4 + $0x408] sm:$0xff] %vm1524, %v1509
  %1655 = vst.msk [vmem:[%s4 + $0x410] sm:$0xff] %vm1524, %v1510
  %1656 = vst.msk [vmem:[%s4 + $0x418] sm:$0xff] %vm1524, %v1511
  %1657 = vst.msk [vmem:[%s4 + $0x420] sm:$0xff] %vm1524, %v1512
  %1658 = vst.msk [vmem:[%s4 + $0x428] sm:$0xff] %vm1524, %v1513
  %1659 = vst.msk [vmem:[%s4 + $0x430] sm:$0xff] %vm1524, %v1514
  %1660 = vst.msk [vmem:[%s4 + $0x438] sm:$0xff] %vm1524, %v1515
  %1661 = vst.msk [vmem:[%s4 + $0x440] sm:$0xff] %vm1524, %v1516
  %1662 = vst.msk [vmem:[%s4 + $0x448] sm:$0xff] %vm1524, %v1517
  %1663 = vst.msk [vmem:[%s4 + $0x450] sm:$0xff] %vm1524, %v1518
  %1664 = vst.msk [vmem:[%s4 + $0x458] sm:$0xff] %vm1524, %v1519
  %1665 = vst.msk [vmem:[%s4 + $0x460] sm:$0xff] %vm1524, %v1520
  %1666 = vst.msk [vmem:[%s4 + $0x468] sm:$0xff] %vm1524, %v1521
  %1667 = vst.msk [vmem:[%s4 + $0x470] sm:$0xff] %vm1524, %v1522
  %1668 = vst.msk [vmem:[%s4 + $0x478] sm:$0xff] %vm1524, %v1523
  // Predicated region
  $region18: #{embedding_net_l2_forward.3} parent=0 // pred_check
    _
  $region19: #{embedding_net_l2_forward.3} parent=0 // pred_check_branch
    %1670 = sbr.rel (0) target = $region21
  $region20: #{embedding_net_l2_forward.3} parent=0 // pred_region
    _
  $region21: #{embedding_net_l2_forward.3} parent=0 // pred_fallthru
    _
  // Predicated region
  $region22: #{embedding_net_l2_forward.3} parent=0 // pred_check
    _
  $region23: #{embedding_net_l2_forward.3} parent=0 // pred_check_branch
    %1672 = sbr.rel (0) target = $region25
  $region24: #{embedding_net_l2_forward.3} parent=0 // pred_region
    _
  $region25: #{embedding_net_l2_forward.3} parent=0 // pred_fallthru
    _

// kernel: embedding_net_l2_forward.4
$region0: #{embedding_net_l2_forward.4}
  #allocation0 [shape = 'u32[]', space=smem, size = 0x4, offset = 0x4, fixed_abs, tag = 'smem constant byte address 0x4 - core index']
  #allocation1 [shape = 'u32[144,128]{1,0:T(1,128)}', space=vmem, size = 0x12000, scoped, tag = 'internal scratch']
  #allocation2 [shape = 'f32[1]{0:T(128)S(6)}', space=smem, size = 0x200, scoped, tag = 'scoped memory for embedding_net_l2_forward.4']
  %s0 = inlined_call_operand.vmem [shape: f32[128,800], index: 0, kind: input, shape index: {}]
  %s1 = inlined_call_operand.vmem [shape: bf16[800,64], index: 1, kind: input, shape index: {}]
  %s2 = inlined_call_operand.vmem [shape: f32[1,64], index: 2, kind: input, shape index: {}]
  %s3 = inlined_call_operand.<no memory space> [shape: f32[1], index: 3, kind: input, shape index: {}]
  %s4 = inlined_call_operand.vmem [shape: f32[128,64], index: 4, kind: output, shape index: {}]
  %s5 = sld [smem:[#allocation0]]
  $region26: #{embedding_net_l2_forward.4} parent=0
    _
  %s7 = ssub.s32 1, %s5
  %s8 = scalar_select 0, %s7, %s5
  %9 = sst [smem:[#allocation2]] %s3
  // Predicated region
  $region2: #{embedding_net_l2_forward.4} parent=0 // pred_check
    _
  $region3: #{embedding_net_l2_forward.4} parent=0 // pred_check_branch
    %11 = sbr.rel (0) target = $region5
  $region4: #{embedding_net_l2_forward.4} parent=0 // pred_region
    _
  $region5: #{embedding_net_l2_forward.4} parent=0 // pred_fallthru
    _
  // Predicated region
  $region6: #{embedding_net_l2_forward.4} parent=0 // pred_check
    _
  $region7: #{embedding_net_l2_forward.4} parent=0 // pred_check_branch
    %13 = sbr.rel (0) target = $region9
  $region8: #{embedding_net_l2_forward.4} parent=0 // pred_region
    _
  $region9: #{embedding_net_l2_forward.4} parent=0 // pred_fallthru
    _
  // Predicated region
  $region10: #{embedding_net_l2_forward.4} parent=0 // pred_check
    _
  $region11: #{embedding_net_l2_forward.4} parent=0 // pred_check_branch
    %15 = sbr.rel (0) target = $region13
  $region12: #{embedding_net_l2_forward.4} parent=0 // pred_region
    _
  $region13: #{embedding_net_l2_forward.4} parent=0 // pred_fallthru
    _
  // Predicated region
  $region14: #{embedding_net_l2_forward.4} parent=0 // pred_check
    _
  $region15: #{embedding_net_l2_forward.4} parent=0 // pred_check_branch
    %17 = sbr.rel (0) target = $region17
  $region16: #{embedding_net_l2_forward.4} parent=0 // pred_region
    _
  $region17: #{embedding_net_l2_forward.4} parent=0 // pred_fallthru
    _
  %v19 = vld [vmem:[%s0] sm:$0xff]
  %v20 = vld [vmem:[%s0 + $0x8] sm:$0xff]
  %v21 = vld [vmem:[%s0 + $0x10] sm:$0xff]
  %v22 = vld [vmem:[%s0 + $0x18] sm:$0xff]
  %v23 = vld [vmem:[%s0 + $0x20] sm:$0xff]
  %v24 = vld [vmem:[%s0 + $0x28] sm:$0xff]
  %v25 = vld [vmem:[%s0 + $0x30] sm:$0xff]
  %v26 = vld [vmem:[%s0 + $0x38] sm:$0xff]
  %v27 = vld [vmem:[%s0 + $0x40] sm:$0xff]
  %v28 = vld [vmem:[%s0 + $0x48] sm:$0xff]
  %v29 = vld [vmem:[%s0 + $0x50] sm:$0xff]
  %v30 = vld [vmem:[%s0 + $0x58] sm:$0xff]
  %v31 = vld [vmem:[%s0 + $0x60] sm:$0xff]
  %v32 = vld [vmem:[%s0 + $0x68] sm:$0xff]
  %v33 = vld [vmem:[%s0 + $0x70] sm:$0xff]
  %v34 = vld [vmem:[%s0 + $0x78] sm:$0xff]
  %v35 = vld [vmem:[%s0 + $0x80] sm:$0xff]
  %v36 = vld [vmem:[%s0 + $0x88] sm:$0xff]
  %v37 = vld [vmem:[%s0 + $0x90] sm:$0xff]
  %v38 = vld [vmem:[%s0 + $0x98] sm:$0xff]
  %v39 = vld [vmem:[%s0 + $0xa0] sm:$0xff]
  %v40 = vld [vmem:[%s0 + $0xa8] sm:$0xff]
  %v41 = vld [vmem:[%s0 + $0xb0] sm:$0xff]
  %v42 = vld [vmem:[%s0 + $0xb8] sm:$0xff]
  %v43 = vld [vmem:[%s0 + $0xc0] sm:$0xff]
  %v44 = vld [vmem:[%s0 + $0xc8] sm:$0xff]
  %v45 = vld [vmem:[%s0 + $0xd0] sm:$0xff]
  %v46 = vld [vmem:[%s0 + $0xd8] sm:$0xff]
  %v47 = vld [vmem:[%s0 + $0xe0] sm:$0xff]
  %v48 = vld [vmem:[%s0 + $0xe8] sm:$0xff]
  %v49 = vld [vmem:[%s0 + $0xf0] sm:$0xff]
  %v50 = vld [vmem:[%s0 + $0xf8] sm:$0xff]
  %v51 = vld [vmem:[%s0 + $0x100] sm:$0xff]
  %v52 = vld [vmem:[%s0 + $0x108] sm:$0xff]
  %v53 = vld [vmem:[%s0 + $0x110] sm:$0xff]
  %v54 = vld [vmem:[%s0 + $0x118] sm:$0xff]
  %v55 = vld [vmem:[%s0 + $0x120] sm:$0xff]
  %v56 = vld [vmem:[%s0 + $0x128] sm:$0xff]
  %v57 = vld [vmem:[%s0 + $0x130] sm:$0xff]
  %v58 = vld [vmem:[%s0 + $0x138] sm:$0xff]
  %v59 = vld [vmem:[%s0 + $0x140] sm:$0xff]
  %v60 = vld [vmem:[%s0 + $0x148] sm:$0xff]
  %v61 = vld [vmem:[%s0 + $0x150] sm:$0xff]
  %v62 = vld [vmem:[%s0 + $0x158] sm:$0xff]
  %v63 = vld [vmem:[%s0 + $0x160] sm:$0xff]
  %v64 = vld [vmem:[%s0 + $0x168] sm:$0xff]
  %v65 = vld [vmem:[%s0 + $0x170] sm:$0xff]
  %v66 = vld [vmem:[%s0 + $0x178] sm:$0xff]
  %v67 = vld [vmem:[%s0 + $0x180] sm:$0xff]
  %v68 = vld [vmem:[%s0 + $0x188] sm:$0xff]
  %v69 = vld [vmem:[%s0 + $0x190] sm:$0xff]
  %v70 = vld [vmem:[%s0 + $0x198] sm:$0xff]
  %v71 = vld [vmem:[%s0 + $0x1a0] sm:$0xff]
  %v72 = vld [vmem:[%s0 + $0x1a8] sm:$0xff]
  %v73 = vld [vmem:[%s0 + $0x1b0] sm:$0xff]
  %v74 = vld [vmem:[%s0 + $0x1b8] sm:$0xff]
  %v75 = vld [vmem:[%s0 + $0x1c0] sm:$0xff]
  %v76 = vld [vmem:[%s0 + $0x1c8] sm:$0xff]
  %v77 = vld [vmem:[%s0 + $0x1d0] sm:$0xff]
  %v78 = vld [vmem:[%s0 + $0x1d8] sm:$0xff]
  %v79 = vld [vmem:[%s0 + $0x1e0] sm:$0xff]
  %v80 = vld [vmem:[%s0 + $0x1e8] sm:$0xff]
  %v81 = vld [vmem:[%s0 + $0x1f0] sm:$0xff]
  %v82 = vld [vmem:[%s0 + $0x1f8] sm:$0xff]
  %v83 = vld [vmem:[%s0 + $0x200] sm:$0xff]
  %v84 = vld [vmem:[%s0 + $0x208] sm:$0xff]
  %v85 = vld [vmem:[%s0 + $0x210] sm:$0xff]
  %v86 = vld [vmem:[%s0 + $0x218] sm:$0xff]
  %v87 = vld [vmem:[%s0 + $0x220] sm:$0xff]
  %v88 = vld [vmem:[%s0 + $0x228] sm:$0xff]
  %v89 = vld [vmem:[%s0 + $0x230] sm:$0xff]
  %v90 = vld [vmem:[%s0 + $0x238] sm:$0xff]
  %v91 = vld [vmem:[%s0 + $0x240] sm:$0xff]
  %v92 = vld [vmem:[%s0 + $0x248] sm:$0xff]
  %v93 = vld [vmem:[%s0 + $0x250] sm:$0xff]
  %v94 = vld [vmem:[%s0 + $0x258] sm:$0xff]
  %v95 = vld [vmem:[%s0 + $0x260] sm:$0xff]
  %v96 = vld [vmem:[%s0 + $0x268] sm:$0xff]
  %v97 = vld [vmem:[%s0 + $0x270] sm:$0xff]
  %v98 = vld [vmem:[%s0 + $0x278] sm:$0xff]
  %v99 = vld [vmem:[%s0 + $0x280] sm:$0xff]
  %v100 = vld [vmem:[%s0 + $0x288] sm:$0xff]
  %v101 = vld [vmem:[%s0 + $0x290] sm:$0xff]
  %v102 = vld [vmem:[%s0 + $0x298] sm:$0xff]
  %v103 = vld [vmem:[%s0 + $0x2a0] sm:$0xff]
  %v104 = vld [vmem:[%s0 + $0x2a8] sm:$0xff]
  %v105 = vld [vmem:[%s0 + $0x2b0] sm:$0xff]
  %v106 = vld [vmem:[%s0 + $0x2b8] sm:$0xff]
  %v107 = vld [vmem:[%s0 + $0x2c0] sm:$0xff]
  %v108 = vld [vmem:[%s0 + $0x2c8] sm:$0xff]
  %v109 = vld [vmem:[%s0 + $0x2d0] sm:$0xff]
  %v110 = vld [vmem:[%s0 + $0x2d8] sm:$0xff]
  %v111 = vld [vmem:[%s0 + $0x2e0] sm:$0xff]
  %v112 = vld [vmem:[%s0 + $0x2e8] sm:$0xff]
  %v113 = vld [vmem:[%s0 + $0x2f0] sm:$0xff]
  %v114 = vld [vmem:[%s0 + $0x2f8] sm:$0xff]
  %v115 = vld [vmem:[%s0 + $0x300] sm:$0xff]
  %v116 = vld [vmem:[%s0 + $0x308] sm:$0xff]
  %v117 = vld [vmem:[%s0 + $0x310] sm:$0xff]
  %v118 = vld [vmem:[%s0 + $0x318] sm:$0xff]
  %v119 = vld [vmem:[%s0 + $0x320] sm:$0xff]
  %v120 = vld [vmem:[%s0 + $0x328] sm:$0xff]
  %v121 = vld [vmem:[%s0 + $0x330] sm:$0xff]
  %v122 = vld [vmem:[%s0 + $0x338] sm:$0xff]
  %v123 = vld [vmem:[%s0 + $0x340] sm:$0xff]
  %v124 = vld [vmem:[%s0 + $0x348] sm:$0xff]
  %v125 = vld [vmem:[%s0 + $0x350] sm:$0xff]
  %v126 = vld [vmem:[%s0 + $0x358] sm:$0xff]
  %v127 = vld [vmem:[%s0 + $0x360] sm:$0xff]
  %v128 = vld [vmem:[%s0 + $0x368] sm:$0xff]
  %v129 = vld [vmem:[%s0 + $0x370] sm:$0xff]
  %v130 = vld [vmem:[%s0 + $0x378] sm:$0xff]
  %v131 = vpack.c.bf16 %v26, %v19
  %v132 = vpack.c.bf16 %v27, %v20
  %v133 = vpack.c.bf16 %v28, %v21
  %v134 = vpack.c.bf16 %v29, %v22
  %v135 = vpack.c.bf16 %v30, %v23
  %v136 = vpack.c.bf16 %v31, %v24
  %v137 = vpack.c.bf16 %v32, %v25
  %v138 = vpack.c.bf16 %v40, %v33
  %v139 = vpack.c.bf16 %v41, %v34
  %v140 = vpack.c.bf16 %v42, %v35
  %v141 = vpack.c.bf16 %v43, %v36
  %v142 = vpack.c.bf16 %v44, %v37
  %v143 = vpack.c.bf16 %v45, %v38
  %v144 = vpack.c.bf16 %v46, %v39
  %v145 = vpack.c.bf16 %v54, %v47
  %v146 = vpack.c.bf16 %v55, %v48
  %v147 = vpack.c.bf16 %v56, %v49
  %v148 = vpack.c.bf16 %v57, %v50
  %v149 = vpack.c.bf16 %v58, %v51
  %v150 = vpack.c.bf16 %v59, %v52
  %v151 = vpack.c.bf16 %v60, %v53
  %v152 = vpack.c.bf16 %v68, %v61
  %v153 = vpack.c.bf16 %v69, %v62
  %v154 = vpack.c.bf16 %v70, %v63
  %v155 = vpack.c.bf16 %v71, %v64
  %v156 = vpack.c.bf16 %v72, %v65
  %v157 = vpack.c.bf16 %v73, %v66
  %v158 = vpack.c.bf16 %v74, %v67
  %v159 = vpack.c.bf16 %v82, %v75
  %v160 = vpack.c.bf16 %v83, %v76
  %v161 = vpack.c.bf16 %v84, %v77
  %v162 = vpack.c.bf16 %v85, %v78
  %v163 = vpack.c.bf16 %v86, %v79
  %v164 = vpack.c.bf16 %v87, %v80
  %v165 = vpack.c.bf16 %v88, %v81
  %v166 = vpack.c.bf16 %v96, %v89
  %v167 = vpack.c.bf16 %v97, %v90
  %v168 = vpack.c.bf16 %v98, %v91
  %v169 = vpack.c.bf16 %v99, %v92
  %v170 = vpack.c.bf16 %v100, %v93
  %v171 = vpack.c.bf16 %v101, %v94
  %v172 = vpack.c.bf16 %v102, %v95
  %v173 = vpack.c.bf16 %v110, %v103
  %v174 = vpack.c.bf16 %v111, %v104
  %v175 = vpack.c.bf16 %v112, %v105
  %v176 = vpack.c.bf16 %v113, %v106
  %v177 = vpack.c.bf16 %v114, %v107
  %v178 = vpack.c.bf16 %v115, %v108
  %v179 = vpack.c.bf16 %v116, %v109
  %v180 = vpack.c.bf16 %v124, %v117
  %v181 = vpack.c.bf16 %v125, %v118
  %v182 = vpack.c.bf16 %v126, %v119
  %v183 = vpack.c.bf16 %v127, %v120
  %v184 = vpack.c.bf16 %v128, %v121
  %v185 = vpack.c.bf16 %v129, %v122
  %v186 = vpack.c.bf16 %v130, %v123
  %v187 = vld [vmem:[%s1] sm:$0xf]
  %v188 = vld [vmem:[%s1 + $0x4] sm:$0xf]
  %v189 = vld [vmem:[%s1 + $0x8] sm:$0xf]
  %v190 = vld [vmem:[%s1 + $0xc] sm:$0xf]
  %v191 = vld [vmem:[%s1 + $0x10] sm:$0xf]
  %v192 = vld [vmem:[%s1 + $0x14] sm:$0xf]
  %v193 = vld [vmem:[%s1 + $0x18] sm:$0xf]
  %v194 = vld [vmem:[%s1 + $0x1c] sm:$0xf]
  %v195 = vld [vmem:[%s1 + $0x20] sm:$0xf]
  %v196 = vld [vmem:[%s1 + $0x24] sm:$0xf]
  %v197 = vld [vmem:[%s1 + $0x28] sm:$0xf]
  %v198 = vld [vmem:[%s1 + $0x2c] sm:$0xf]
  %v199 = vld [vmem:[%s1 + $0x30] sm:$0xf]
  %v200 = vld [vmem:[%s1 + $0x34] sm:$0xf]
  %v201 = vld [vmem:[%s1 + $0x38] sm:$0xf]
  %v202 = vld [vmem:[%s1 + $0x3c] sm:$0xf]
  %v203 = vld [vmem:[%s1 + $0x40] sm:$0xf]
  %v204 = vld [vmem:[%s1 + $0x44] sm:$0xf]
  %v205 = vld [vmem:[%s1 + $0x48] sm:$0xf]
  %v206 = vld [vmem:[%s1 + $0x4c] sm:$0xf]
  %v207 = vld [vmem:[%s1 + $0x50] sm:$0xf]
  %v208 = vld [vmem:[%s1 + $0x54] sm:$0xf]
  %v209 = vld [vmem:[%s1 + $0x58] sm:$0xf]
  %v210 = vld [vmem:[%s1 + $0x5c] sm:$0xf]
  %v211 = vld [vmem:[%s1 + $0x60] sm:$0xf]
  %v212 = vld [vmem:[%s1 + $0x64] sm:$0xf]
  %v213 = vld [vmem:[%s1 + $0x68] sm:$0xf]
  %v214 = vld [vmem:[%s1 + $0x6c] sm:$0xf]
  %v215 = vld [vmem:[%s1 + $0x70] sm:$0xf]
  %v216 = vld [vmem:[%s1 + $0x74] sm:$0xf]
  %v217 = vld [vmem:[%s1 + $0x78] sm:$0xf]
  %v218 = vld [vmem:[%s1 + $0x7c] sm:$0xf]
  %v219 = vld [vmem:[%s1 + $0x80] sm:$0xf]
  %v220 = vld [vmem:[%s1 + $0x84] sm:$0xf]
  %v221 = vld [vmem:[%s1 + $0x88] sm:$0xf]
  %v222 = vld [vmem:[%s1 + $0x8c] sm:$0xf]
  %v223 = vld [vmem:[%s1 + $0x90] sm:$0xf]
  %v224 = vld [vmem:[%s1 + $0x94] sm:$0xf]
  %v225 = vld [vmem:[%s1 + $0x98] sm:$0xf]
  %v226 = vld [vmem:[%s1 + $0x9c] sm:$0xf]
  %v227 = vld [vmem:[%s1 + $0xa0] sm:$0xf]
  %v228 = vld [vmem:[%s1 + $0xa4] sm:$0xf]
  %v229 = vld [vmem:[%s1 + $0xa8] sm:$0xf]
  %v230 = vld [vmem:[%s1 + $0xac] sm:$0xf]
  %v231 = vld [vmem:[%s1 + $0xb0] sm:$0xf]
  %v232 = vld [vmem:[%s1 + $0xb4] sm:$0xf]
  %v233 = vld [vmem:[%s1 + $0xb8] sm:$0xf]
  %v234 = vld [vmem:[%s1 + $0xbc] sm:$0xf]
  %v235 = vld [vmem:[%s1 + $0xc0] sm:$0xf]
  %v236 = vld [vmem:[%s1 + $0xc4] sm:$0xf]
  %v237 = vld [vmem:[%s1 + $0xc8] sm:$0xf]
  %v238 = vld [vmem:[%s1 + $0xcc] sm:$0xf]
  %v239 = vld [vmem:[%s1 + $0xd0] sm:$0xf]
  %v240 = vld [vmem:[%s1 + $0xd4] sm:$0xf]
  %v241 = vld [vmem:[%s1 + $0xd8] sm:$0xf]
  %v242 = vld [vmem:[%s1 + $0xdc] sm:$0xf]
  %v243 = vld [vmem:[%s1 + $0xe0] sm:$0xf]
  %v244 = vld [vmem:[%s1 + $0xe4] sm:$0xf]
  %v245 = vld [vmem:[%s1 + $0xe8] sm:$0xf]
  %v246 = vld [vmem:[%s1 + $0xec] sm:$0xf]
  %v247 = vld [vmem:[%s1 + $0xf0] sm:$0xf]
  %v248 = vld [vmem:[%s1 + $0xf4] sm:$0xf]
  %v249 = vld [vmem:[%s1 + $0xf8] sm:$0xf]
  %v250 = vld [vmem:[%s1 + $0xfc] sm:$0xf]
  %v251 = vld [vmem:[%s1 + $0x100] sm:$0xf]
  %v252 = vld [vmem:[%s1 + $0x104] sm:$0xf]
  %v253 = vld [vmem:[%s1 + $0x108] sm:$0xf]
  %v254 = vld [vmem:[%s1 + $0x10c] sm:$0xf]
  %v255 = vld [vmem:[%s1 + $0x110] sm:$0xf]
  %v256 = vld [vmem:[%s1 + $0x114] sm:$0xf]
  %v257 = vld [vmem:[%s1 + $0x118] sm:$0xf]
  %v258 = vld [vmem:[%s1 + $0x11c] sm:$0xf]
  %v259 = vld [vmem:[%s1 + $0x120] sm:$0xf]
  %v260 = vld [vmem:[%s1 + $0x124] sm:$0xf]
  %v261 = vld [vmem:[%s1 + $0x128] sm:$0xf]
  %v262 = vld [vmem:[%s1 + $0x12c] sm:$0xf]
  %v263 = vld [vmem:[%s1 + $0x130] sm:$0xf]
  %v264 = vld [vmem:[%s1 + $0x134] sm:$0xf]
  %v265 = vld [vmem:[%s1 + $0x138] sm:$0xf]
  %v266 = vld [vmem:[%s1 + $0x13c] sm:$0xf]
  %v267 = vld [vmem:[%s1 + $0x140] sm:$0xf]
  %v268 = vld [vmem:[%s1 + $0x144] sm:$0xf]
  %v269 = vld [vmem:[%s1 + $0x148] sm:$0xf]
  %v270 = vld [vmem:[%s1 + $0x14c] sm:$0xf]
  %v271 = vld [vmem:[%s1 + $0x150] sm:$0xf]
  %v272 = vld [vmem:[%s1 + $0x154] sm:$0xf]
  %v273 = vld [vmem:[%s1 + $0x158] sm:$0xf]
  %v274 = vld [vmem:[%s1 + $0x15c] sm:$0xf]
  %v275 = vld [vmem:[%s1 + $0x160] sm:$0xf]
  %v276 = vld [vmem:[%s1 + $0x164] sm:$0xf]
  %v277 = vld [vmem:[%s1 + $0x168] sm:$0xf]
  %v278 = vld [vmem:[%s1 + $0x16c] sm:$0xf]
  %v279 = vld [vmem:[%s1 + $0x170] sm:$0xf]
  %v280 = vld [vmem:[%s1 + $0x174] sm:$0xf]
  %v281 = vld [vmem:[%s1 + $0x178] sm:$0xf]
  %v282 = vld [vmem:[%s1 + $0x17c] sm:$0xf]
  %v283 = vld [vmem:[%s1 + $0x180] sm:$0xf]
  %v284 = vld [vmem:[%s1 + $0x184] sm:$0xf]
  %v285 = vld [vmem:[%s1 + $0x188] sm:$0xf]
  %v286 = vld [vmem:[%s1 + $0x18c] sm:$0xf]
  %v287 = vld [vmem:[%s2] sm:$0x1]
  %v289 = vlaneseq
  %v290 = vshrl.u32 %v289, 7
  %v291 = vsub.s32 0, %v290
  %v292 = vrot.slane %v287, %v291
  %v394 = vunpack.c.l.b16 %v187
  %v395 = vunpack.c.l.b16 %v188
  %v396 = vunpack.c.l.b16 %v189
  %v397 = vunpack.c.l.b16 %v190
  %v398 = vunpack.c.l.b16 %v191
  %v399 = vunpack.c.l.b16 %v192
  %v400 = vunpack.c.l.b16 %v193
  %v401 = vunpack.c.l.b16 %v194
  %v402 = vunpack.c.l.b16 %v195
  %v403 = vunpack.c.l.b16 %v196
  %v404 = vunpack.c.l.b16 %v197
  %v405 = vunpack.c.l.b16 %v198
  %v406 = vunpack.c.l.b16 %v199
  %v407 = vunpack.c.l.b16 %v200
  %v408 = vunpack.c.l.b16 %v201
  %v409 = vunpack.c.l.b16 %v202
  %v410 = vunpack.c.l.b16 %v203
  %v411 = vunpack.c.l.b16 %v204
  %v412 = vunpack.c.l.b16 %v205
  %v413 = vunpack.c.l.b16 %v206
  %v414 = vunpack.c.l.b16 %v207
  %v415 = vunpack.c.l.b16 %v208
  %v416 = vunpack.c.l.b16 %v209
  %v417 = vunpack.c.l.b16 %v210
  %v418 = vunpack.c.l.b16 %v211
  %v419 = vunpack.c.l.b16 %v212
  %v420 = vunpack.c.l.b16 %v213
  %v421 = vunpack.c.l.b16 %v214
  %v422 = vunpack.c.l.b16 %v215
  %v423 = vunpack.c.l.b16 %v216
  %v424 = vunpack.c.l.b16 %v217
  %v425 = vunpack.c.l.b16 %v218
  %v426 = vunpack.c.l.b16 %v219
  %v427 = vunpack.c.l.b16 %v220
  %v428 = vunpack.c.l.b16 %v221
  %v429 = vunpack.c.l.b16 %v222
  %v430 = vunpack.c.l.b16 %v223
  %v431 = vunpack.c.l.b16 %v224
  %v432 = vunpack.c.l.b16 %v225
  %v433 = vunpack.c.l.b16 %v226
  %v434 = vunpack.c.l.b16 %v227
  %v435 = vunpack.c.l.b16 %v228
  %v436 = vunpack.c.l.b16 %v229
  %v437 = vunpack.c.l.b16 %v230
  %v438 = vunpack.c.l.b16 %v231
  %v439 = vunpack.c.l.b16 %v232
  %v440 = vunpack.c.l.b16 %v233
  %v441 = vunpack.c.l.b16 %v234
  %v442 = vunpack.c.l.b16 %v235
  %v443 = vunpack.c.l.b16 %v236
  %v444 = vunpack.c.l.b16 %v237
  %v445 = vunpack.c.l.b16 %v238
  %v446 = vunpack.c.l.b16 %v239
  %v447 = vunpack.c.l.b16 %v240
  %v448 = vunpack.c.l.b16 %v241
  %v449 = vunpack.c.l.b16 %v242
  %v450 = vunpack.c.l.b16 %v243
  %v451 = vunpack.c.l.b16 %v244
  %v452 = vunpack.c.l.b16 %v245
  %v453 = vunpack.c.l.b16 %v246
  %v454 = vunpack.c.l.b16 %v247
  %v455 = vunpack.c.l.b16 %v248
  %v456 = vunpack.c.l.b16 %v249
  %v457 = vunpack.c.l.b16 %v250
  %v458 = vunpack.c.l.b16 %v251
  %v459 = vunpack.c.l.b16 %v252
  %v460 = vunpack.c.l.b16 %v253
  %v461 = vunpack.c.l.b16 %v254
  %v462 = vunpack.c.l.b16 %v255
  %v463 = vunpack.c.l.b16 %v256
  %v464 = vunpack.c.l.b16 %v257
  %v465 = vunpack.c.l.b16 %v258
  %v466 = vunpack.c.l.b16 %v259
  %v467 = vunpack.c.l.b16 %v260
  %v468 = vunpack.c.l.b16 %v261
  %v469 = vunpack.c.l.b16 %v262
  %v470 = vunpack.c.l.b16 %v263
  %v471 = vunpack.c.l.b16 %v264
  %v472 = vunpack.c.l.b16 %v265
  %v473 = vunpack.c.l.b16 %v266
  %v474 = vunpack.c.l.b16 %v267
  %v475 = vunpack.c.l.b16 %v268
  %v476 = vunpack.c.l.b16 %v269
  %v477 = vunpack.c.l.b16 %v270
  %v478 = vunpack.c.l.b16 %v271
  %v479 = vunpack.c.l.b16 %v272
  %v480 = vunpack.c.l.b16 %v273
  %v481 = vunpack.c.l.b16 %v274
  %v482 = vunpack.c.l.b16 %v275
  %v483 = vunpack.c.l.b16 %v276
  %v484 = vunpack.c.l.b16 %v277
  %v485 = vunpack.c.l.b16 %v278
  %v486 = vunpack.c.l.b16 %v279
  %v487 = vunpack.c.l.b16 %v280
  %v488 = vunpack.c.l.b16 %v281
  %v489 = vunpack.c.l.b16 %v282
  %v490 = vunpack.c.l.b16 %v283
  %v491 = vunpack.c.l.b16 %v284
  %v492 = vunpack.c.l.b16 %v285
  %v493 = vunpack.c.l.b16 %v286
  %v494 = vpack.c.b16 %v395, %v394
  %v495 = vpack.c.b16 %v397, %v396
  %v496 = vpack.c.b16 %v399, %v398
  %v497 = vpack.c.b16 %v401, %v400
  %v498 = vpack.c.b16 %v403, %v402
  %v499 = vpack.c.b16 %v405, %v404
  %v500 = vpack.c.b16 %v407, %v406
  %v501 = vpack.c.b16 %v409, %v408
  %v502 = vpack.c.b16 %v411, %v410
  %v503 = vpack.c.b16 %v413, %v412
  %v504 = vpack.c.b16 %v415, %v414
  %v505 = vpack.c.b16 %v417, %v416
  %v506 = vpack.c.b16 %v419, %v418
  %v507 = vpack.c.b16 %v421, %v420
  %v508 = vpack.c.b16 %v423, %v422
  %v509 = vpack.c.b16 %v425, %v424
  %v510 = vpack.c.b16 %v427, %v426
  %v511 = vpack.c.b16 %v429, %v428
  %v512 = vpack.c.b16 %v431, %v430
  %v513 = vpack.c.b16 %v433, %v432
  %v514 = vpack.c.b16 %v435, %v434
  %v515 = vpack.c.b16 %v437, %v436
  %v516 = vpack.c.b16 %v439, %v438
  %v517 = vpack.c.b16 %v441, %v440
  %v518 = vpack.c.b16 %v443, %v442
  %v519 = vpack.c.b16 %v445, %v444
  %v520 = vpack.c.b16 %v447, %v446
  %v521 = vpack.c.b16 %v449, %v448
  %v522 = vpack.c.b16 %v451, %v450
  %v523 = vpack.c.b16 %v453, %v452
  %v524 = vpack.c.b16 %v455, %v454
  %v525 = vpack.c.b16 %v457, %v456
  %v526 = vpack.c.b16 %v459, %v458
  %v527 = vpack.c.b16 %v461, %v460
  %v528 = vpack.c.b16 %v463, %v462
  %v529 = vpack.c.b16 %v465, %v464
  %v530 = vpack.c.b16 %v467, %v466
  %v531 = vpack.c.b16 %v469, %v468
  %v532 = vpack.c.b16 %v471, %v470
  %v533 = vpack.c.b16 %v473, %v472
  %v534 = vpack.c.b16 %v475, %v474
  %v535 = vpack.c.b16 %v477, %v476
  %v536 = vpack.c.b16 %v479, %v478
  %v537 = vpack.c.b16 %v481, %v480
  %v538 = vpack.c.b16 %v483, %v482
  %v539 = vpack.c.b16 %v485, %v484
  %v540 = vpack.c.b16 %v487, %v486
  %v541 = vpack.c.b16 %v489, %v488
  %v542 = vpack.c.b16 %v491, %v490
  %v543 = vpack.c.b16 %v493, %v492
  %vm594 = vcmask 261120
  %v596 = vsel %vm594, %v137, 0
  %v599 = vsel %vm594, %v144, 0
  %v602 = vsel %vm594, %v151, 0
  %v605 = vsel %vm594, %v158, 0
  %v608 = vsel %vm594, %v165, 0
  %v611 = vsel %vm594, %v172, 0
  %v614 = vsel %vm594, %v179, 0
  %v617 = vsel %vm594, %v186, 0
  %619 = vmatprep.subr.bf16.mxu0 0
  %620 = vmatpush1.bf16.msra.mxu0 %v494
  %621 = vmatprep.subr.bf16.mxu0 0
  %622 = vmatpush1.bf16.msra.mxu0 %v495
  %623 = vmatprep.subr.bf16.mxu0 0
  %624 = vmatpush1.bf16.msra.mxu0 %v496
  %625 = vmatprep.subr.bf16.mxu0 0
  %626 = vmatpush1.bf16.msra.mxu0 %v497
  %627 = vmatprep.subr.bf16.mxu0 0
  %628 = vmatpush1.bf16.msra.mxu0 %v498
  %629 = vmatprep.subr.bf16.mxu0 0
  %630 = vmatpush1.bf16.msra.mxu0 %v499
  %631 = vmatprep.subr.bf16.mxu0 0
  %632 = vmatpush1.bf16.msra.mxu0 %v500
  %633 = vmatprep.subr.bf16.mxu0 0
  %634 = vmatpush1.bf16.msra.mxu0 %v501
  %635 = vmatprep.subr.bf16.mxu0 0
  %636 = vmatpush1.bf16.msra.mxu0 %v502
  %637 = vmatprep.subr.bf16.mxu0 0
  %638 = vmatpush1.bf16.msra.mxu0 %v503
  %639 = vmatprep.subr.bf16.mxu0 0
  %640 = vmatpush1.bf16.msra.mxu0 %v504
  %641 = vmatprep.subr.bf16.mxu0 0
  %642 = vmatpush1.bf16.msra.mxu0 %v505
  %643 = vmatprep.subr.bf16.mxu0 0
  %644 = vmatpush1.bf16.msra.mxu0 %v506
  %645 = vmatprep.subr.bf16.mxu0 0
  %646 = vmatpush1.bf16.msra.mxu0 %v507
  %647 = vmatprep.subr.bf16.mxu0 0
  %648 = vmatpush1.bf16.msra.mxu0 %v508
  %649 = vmatprep.subr.bf16.mxu0 0
  %650 = vmatpush1.bf16.msra.mxu0 %v509
  %651 = vmatprep.mubr.bf16.mxu0 %v132
  %652 = vmatmul.mubr.bf16.gmra.mrb[0].mxu0 %v131
  %v653 = vpop.f32.mrb[0].mxu0
  %v654 = vadd.f32 %v292, %v653
  %v655 = vpop.f32.mrb[0].mxu0
  %v656 = vpop.f32.mrb[0].mxu0
  %v657 = vadd.f32 %v292, %v656
  %v658 = vpop.f32.mrb[0].mxu0
  %659 = vmatprep.mubr.bf16.mxu0 %v139
  %660 = vmatmul.mubr.bf16.gmra.mrb[0].mxu0 %v138
  %v661 = vpop.f32.mrb[0].mxu0
  %v662 = vadd.f32 %v292, %v661
  %v663 = vpop.f32.mrb[0].mxu0
  %v664 = vpop.f32.mrb[0].mxu0
  %v665 = vadd.f32 %v292, %v664
  %v666 = vpop.f32.mrb[0].mxu0
  %667 = vmatprep.mubr.bf16.mxu0 %v146
  %668 = vmatmul.mubr.bf16.gmra.mrb[0].mxu0 %v145
  %v669 = vpop.f32.mrb[0].mxu0
  %v670 = vadd.f32 %v292, %v669
  %v671 = vpop.f32.mrb[0].mxu0
  %v672 = vpop.f32.mrb[0].mxu0
  %v673 = vadd.f32 %v292, %v672
  %v674 = vpop.f32.mrb[0].mxu0
  %675 = vmatprep.mubr.bf16.mxu0 %v153
  %676 = vmatmul.mubr.bf16.gmra.mrb[0].mxu0 %v152
  %v677 = vpop.f32.mrb[0].mxu0
  %v678 = vadd.f32 %v292, %v677
  %v679 = vpop.f32.mrb[0].mxu0
  %v680 = vpop.f32.mrb[0].mxu0
  %v681 = vadd.f32 %v292, %v680
  %v682 = vpop.f32.mrb[0].mxu0
  %683 = vmatprep.mubr.bf16.mxu0 %v160
  %684 = vmatmul.mubr.bf16.gmra.mrb[0].mxu0 %v159
  %v685 = vpop.f32.mrb[0].mxu0
  %v686 = vadd.f32 %v292, %v685
  %v687 = vpop.f32.mrb[0].mxu0
  %v688 = vpop.f32.mrb[0].mxu0
  %v689 = vadd.f32 %v292, %v688
  %v690 = vpop.f32.mrb[0].mxu0
  %691 = vmatprep.mubr.bf16.mxu0 %v167
  %692 = vmatmul.mubr.bf16.gmra.mrb[0].mxu0 %v166
  %v693 = vpop.f32.mrb[0].mxu0
  %v694 = vadd.f32 %v292, %v693
  %v695 = vpop.f32.mrb[0].mxu0
  %v696 = vpop.f32.mrb[0].mxu0
  %v697 = vadd.f32 %v292, %v696
  %v698 = vpop.f32.mrb[0].mxu0
  %699 = vmatprep.mubr.bf16.mxu0 %v174
  %700 = vmatmul.mubr.bf16.gmra.mrb[0].mxu0 %v173
  %v701 = vpop.f32.mrb[0].mxu0
  %v702 = vadd.f32 %v292, %v701
  %v703 = vpop.f32.mrb[0].mxu0
  %v704 = vpop.f32.mrb[0].mxu0
  %v705 = vadd.f32 %v292, %v704
  %v706 = vpop.f32.mrb[0].mxu0
  %707 = vmatprep.mubr.bf16.mxu0 %v181
  %708 = vmatmul.mubr.bf16.gmra.mrb[0].mxu0 %v180
  %v709 = vpop.f32.mrb[0].mxu0
  %v710 = vadd.f32 %v292, %v709
  %v711 = vpop.f32.mrb[0].mxu0
  %v712 = vpop.f32.mrb[0].mxu0
  %v713 = vadd.f32 %v292, %v712
  %v714 = vpop.f32.mrb[0].mxu0
  %715 = vdwg.mxu0
  %716 = vmatprep.subr.bf16.mxu0 0
  %717 = vmatpush1.bf16.msra.mxu0 %v510
  %718 = vmatprep.subr.bf16.mxu0 0
  %719 = vmatpush1.bf16.msra.mxu0 %v511
  %720 = vmatprep.subr.bf16.mxu0 0
  %721 = vmatpush1.bf16.msra.mxu0 %v512
  %722 = vmatprep.subr.bf16.mxu0 0
  %723 = vmatpush1.bf16.msra.mxu0 %v513
  %724 = vmatprep.subr.bf16.mxu0 0
  %725 = vmatpush1.bf16.msra.mxu0 %v514
  %726 = vmatprep.subr.bf16.mxu0 0
  %727 = vmatpush1.bf16.msra.mxu0 %v515
  %728 = vmatprep.subr.bf16.mxu0 0
  %729 = vmatpush1.bf16.msra.mxu0 %v516
  %730 = vmatprep.subr.bf16.mxu0 0
  %731 = vmatpush1.bf16.msra.mxu0 %v517
  %732 = vmatprep.subr.bf16.mxu0 0
  %733 = vmatpush1.bf16.msra.mxu0 %v518
  %734 = vmatprep.subr.bf16.mxu0 0
  %735 = vmatpush1.bf16.msra.mxu0 %v519
  %736 = vmatprep.subr.bf16.mxu0 0
  %737 = vmatpush1.bf16.msra.mxu0 %v520
  %738 = vmatprep.subr.bf16.mxu0 0
  %739 = vmatpush1.bf16.msra.mxu0 %v521
  %740 = vmatprep.subr.bf16.mxu0 0
  %741 = vmatpush1.bf16.msra.mxu0 %v522
  %742 = vmatprep.subr.bf16.mxu0 0
  %743 = vmatpush1.bf16.msra.mxu0 %v523
  %744 = vmatprep.subr.bf16.mxu0 0
  %745 = vmatpush1.bf16.msra.mxu0 %v524
  %746 = vmatprep.subr.bf16.mxu0 0
  %747 = vmatpush1.bf16.msra.mxu0 %v525
  %748 = vmatprep.mubr.bf16.mxu0 %v134
  %749 = vmatmul.mubr.bf16.gmra.mrb[0].mxu0 %v133
  %v750 = vpop.f32.mrb[0].mxu0
  %v751 = vadd.f32 %v654, %v750
  %v752 = vpop.f32.mrb[0].mxu0
  %v753 = vpop.f32.mrb[0].mxu0
  %v754 = vadd.f32 %v657, %v753
  %v755 = vpop.f32.mrb[0].mxu0
  %756 = vmatprep.mubr.bf16.mxu0 %v141
  %757 = vmatmul.mubr.bf16.gmra.mrb[0].mxu0 %v140
  %v758 = vpop.f32.mrb[0].mxu0
  %v759 = vadd.f32 %v662, %v758
  %v760 = vpop.f32.mrb[0].mxu0
  %v761 = vpop.f32.mrb[0].mxu0
  %v762 = vadd.f32 %v665, %v761
  %v763 = vpop.f32.mrb[0].mxu0
  %764 = vmatprep.mubr.bf16.mxu0 %v148
  %765 = vmatmul.mubr.bf16.gmra.mrb[0].mxu0 %v147
  %v766 = vpop.f32.mrb[0].mxu0
  %v767 = vadd.f32 %v670, %v766
  %v768 = vpop.f32.mrb[0].mxu0
  %v769 = vpop.f32.mrb[0].mxu0
  %v770 = vadd.f32 %v673, %v769
  %v771 = vpop.f32.mrb[0].mxu0
  %772 = vmatprep.mubr.bf16.mxu0 %v155
  %773 = vmatmul.mubr.bf16.gmra.mrb[0].mxu0 %v154
  %v774 = vpop.f32.mrb[0].mxu0
  %v775 = vadd.f32 %v678, %v774
  %v776 = vpop.f32.mrb[0].mxu0
  %v777 = vpop.f32.mrb[0].mxu0
  %v778 = vadd.f32 %v681, %v777
  %v779 = vpop.f32.mrb[0].mxu0
  %780 = vmatprep.mubr.bf16.mxu0 %v162
  %781 = vmatmul.mubr.bf16.gmra.mrb[0].mxu0 %v161
  %v782 = vpop.f32.mrb[0].mxu0
  %v783 = vadd.f32 %v686, %v782
  %v784 = vpop.f32.mrb[0].mxu0
  %v785 = vpop.f32.mrb[0].mxu0
  %v786 = vadd.f32 %v689, %v785
  %v787 = vpop.f32.mrb[0].mxu0
  %788 = vmatprep.mubr.bf16.mxu0 %v169
  %789 = vmatmul.mubr.bf16.gmra.mrb[0].mxu0 %v168
  %v790 = vpop.f32.mrb[0].mxu0
  %v791 = vadd.f32 %v694, %v790
  %v792 = vpop.f32.mrb[0].mxu0
  %v793 = vpop.f32.mrb[0].mxu0
  %v794 = vadd.f32 %v697, %v793
  %v795 = vpop.f32.mrb[0].mxu0
  %796 = vmatprep.mubr.bf16.mxu0 %v176
  %797 = vmatmul.mubr.bf16.gmra.mrb[0].mxu0 %v175
  %v798 = vpop.f32.mrb[0].mxu0
  %v799 = vadd.f32 %v702, %v798
  %v800 = vpop.f32.mrb[0].mxu0
  %v801 = vpop.f32.mrb[0].mxu0
  %v802 = vadd.f32 %v705, %v801
  %v803 = vpop.f32.mrb[0].mxu0
  %804 = vmatprep.mubr.bf16.mxu0 %v183
  %805 = vmatmul.mubr.bf16.gmra.mrb[0].mxu0 %v182
  %v806 = vpop.f32.mrb[0].mxu0
  %v807 = vadd.f32 %v710, %v806
  %v808 = vpop.f32.mrb[0].mxu0
  %v809 = vpop.f32.mrb[0].mxu0
  %v810 = vadd.f32 %v713, %v809
  %v811 = vpop.f32.mrb[0].mxu0
  %812 = vdwg.mxu0
  %813 = vmatprep.subr.bf16.mxu0 0
  %814 = vmatpush1.bf16.msra.mxu0 %v526
  %815 = vmatprep.subr.bf16.mxu0 0
  %816 = vmatpush1.bf16.msra.mxu0 %v527
  %817 = vmatprep.subr.bf16.mxu0 0
  %818 = vmatpush1.bf16.msra.mxu0 %v528
  %819 = vmatprep.subr.bf16.mxu0 0
  %820 = vmatpush1.bf16.msra.mxu0 %v529
  %821 = vmatprep.subr.bf16.mxu0 0
  %822 = vmatpush1.bf16.msra.mxu0 %v530
  %823 = vmatprep.subr.bf16.mxu0 0
  %824 = vmatpush1.bf16.msra.mxu0 %v531
  %825 = vmatprep.subr.bf16.mxu0 0
  %826 = vmatpush1.bf16.msra.mxu0 %v532
  %827 = vmatprep.subr.bf16.mxu0 0
  %828 = vmatpush1.bf16.msra.mxu0 %v533
  %829 = vmatprep.subr.bf16.mxu0 0
  %830 = vmatpush1.bf16.msra.mxu0 %v534
  %831 = vmatprep.subr.bf16.mxu0 0
  %832 = vmatpush1.bf16.msra.mxu0 %v535
  %833 = vmatprep.subr.bf16.mxu0 0
  %834 = vmatpush1.bf16.msra.mxu0 %v536
  %835 = vmatprep.subr.bf16.mxu0 0
  %836 = vmatpush1.bf16.msra.mxu0 %v537
  %837 = vmatprep.subr.bf16.mxu0 0
  %838 = vmatpush1.bf16.msra.mxu0 %v538
  %839 = vmatprep.subr.bf16.mxu0 0
  %840 = vmatpush1.bf16.msra.mxu0 %v539
  %841 = vmatprep.subr.bf16.mxu0 0
  %842 = vmatpush1.bf16.msra.mxu0 %v540
  %843 = vmatprep.subr.bf16.mxu0 0
  %844 = vmatpush1.bf16.msra.mxu0 %v541
  %845 = vmatprep.mubr.bf16.mxu0 %v136
  %846 = vmatmul.mubr.bf16.gmra.mrb[0].mxu0 %v135
  %v847 = vpop.f32.mrb[0].mxu0
  %v848 = vadd.f32 %v751, %v847
  %v849 = vpop.f32.mrb[0].mxu0
  %v850 = vpop.f32.mrb[0].mxu0
  %v851 = vadd.f32 %v754, %v850
  %v852 = vpop.f32.mrb[0].mxu0
  %853 = vmatprep.mubr.bf16.mxu0 %v143
  %854 = vmatmul.mubr.bf16.gmra.mrb[0].mxu0 %v142
  %v855 = vpop.f32.mrb[0].mxu0
  %v856 = vadd.f32 %v759, %v855
  %v857 = vpop.f32.mrb[0].mxu0
  %v858 = vpop.f32.mrb[0].mxu0
  %v859 = vadd.f32 %v762, %v858
  %v860 = vpop.f32.mrb[0].mxu0
  %861 = vmatprep.mubr.bf16.mxu0 %v150
  %862 = vmatmul.mubr.bf16.gmra.mrb[0].mxu0 %v149
  %v863 = vpop.f32.mrb[0].mxu0
  %v864 = vadd.f32 %v767, %v863
  %v865 = vpop.f32.mrb[0].mxu0
  %v866 = vpop.f32.mrb[0].mxu0
  %v867 = vadd.f32 %v770, %v866
  %v868 = vpop.f32.mrb[0].mxu0
  %869 = vmatprep.mubr.bf16.mxu0 %v157
  %870 = vmatmul.mubr.bf16.gmra.mrb[0].mxu0 %v156
  %v871 = vpop.f32.mrb[0].mxu0
  %v872 = vadd.f32 %v775, %v871
  %v873 = vpop.f32.mrb[0].mxu0
  %v874 = vpop.f32.mrb[0].mxu0
  %v875 = vadd.f32 %v778, %v874
  %v876 = vpop.f32.mrb[0].mxu0
  %877 = vmatprep.mubr.bf16.mxu0 %v164
  %878 = vmatmul.mubr.bf16.gmra.mrb[0].mxu0 %v163
  %v879 = vpop.f32.mrb[0].mxu0
  %v880 = vadd.f32 %v783, %v879
  %v881 = vpop.f32.mrb[0].mxu0
  %v882 = vpop.f32.mrb[0].mxu0
  %v883 = vadd.f32 %v786, %v882
  %v884 = vpop.f32.mrb[0].mxu0
  %885 = vmatprep.mubr.bf16.mxu0 %v171
  %886 = vmatmul.mubr.bf16.gmra.mrb[0].mxu0 %v170
  %v887 = vpop.f32.mrb[0].mxu0
  %v888 = vadd.f32 %v791, %v887
  %v889 = vpop.f32.mrb[0].mxu0
  %v890 = vpop.f32.mrb[0].mxu0
  %v891 = vadd.f32 %v794, %v890
  %v892 = vpop.f32.mrb[0].mxu0
  %893 = vmatprep.mubr.bf16.mxu0 %v178
  %894 = vmatmul.mubr.bf16.gmra.mrb[0].mxu0 %v177
  %v895 = vpop.f32.mrb[0].mxu0
  %v896 = vadd.f32 %v799, %v895
  %v897 = vpop.f32.mrb[0].mxu0
  %v898 = vpop.f32.mrb[0].mxu0
  %v899 = vadd.f32 %v802, %v898
  %v900 = vpop.f32.mrb[0].mxu0
  %901 = vmatprep.mubr.bf16.mxu0 %v185
  %902 = vmatmul.mubr.bf16.gmra.mrb[0].mxu0 %v184
  %v903 = vpop.f32.mrb[0].mxu0
  %v904 = vadd.f32 %v807, %v903
  %v905 = vpop.f32.mrb[0].mxu0
  %v906 = vpop.f32.mrb[0].mxu0
  %v907 = vadd.f32 %v810, %v906
  %v908 = vpop.f32.mrb[0].mxu0
  %909 = vdwg.mxu0
  %910 = vmatprep.subr.bf16.mxu0 0
  %911 = vmatpush1.bf16.msra.mxu0 %v542
  %912 = vmatprep.subr.bf16.mxu0 0
  %913 = vmatpush1.bf16.msra.mxu0 %v543
  %914 = vmatprep.subr.bf16.mxu0 0
  %915 = vmatpush1.bf16.msra.mxu0 0
  %916 = vmatprep.subr.bf16.mxu0 0
  %917 = vmatpush1.bf16.msra.mxu0 0
  %918 = vmatprep.subr.bf16.mxu0 0
  %919 = vmatpush1.bf16.msra.mxu0 0
  %920 = vmatprep.subr.bf16.mxu0 0
  %921 = vmatpush1.bf16.msra.mxu0 0
  %922 = vmatprep.subr.bf16.mxu0 0
  %923 = vmatpush1.bf16.msra.mxu0 0
  %924 = vmatprep.subr.bf16.mxu0 0
  %925 = vmatpush1.bf16.msra.mxu0 0
  %926 = vmatprep.subr.bf16.mxu0 0
  %927 = vmatpush1.bf16.msra.mxu0 0
  %928 = vmatprep.subr.bf16.mxu0 0
  %929 = vmatpush1.bf16.msra.mxu0 0
  %930 = vmatprep.subr.bf16.mxu0 0
  %931 = vmatpush1.bf16.msra.mxu0 0
  %932 = vmatprep.subr.bf16.mxu0 0
  %933 = vmatpush1.bf16.msra.mxu0 0
  %934 = vmatprep.subr.bf16.mxu0 0
  %935 = vmatpush1.bf16.msra.mxu0 0
  %936 = vmatprep.subr.bf16.mxu0 0
  %937 = vmatpush1.bf16.msra.mxu0 0
  %938 = vmatprep.subr.bf16.mxu0 0
  %939 = vmatpush1.bf16.msra.mxu0 0
  %940 = vmatprep.subr.bf16.mxu0 0
  %941 = vmatpush1.bf16.msra.mxu0 0
  %942 = vmatprep.mubr.bf16.mxu0 0
  %943 = vmatmul.mubr.bf16.gmra.mrb[0].mxu0 %v596
  %v944 = vpop.f32.mrb[0].mxu0
  %v945 = vadd.f32 %v848, %v944
  %v946 = vpop.f32.mrb[0].mxu0
  %v947 = vpop.f32.mrb[0].mxu0
  %v948 = vadd.f32 %v851, %v947
  %v949 = vpop.f32.mrb[0].mxu0
  %950 = vmatprep.mubr.bf16.mxu0 0
  %951 = vmatmul.mubr.bf16.gmra.mrb[0].mxu0 %v599
  %v952 = vpop.f32.mrb[0].mxu0
  %v953 = vadd.f32 %v856, %v952
  %v954 = vpop.f32.mrb[0].mxu0
  %v955 = vpop.f32.mrb[0].mxu0
  %v956 = vadd.f32 %v859, %v955
  %v957 = vpop.f32.mrb[0].mxu0
  %958 = vmatprep.mubr.bf16.mxu0 0
  %959 = vmatmul.mubr.bf16.gmra.mrb[0].mxu0 %v602
  %v960 = vpop.f32.mrb[0].mxu0
  %v961 = vadd.f32 %v864, %v960
  %v962 = vpop.f32.mrb[0].mxu0
  %v963 = vpop.f32.mrb[0].mxu0
  %v964 = vadd.f32 %v867, %v963
  %v965 = vpop.f32.mrb[0].mxu0
  %966 = vmatprep.mubr.bf16.mxu0 0
  %967 = vmatmul.mubr.bf16.gmra.mrb[0].mxu0 %v605
  %v968 = vpop.f32.mrb[0].mxu0
  %v969 = vadd.f32 %v872, %v968
  %v970 = vpop.f32.mrb[0].mxu0
  %v971 = vpop.f32.mrb[0].mxu0
  %v972 = vadd.f32 %v875, %v971
  %v973 = vpop.f32.mrb[0].mxu0
  %974 = vmatprep.mubr.bf16.mxu0 0
  %975 = vmatmul.mubr.bf16.gmra.mrb[0].mxu0 %v608
  %v976 = vpop.f32.mrb[0].mxu0
  %v977 = vadd.f32 %v880, %v976
  %v978 = vpop.f32.mrb[0].mxu0
  %v979 = vpop.f32.mrb[0].mxu0
  %v980 = vadd.f32 %v883, %v979
  %v981 = vpop.f32.mrb[0].mxu0
  %982 = vmatprep.mubr.bf16.mxu0 0
  %983 = vmatmul.mubr.bf16.gmra.mrb[0].mxu0 %v611
  %v984 = vpop.f32.mrb[0].mxu0
  %v985 = vadd.f32 %v888, %v984
  %v986 = vpop.f32.mrb[0].mxu0
  %v987 = vpop.f32.mrb[0].mxu0
  %v988 = vadd.f32 %v891, %v987
  %v989 = vpop.f32.mrb[0].mxu0
  %990 = vmatprep.mubr.bf16.mxu0 0
  %991 = vmatmul.mubr.bf16.gmra.mrb[0].mxu0 %v614
  %v992 = vpop.f32.mrb[0].mxu0
  %v993 = vadd.f32 %v896, %v992
  %v994 = vpop.f32.mrb[0].mxu0
  %v995 = vpop.f32.mrb[0].mxu0
  %v996 = vadd.f32 %v899, %v995
  %v997 = vpop.f32.mrb[0].mxu0
  %998 = vmatprep.mubr.bf16.mxu0 0
  %999 = vmatmul.mubr.bf16.gmra.mrb[0].mxu0 %v617
  %v1000 = vpop.f32.mrb[0].mxu0
  %v1001 = vadd.f32 %v904, %v1000
  %v1002 = vpop.f32.mrb[0].mxu0
  %v1003 = vpop.f32.mrb[0].mxu0
  %v1004 = vadd.f32 %v907, %v1003
  %v1005 = vpop.f32.mrb[0].mxu0
  %1006 = vdwg.mxu0
  %s1007 = sld [smem:[#allocation2]]
  %vm1008 = vcmp.ge.f32.partialorder %v945, 0.0
  %vm1009 = vcmp.ge.f32.partialorder %v948, 0.0
  %vm1010 = vcmp.ge.f32.partialorder %v953, 0.0
  %vm1011 = vcmp.ge.f32.partialorder %v956, 0.0
  %vm1012 = vcmp.ge.f32.partialorder %v961, 0.0
  %vm1013 = vcmp.ge.f32.partialorder %v964, 0.0
  %vm1014 = vcmp.ge.f32.partialorder %v969, 0.0
  %vm1015 = vcmp.ge.f32.partialorder %v972, 0.0
  %vm1016 = vcmp.ge.f32.partialorder %v977, 0.0
  %vm1017 = vcmp.ge.f32.partialorder %v980, 0.0
  %vm1018 = vcmp.ge.f32.partialorder %v985, 0.0
  %vm1019 = vcmp.ge.f32.partialorder %v988, 0.0
  %vm1020 = vcmp.ge.f32.partialorder %v993, 0.0
  %vm1021 = vcmp.ge.f32.partialorder %v996, 0.0
  %vm1022 = vcmp.ge.f32.partialorder %v1001, 0.0
  %vm1023 = vcmp.ge.f32.partialorder %v1004, 0.0
  %v1024 = vstv %s1007
  %v1025 = vmul.f32 %v1024, %v945
  %v1026 = vmul.f32 %v1024, %v948
  %v1027 = vmul.f32 %v1024, %v953
  %v1028 = vmul.f32 %v1024, %v956
  %v1029 = vmul.f32 %v1024, %v961
  %v1030 = vmul.f32 %v1024, %v964
  %v1031 = vmul.f32 %v1024, %v969
  %v1032 = vmul.f32 %v1024, %v972
  %v1033 = vmul.f32 %v1024, %v977
  %v1034 = vmul.f32 %v1024, %v980
  %v1035 = vmul.f32 %v1024, %v985
  %v1036 = vmul.f32 %v1024, %v988
  %v1037 = vmul.f32 %v1024, %v993
  %v1038 = vmul.f32 %v1024, %v996
  %v1039 = vmul.f32 %v1024, %v1001
  %v1040 = vmul.f32 %v1024, %v1004
  %v1041 = vsel %vm1008, %v945, %v1025
  %v1042 = vsel %vm1009, %v948, %v1026
  %v1043 = vsel %vm1010, %v953, %v1027
  %v1044 = vsel %vm1011, %v956, %v1028
  %v1045 = vsel %vm1012, %v961, %v1029
  %v1046 = vsel %vm1013, %v964, %v1030
  %v1047 = vsel %vm1014, %v969, %v1031
  %v1048 = vsel %vm1015, %v972, %v1032
  %v1049 = vsel %vm1016, %v977, %v1033
  %v1050 = vsel %vm1017, %v980, %v1034
  %v1051 = vsel %vm1018, %v985, %v1035
  %v1052 = vsel %vm1019, %v988, %v1036
  %v1053 = vsel %vm1020, %v993, %v1037
  %v1054 = vsel %vm1021, %v996, %v1038
  %v1055 = vsel %vm1022, %v1001, %v1039
  %v1056 = vsel %vm1023, %v1004, %v1040
  %vm1057 = vcmask 523264
  %1058 = vst.msk [vmem:[%s4] sm:$0xff] %vm1057, %v1041
  %1059 = vst.msk [vmem:[%s4 + $0x8] sm:$0xff] %vm1057, %v1042
  %1060 = vst.msk [vmem:[%s4 + $0x10] sm:$0xff] %vm1057, %v1043
  %1061 = vst.msk [vmem:[%s4 + $0x18] sm:$0xff] %vm1057, %v1044
  %1062 = vst.msk [vmem:[%s4 + $0x20] sm:$0xff] %vm1057, %v1045
  %1063 = vst.msk [vmem:[%s4 + $0x28] sm:$0xff] %vm1057, %v1046
  %1064 = vst.msk [vmem:[%s4 + $0x30] sm:$0xff] %vm1057, %v1047
  %1065 = vst.msk [vmem:[%s4 + $0x38] sm:$0xff] %vm1057, %v1048
  %1066 = vst.msk [vmem:[%s4 + $0x40] sm:$0xff] %vm1057, %v1049
  %1067 = vst.msk [vmem:[%s4 + $0x48] sm:$0xff] %vm1057, %v1050
  %1068 = vst.msk [vmem:[%s4 + $0x50] sm:$0xff] %vm1057, %v1051
  %1069 = vst.msk [vmem:[%s4 + $0x58] sm:$0xff] %vm1057, %v1052
  %1070 = vst.msk [vmem:[%s4 + $0x60] sm:$0xff] %vm1057, %v1053
  %1071 = vst.msk [vmem:[%s4 + $0x68] sm:$0xff] %vm1057, %v1054
  %1072 = vst.msk [vmem:[%s4 + $0x70] sm:$0xff] %vm1057, %v1055
  %1073 = vst.msk [vmem:[%s4 + $0x78] sm:$0xff] %vm1057, %v1056
  // Predicated region
  $region18: #{embedding_net_l2_forward.4} parent=0 // pred_check
    _
  $region19: #{embedding_net_l2_forward.4} parent=0 // pred_check_branch
    %1075 = sbr.rel (0) target = $region21
  $region20: #{embedding_net_l2_forward.4} parent=0 // pred_region
    _
  $region21: #{embedding_net_l2_forward.4} parent=0 // pred_fallthru
    _
  // Predicated region
  $region22: #{embedding_net_l2_forward.4} parent=0 // pred_check
    _
  $region23: #{embedding_net_l2_forward.4} parent=0 // pred_check_branch
    %1077 = sbr.rel (0) target = $region25
  $region24: #{embedding_net_l2_forward.4} parent=0 // pred_region
    _
  $region25: #{embedding_net_l2_forward.4} parent=0 // pred_fallthru
    _

// kernel: embedding_net_l2_forward.5
$region0: #{embedding_net_l2_forward.5}
  #allocation0 [shape = 'u32[]', space=smem, size = 0x4, offset = 0x4, fixed_abs, tag = 'smem constant byte address 0x4 - core index']
  #allocation1 [shape = 'u32[144,128]{1,0:T(1,128)}', space=vmem, size = 0x12000, scoped, tag = 'internal scratch']
  #allocation2 [shape = 'f32[1]{0:T(128)S(6)}', space=smem, size = 0x200, scoped, tag = 'scoped memory for embedding_net_l2_forward.5']
  #allocation3 [shape = 'f32[1]{0:T(128)S(6)}', space=smem, size = 0x200, scoped, tag = 'scoped memory for embedding_net_l2_forward.5']
  %s0 = inlined_call_operand.vmem [shape: f32[8,1024], index: 0, kind: input, shape index: {}]
  %s1 = inlined_call_operand.vmem [shape: bf16[1024,256], index: 1, kind: input, shape index: {}]
  %s2 = inlined_call_operand.vmem [shape: f32[1,256], index: 2, kind: input, shape index: {}]
  %s3 = inlined_call_operand.<no memory space> [shape: f32[1], index: 3, kind: input, shape index: {}]
  %s4 = inlined_call_operand.vmem [shape: bf16[256,256], index: 4, kind: input, shape index: {}]
  %s5 = inlined_call_operand.vmem [shape: f32[1,256], index: 5, kind: input, shape index: {}]
  %s6 = inlined_call_operand.<no memory space> [shape: f32[1], index: 6, kind: input, shape index: {}]
  %s7 = inlined_call_operand.vmem [shape: bf16[256,2], index: 7, kind: input, shape index: {}]
  %s8 = inlined_call_operand.vmem [shape: f32[1,2], index: 8, kind: input, shape index: {}]
  %s9 = inlined_call_operand.vmem [shape: f32[8,2], index: 9, kind: output, shape index: {}]
  %s10 = sld [smem:[#allocation0]]
  $region46: #{embedding_net_l2_forward.5} parent=0
    _
  %s12 = ssub.s32 1, %s10
  %s13 = scalar_select 0, %s12, %s10
  %14 = sst [smem:[#allocation2]] %s3
  %15 = sst [smem:[#allocation3]] %s6
  // Predicated region
  $region2: #{embedding_net_l2_forward.5} parent=0 // pred_check
    _
  $region3: #{embedding_net_l2_forward.5} parent=0 // pred_check_branch
    %17 = sbr.rel (0) target = $region5
  $region4: #{embedding_net_l2_forward.5} parent=0 // pred_region
    _
  $region5: #{embedding_net_l2_forward.5} parent=0 // pred_fallthru
    _
  // Predicated region
  $region6: #{embedding_net_l2_forward.5} parent=0 // pred_check
    _
  $region7: #{embedding_net_l2_forward.5} parent=0 // pred_check_branch
    %19 = sbr.rel (0) target = $region9
  $region8: #{embedding_net_l2_forward.5} parent=0 // pred_region
    _
  $region9: #{embedding_net_l2_forward.5} parent=0 // pred_fallthru
    _
  // Predicated region
  $region10: #{embedding_net_l2_forward.5} parent=0 // pred_check
    _
  $region11: #{embedding_net_l2_forward.5} parent=0 // pred_check_branch
    %21 = sbr.rel (0) target = $region13
  $region12: #{embedding_net_l2_forward.5} parent=0 // pred_region
    _
  $region13: #{embedding_net_l2_forward.5} parent=0 // pred_fallthru
    _
  // Predicated region
  $region14: #{embedding_net_l2_forward.5} parent=0 // pred_check
    _
  $region15: #{embedding_net_l2_forward.5} parent=0 // pred_check_branch
    %23 = sbr.rel (0) target = $region17
  $region16: #{embedding_net_l2_forward.5} parent=0 // pred_region
    _
  $region17: #{embedding_net_l2_forward.5} parent=0 // pred_fallthru
    _
  // Predicated region
  $region18: #{embedding_net_l2_forward.5} parent=0 // pred_check
    _
  $region19: #{embedding_net_l2_forward.5} parent=0 // pred_check_branch
    %25 = sbr.rel (0) target = $region21
  $region20: #{embedding_net_l2_forward.5} parent=0 // pred_region
    _
  $region21: #{embedding_net_l2_forward.5} parent=0 // pred_fallthru
    _
  // Predicated region
  $region22: #{embedding_net_l2_forward.5} parent=0 // pred_check
    _
  $region23: #{embedding_net_l2_forward.5} parent=0 // pred_check_branch
    %27 = sbr.rel (0) target = $region25
  $region24: #{embedding_net_l2_forward.5} parent=0 // pred_region
    _
  $region25: #{embedding_net_l2_forward.5} parent=0 // pred_fallthru
    _
  // Predicated region
  $region26: #{embedding_net_l2_forward.5} parent=0 // pred_check
    _
  $region27: #{embedding_net_l2_forward.5} parent=0 // pred_check_branch
    %29 = sbr.rel (0) target = $region29
  $region28: #{embedding_net_l2_forward.5} parent=0 // pred_region
    _
  $region29: #{embedding_net_l2_forward.5} parent=0 // pred_fallthru
    _
  // Predicated region
  $region30: #{embedding_net_l2_forward.5} parent=0 // pred_check
    _
  $region31: #{embedding_net_l2_forward.5} parent=0 // pred_check_branch
    %31 = sbr.rel (0) target = $region33
  $region32: #{embedding_net_l2_forward.5} parent=0 // pred_region
    _
  $region33: #{embedding_net_l2_forward.5} parent=0 // pred_fallthru
    _
  // Predicated region
  $region34: #{embedding_net_l2_forward.5} parent=0 // pred_check
    _
  $region35: #{embedding_net_l2_forward.5} parent=0 // pred_check_branch
    %33 = sbr.rel (0) target = $region37
  $region36: #{embedding_net_l2_forward.5} parent=0 // pred_region
    _
  $region37: #{embedding_net_l2_forward.5} parent=0 // pred_fallthru
    _
  %v35 = vld [vmem:[%s0] sm:$0xff]
  %v36 = vld [vmem:[%s0 + $0x8] sm:$0xff]
  %v37 = vld [vmem:[%s0 + $0x10] sm:$0xff]
  %v38 = vld [vmem:[%s0 + $0x18] sm:$0xff]
  %v39 = vld [vmem:[%s0 + $0x20] sm:$0xff]
  %v40 = vld [vmem:[%s0 + $0x28] sm:$0xff]
  %v41 = vld [vmem:[%s0 + $0x30] sm:$0xff]
  %v42 = vld [vmem:[%s0 + $0x38] sm:$0xff]
  %v43 = vpack.c.bf16 %v35, %v35
  %v44 = vpack.c.bf16 %v36, %v36
  %v45 = vpack.c.bf16 %v37, %v37
  %v46 = vpack.c.bf16 %v38, %v38
  %v47 = vpack.c.bf16 %v39, %v39
  %v48 = vpack.c.bf16 %v40, %v40
  %v49 = vpack.c.bf16 %v41, %v41
  %v50 = vpack.c.bf16 %v42, %v42
  %v51 = vld [vmem:[%s1] sm:$0xff]
  %v52 = vld [vmem:[%s1 + $0x8] sm:$0xff]
  %v53 = vld [vmem:[%s1 + $0x10] sm:$0xff]
  %v54 = vld [vmem:[%s1 + $0x18] sm:$0xff]
  %v55 = vld [vmem:[%s1 + $0x20] sm:$0xff]
  %v56 = vld [vmem:[%s1 + $0x28] sm:$0xff]
  %v57 = vld [vmem:[%s1 + $0x30] sm:$0xff]
  %v58 = vld [vmem:[%s1 + $0x38] sm:$0xff]
  %v59 = vld [vmem:[%s1 + $0x40] sm:$0xff]
  %v60 = vld [vmem:[%s1 + $0x48] sm:$0xff]
  %v61 = vld [vmem:[%s1 + $0x50] sm:$0xff]
  %v62 = vld [vmem:[%s1 + $0x58] sm:$0xff]
  %v63 = vld [vmem:[%s1 + $0x60] sm:$0xff]
  %v64 = vld [vmem:[%s1 + $0x68] sm:$0xff]
  %v65 = vld [vmem:[%s1 + $0x70] sm:$0xff]
  %v66 = vld [vmem:[%s1 + $0x78] sm:$0xff]
  %v67 = vld [vmem:[%s1 + $0x80] sm:$0xff]
  %v68 = vld [vmem:[%s1 + $0x88] sm:$0xff]
  %v69 = vld [vmem:[%s1 + $0x90] sm:$0xff]
  %v70 = vld [vmem:[%s1 + $0x98] sm:$0xff]
  %v71 = vld [vmem:[%s1 + $0xa0] sm:$0xff]
  %v72 = vld [vmem:[%s1 + $0xa8] sm:$0xff]
  %v73 = vld [vmem:[%s1 + $0xb0] sm:$0xff]
  %v74 = vld [vmem:[%s1 + $0xb8] sm:$0xff]
  %v75 = vld [vmem:[%s1 + $0xc0] sm:$0xff]
  %v76 = vld [vmem:[%s1 + $0xc8] sm:$0xff]
  %v77 = vld [vmem:[%s1 + $0xd0] sm:$0xff]
  %v78 = vld [vmem:[%s1 + $0xd8] sm:$0xff]
  %v79 = vld [vmem:[%s1 + $0xe0] sm:$0xff]
  %v80 = vld [vmem:[%s1 + $0xe8] sm:$0xff]
  %v81 = vld [vmem:[%s1 + $0xf0] sm:$0xff]
  %v82 = vld [vmem:[%s1 + $0xf8] sm:$0xff]
  %v83 = vld [vmem:[%s1 + $0x100] sm:$0xff]
  %v84 = vld [vmem:[%s1 + $0x108] sm:$0xff]
  %v85 = vld [vmem:[%s1 + $0x110] sm:$0xff]
  %v86 = vld [vmem:[%s1 + $0x118] sm:$0xff]
  %v87 = vld [vmem:[%s1 + $0x120] sm:$0xff]
  %v88 = vld [vmem:[%s1 + $0x128] sm:$0xff]
  %v89 = vld [vmem:[%s1 + $0x130] sm:$0xff]
  %v90 = vld [vmem:[%s1 + $0x138] sm:$0xff]
  %v91 = vld [vmem:[%s1 + $0x140] sm:$0xff]
  %v92 = vld [vmem:[%s1 + $0x148] sm:$0xff]
  %v93 = vld [vmem:[%s1 + $0x150] sm:$0xff]
  %v94 = vld [vmem:[%s1 + $0x158] sm:$0xff]
  %v95 = vld [vmem:[%s1 + $0x160] sm:$0xff]
  %v96 = vld [vmem:[%s1 + $0x168] sm:$0xff]
  %v97 = vld [vmem:[%s1 + $0x170] sm:$0xff]
  %v98 = vld [vmem:[%s1 + $0x178] sm:$0xff]
  %v99 = vld [vmem:[%s1 + $0x180] sm:$0xff]
  %v100 = vld [vmem:[%s1 + $0x188] sm:$0xff]
  %v101 = vld [vmem:[%s1 + $0x190] sm:$0xff]
  %v102 = vld [vmem:[%s1 + $0x198] sm:$0xff]
  %v103 = vld [vmem:[%s1 + $0x1a0] sm:$0xff]
  %v104 = vld [vmem:[%s1 + $0x1a8] sm:$0xff]
  %v105 = vld [vmem:[%s1 + $0x1b0] sm:$0xff]
  %v106 = vld [vmem:[%s1 + $0x1b8] sm:$0xff]
  %v107 = vld [vmem:[%s1 + $0x1c0] sm:$0xff]
  %v108 = vld [vmem:[%s1 + $0x1c8] sm:$0xff]
  %v109 = vld [vmem:[%s1 + $0x1d0] sm:$0xff]
  %v110 = vld [vmem:[%s1 + $0x1d8] sm:$0xff]
  %v111 = vld [vmem:[%s1 + $0x1e0] sm:$0xff]
  %v112 = vld [vmem:[%s1 + $0x1e8] sm:$0xff]
  %v113 = vld [vmem:[%s1 + $0x1f0] sm:$0xff]
  %v114 = vld [vmem:[%s1 + $0x1f8] sm:$0xff]
  %v115 = vld [vmem:[%s1 + $0x200] sm:$0xff]
  %v116 = vld [vmem:[%s1 + $0x208] sm:$0xff]
  %v117 = vld [vmem:[%s1 + $0x210] sm:$0xff]
  %v118 = vld [vmem:[%s1 + $0x218] sm:$0xff]
  %v119 = vld [vmem:[%s1 + $0x220] sm:$0xff]
  %v120 = vld [vmem:[%s1 + $0x228] sm:$0xff]
  %v121 = vld [vmem:[%s1 + $0x230] sm:$0xff]
  %v122 = vld [vmem:[%s1 + $0x238] sm:$0xff]
  %v123 = vld [vmem:[%s1 + $0x240] sm:$0xff]
  %v124 = vld [vmem:[%s1 + $0x248] sm:$0xff]
  %v125 = vld [vmem:[%s1 + $0x250] sm:$0xff]
  %v126 = vld [vmem:[%s1 + $0x258] sm:$0xff]
  %v127 = vld [vmem:[%s1 + $0x260] sm:$0xff]
  %v128 = vld [vmem:[%s1 + $0x268] sm:$0xff]
  %v129 = vld [vmem:[%s1 + $0x270] sm:$0xff]
  %v130 = vld [vmem:[%s1 + $0x278] sm:$0xff]
  %v131 = vld [vmem:[%s1 + $0x280] sm:$0xff]
  %v132 = vld [vmem:[%s1 + $0x288] sm:$0xff]
  %v133 = vld [vmem:[%s1 + $0x290] sm:$0xff]
  %v134 = vld [vmem:[%s1 + $0x298] sm:$0xff]
  %v135 = vld [vmem:[%s1 + $0x2a0] sm:$0xff]
  %v136 = vld [vmem:[%s1 + $0x2a8] sm:$0xff]
  %v137 = vld [vmem:[%s1 + $0x2b0] sm:$0xff]
  %v138 = vld [vmem:[%s1 + $0x2b8] sm:$0xff]
  %v139 = vld [vmem:[%s1 + $0x2c0] sm:$0xff]
  %v140 = vld [vmem:[%s1 + $0x2c8] sm:$0xff]
  %v141 = vld [vmem:[%s1 + $0x2d0] sm:$0xff]
  %v142 = vld [vmem:[%s1 + $0x2d8] sm:$0xff]
  %v143 = vld [vmem:[%s1 + $0x2e0] sm:$0xff]
  %v144 = vld [vmem:[%s1 + $0x2e8] sm:$0xff]
  %v145 = vld [vmem:[%s1 + $0x2f0] sm:$0xff]
  %v146 = vld [vmem:[%s1 + $0x2f8] sm:$0xff]
  %v147 = vld [vmem:[%s1 + $0x300] sm:$0xff]
  %v148 = vld [vmem:[%s1 + $0x308] sm:$0xff]
  %v149 = vld [vmem:[%s1 + $0x310] sm:$0xff]
  %v150 = vld [vmem:[%s1 + $0x318] sm:$0xff]
  %v151 = vld [vmem:[%s1 + $0x320] sm:$0xff]
  %v152 = vld [vmem:[%s1 + $0x328] sm:$0xff]
  %v153 = vld [vmem:[%s1 + $0x330] sm:$0xff]
  %v154 = vld [vmem:[%s1 + $0x338] sm:$0xff]
  %v155 = vld [vmem:[%s1 + $0x340] sm:$0xff]
  %v156 = vld [vmem:[%s1 + $0x348] sm:$0xff]
  %v157 = vld [vmem:[%s1 + $0x350] sm:$0xff]
  %v158 = vld [vmem:[%s1 + $0x358] sm:$0xff]
  %v159 = vld [vmem:[%s1 + $0x360] sm:$0xff]
  %v160 = vld [vmem:[%s1 + $0x368] sm:$0xff]
  %v161 = vld [vmem:[%s1 + $0x370] sm:$0xff]
  %v162 = vld [vmem:[%s1 + $0x378] sm:$0xff]
  %v163 = vld [vmem:[%s1 + $0x380] sm:$0xff]
  %v164 = vld [vmem:[%s1 + $0x388] sm:$0xff]
  %v165 = vld [vmem:[%s1 + $0x390] sm:$0xff]
  %v166 = vld [vmem:[%s1 + $0x398] sm:$0xff]
  %v167 = vld [vmem:[%s1 + $0x3a0] sm:$0xff]
  %v168 = vld [vmem:[%s1 + $0x3a8] sm:$0xff]
  %v169 = vld [vmem:[%s1 + $0x3b0] sm:$0xff]
  %v170 = vld [vmem:[%s1 + $0x3b8] sm:$0xff]
  %v171 = vld [vmem:[%s1 + $0x3c0] sm:$0xff]
  %v172 = vld [vmem:[%s1 + $0x3c8] sm:$0xff]
  %v173 = vld [vmem:[%s1 + $0x3d0] sm:$0xff]
  %v174 = vld [vmem:[%s1 + $0x3d8] sm:$0xff]
  %v175 = vld [vmem:[%s1 + $0x3e0] sm:$0xff]
  %v176 = vld [vmem:[%s1 + $0x3e8] sm:$0xff]
  %v177 = vld [vmem:[%s1 + $0x3f0] sm:$0xff]
  %v178 = vld [vmem:[%s1 + $0x3f8] sm:$0xff]
  %v179 = vld [vmem:[%s2] sm:$0x3]
  %v181 = vlaneseq
  %v182 = vshrl.u32 %v181, 7
  %v183 = vsub.s32 0, %v182
  %v184 = vrot.slane %v179, %v183
  %v185 = vlaneseq
  %v186 = vshrl.u32 %v185, 7
  %v187 = vsub.s32 1, %v186
  %v188 = vrot.slane %v179, %v187
  %v319 = vunpack.c.l.b16 %v51
  %v320 = vunpack.c.h.b16 %v51
  %v321 = vunpack.c.l.b16 %v52
  %v322 = vunpack.c.h.b16 %v52
  %v323 = vunpack.c.l.b16 %v53
  %v324 = vunpack.c.h.b16 %v53
  %v325 = vunpack.c.l.b16 %v54
  %v326 = vunpack.c.h.b16 %v54
  %v327 = vunpack.c.l.b16 %v55
  %v328 = vunpack.c.h.b16 %v55
  %v329 = vunpack.c.l.b16 %v56
  %v330 = vunpack.c.h.b16 %v56
  %v331 = vunpack.c.l.b16 %v57
  %v332 = vunpack.c.h.b16 %v57
  %v333 = vunpack.c.l.b16 %v58
  %v334 = vunpack.c.h.b16 %v58
  %v335 = vunpack.c.l.b16 %v59
  %v336 = vunpack.c.h.b16 %v59
  %v337 = vunpack.c.l.b16 %v60
  %v338 = vunpack.c.h.b16 %v60
  %v339 = vunpack.c.l.b16 %v61
  %v340 = vunpack.c.h.b16 %v61
  %v341 = vunpack.c.l.b16 %v62
  %v342 = vunpack.c.h.b16 %v62
  %v343 = vunpack.c.l.b16 %v63
  %v344 = vunpack.c.h.b16 %v63
  %v345 = vunpack.c.l.b16 %v64
  %v346 = vunpack.c.h.b16 %v64
  %v347 = vunpack.c.l.b16 %v65
  %v348 = vunpack.c.h.b16 %v65
  %v349 = vunpack.c.l.b16 %v66
  %v350 = vunpack.c.h.b16 %v66
  %v351 = vunpack.c.l.b16 %v67
  %v352 = vunpack.c.h.b16 %v67
  %v353 = vunpack.c.l.b16 %v68
  %v354 = vunpack.c.h.b16 %v68
  %v355 = vunpack.c.l.b16 %v69
  %v356 = vunpack.c.h.b16 %v69
  %v357 = vunpack.c.l.b16 %v70
  %v358 = vunpack.c.h.b16 %v70
  %v359 = vunpack.c.l.b16 %v71
  %v360 = vunpack.c.h.b16 %v71
  %v361 = vunpack.c.l.b16 %v72
  %v362 = vunpack.c.h.b16 %v72
  %v363 = vunpack.c.l.b16 %v73
  %v364 = vunpack.c.h.b16 %v73
  %v365 = vunpack.c.l.b16 %v74
  %v366 = vunpack.c.h.b16 %v74
  %v367 = vunpack.c.l.b16 %v75
  %v368 = vunpack.c.h.b16 %v75
  %v369 = vunpack.c.l.b16 %v76
  %v370 = vunpack.c.h.b16 %v76
  %v371 = vunpack.c.l.b16 %v77
  %v372 = vunpack.c.h.b16 %v77
  %v373 = vunpack.c.l.b16 %v78
  %v374 = vunpack.c.h.b16 %v78
  %v375 = vunpack.c.l.b16 %v79
  %v376 = vunpack.c.h.b16 %v79
  %v377 = vunpack.c.l.b16 %v80
  %v378 = vunpack.c.h.b16 %v80
  %v379 = vunpack.c.l.b16 %v81
  %v380 = vunpack.c.h.b16 %v81
  %v381 = vunpack.c.l.b16 %v82
  %v382 = vunpack.c.h.b16 %v82
  %v383 = vunpack.c.l.b16 %v83
  %v384 = vunpack.c.h.b16 %v83
  %v385 = vunpack.c.l.b16 %v84
  %v386 = vunpack.c.h.b16 %v84
  %v387 = vunpack.c.l.b16 %v85
  %v388 = vunpack.c.h.b16 %v85
  %v389 = vunpack.c.l.b16 %v86
  %v390 = vunpack.c.h.b16 %v86
  %v391 = vunpack.c.l.b16 %v87
  %v392 = vunpack.c.h.b16 %v87
  %v393 = vunpack.c.l.b16 %v88
  %v394 = vunpack.c.h.b16 %v88
  %v395 = vunpack.c.l.b16 %v89
  %v396 = vunpack.c.h.b16 %v89
  %v397 = vunpack.c.l.b16 %v90
  %v398 = vunpack.c.h.b16 %v90
  %v399 = vunpack.c.l.b16 %v91
  %v400 = vunpack.c.h.b16 %v91
  %v401 = vunpack.c.l.b16 %v92
  %v402 = vunpack.c.h.b16 %v92
  %v403 = vunpack.c.l.b16 %v93
  %v404 = vunpack.c.h.b16 %v93
  %v405 = vunpack.c.l.b16 %v94
  %v406 = vunpack.c.h.b16 %v94
  %v407 = vunpack.c.l.b16 %v95
  %v408 = vunpack.c.h.b16 %v95
  %v409 = vunpack.c.l.b16 %v96
  %v410 = vunpack.c.h.b16 %v96
  %v411 = vunpack.c.l.b16 %v97
  %v412 = vunpack.c.h.b16 %v97
  %v413 = vunpack.c.l.b16 %v98
  %v414 = vunpack.c.h.b16 %v98
  %v415 = vunpack.c.l.b16 %v99
  %v416 = vunpack.c.h.b16 %v99
  %v417 = vunpack.c.l.b16 %v100
  %v418 = vunpack.c.h.b16 %v100
  %v419 = vunpack.c.l.b16 %v101
  %v420 = vunpack.c.h.b16 %v101
  %v421 = vunpack.c.l.b16 %v102
  %v422 = vunpack.c.h.b16 %v102
  %v423 = vunpack.c.l.b16 %v103
  %v424 = vunpack.c.h.b16 %v103
  %v425 = vunpack.c.l.b16 %v104
  %v426 = vunpack.c.h.b16 %v104
  %v427 = vunpack.c.l.b16 %v105
  %v428 = vunpack.c.h.b16 %v105
  %v429 = vunpack.c.l.b16 %v106
  %v430 = vunpack.c.h.b16 %v106
  %v431 = vunpack.c.l.b16 %v107
  %v432 = vunpack.c.h.b16 %v107
  %v433 = vunpack.c.l.b16 %v108
  %v434 = vunpack.c.h.b16 %v108
  %v435 = vunpack.c.l.b16 %v109
  %v436 = vunpack.c.h.b16 %v109
  %v437 = vunpack.c.l.b16 %v110
  %v438 = vunpack.c.h.b16 %v110
  %v439 = vunpack.c.l.b16 %v111
  %v440 = vunpack.c.h.b16 %v111
  %v441 = vunpack.c.l.b16 %v112
  %v442 = vunpack.c.h.b16 %v112
  %v443 = vunpack.c.l.b16 %v113
  %v444 = vunpack.c.h.b16 %v113
  %v445 = vunpack.c.l.b16 %v114
  %v446 = vunpack.c.h.b16 %v114
  %v447 = vunpack.c.l.b16 %v115
  %v448 = vunpack.c.h.b16 %v115
  %v449 = vunpack.c.l.b16 %v116
  %v450 = vunpack.c.h.b16 %v116
  %v451 = vunpack.c.l.b16 %v117
  %v452 = vunpack.c.h.b16 %v117
  %v453 = vunpack.c.l.b16 %v118
  %v454 = vunpack.c.h.b16 %v118
  %v455 = vunpack.c.l.b16 %v119
  %v456 = vunpack.c.h.b16 %v119
  %v457 = vunpack.c.l.b16 %v120
  %v458 = vunpack.c.h.b16 %v120
  %v459 = vunpack.c.l.b16 %v121
  %v460 = vunpack.c.h.b16 %v121
  %v461 = vunpack.c.l.b16 %v122
  %v462 = vunpack.c.h.b16 %v122
  %v463 = vunpack.c.l.b16 %v123
  %v464 = vunpack.c.h.b16 %v123
  %v465 = vunpack.c.l.b16 %v124
  %v466 = vunpack.c.h.b16 %v124
  %v467 = vunpack.c.l.b16 %v125
  %v468 = vunpack.c.h.b16 %v125
  %v469 = vunpack.c.l.b16 %v126
  %v470 = vunpack.c.h.b16 %v126
  %v471 = vunpack.c.l.b16 %v127
  %v472 = vunpack.c.h.b16 %v127
  %v473 = vunpack.c.l.b16 %v128
  %v474 = vunpack.c.h.b16 %v128
  %v475 = vunpack.c.l.b16 %v129
  %v476 = vunpack.c.h.b16 %v129
  %v477 = vunpack.c.l.b16 %v130
  %v478 = vunpack.c.h.b16 %v130
  %v479 = vunpack.c.l.b16 %v131
  %v480 = vunpack.c.h.b16 %v131
  %v481 = vunpack.c.l.b16 %v132
  %v482 = vunpack.c.h.b16 %v132
  %v483 = vunpack.c.l.b16 %v133
  %v484 = vunpack.c.h.b16 %v133
  %v485 = vunpack.c.l.b16 %v134
  %v486 = vunpack.c.h.b16 %v134
  %v487 = vunpack.c.l.b16 %v135
  %v488 = vunpack.c.h.b16 %v135
  %v489 = vunpack.c.l.b16 %v136
  %v490 = vunpack.c.h.b16 %v136
  %v491 = vunpack.c.l.b16 %v137
  %v492 = vunpack.c.h.b16 %v137
  %v493 = vunpack.c.l.b16 %v138
  %v494 = vunpack.c.h.b16 %v138
  %v495 = vunpack.c.l.b16 %v139
  %v496 = vunpack.c.h.b16 %v139
  %v497 = vunpack.c.l.b16 %v140
  %v498 = vunpack.c.h.b16 %v140
  %v499 = vunpack.c.l.b16 %v141
  %v500 = vunpack.c.h.b16 %v141
  %v501 = vunpack.c.l.b16 %v142
  %v502 = vunpack.c.h.b16 %v142
  %v503 = vunpack.c.l.b16 %v143
  %v504 = vunpack.c.h.b16 %v143
  %v505 = vunpack.c.l.b16 %v144
  %v506 = vunpack.c.h.b16 %v144
  %v507 = vunpack.c.l.b16 %v145
  %v508 = vunpack.c.h.b16 %v145
  %v509 = vunpack.c.l.b16 %v146
  %v510 = vunpack.c.h.b16 %v146
  %v511 = vunpack.c.l.b16 %v147
  %v512 = vunpack.c.h.b16 %v147
  %v513 = vunpack.c.l.b16 %v148
  %v514 = vunpack.c.h.b16 %v148
  %v515 = vunpack.c.l.b16 %v149
  %v516 = vunpack.c.h.b16 %v149
  %v517 = vunpack.c.l.b16 %v150
  %v518 = vunpack.c.h.b16 %v150
  %v519 = vunpack.c.l.b16 %v151
  %v520 = vunpack.c.h.b16 %v151
  %v521 = vunpack.c.l.b16 %v152
  %v522 = vunpack.c.h.b16 %v152
  %v523 = vunpack.c.l.b16 %v153
  %v524 = vunpack.c.h.b16 %v153
  %v525 = vunpack.c.l.b16 %v154
  %v526 = vunpack.c.h.b16 %v154
  %v527 = vunpack.c.l.b16 %v155
  %v528 = vunpack.c.h.b16 %v155
  %v529 = vunpack.c.l.b16 %v156
  %v530 = vunpack.c.h.b16 %v156
  %v531 = vunpack.c.l.b16 %v157
  %v532 = vunpack.c.h.b16 %v157
  %v533 = vunpack.c.l.b16 %v158
  %v534 = vunpack.c.h.b16 %v158
  %v535 = vunpack.c.l.b16 %v159
  %v536 = vunpack.c.h.b16 %v159
  %v537 = vunpack.c.l.b16 %v160
  %v538 = vunpack.c.h.b16 %v160
  %v539 = vunpack.c.l.b16 %v161
  %v540 = vunpack.c.h.b16 %v161
  %v541 = vunpack.c.l.b16 %v162
  %v542 = vunpack.c.h.b16 %v162
  %v543 = vunpack.c.l.b16 %v163
  %v544 = vunpack.c.h.b16 %v163
  %v545 = vunpack.c.l.b16 %v164
  %v546 = vunpack.c.h.b16 %v164
  %v547 = vunpack.c.l.b16 %v165
  %v548 = vunpack.c.h.b16 %v165
  %v549 = vunpack.c.l.b16 %v166
  %v550 = vunpack.c.h.b16 %v166
  %v551 = vunpack.c.l.b16 %v167
  %v552 = vunpack.c.h.b16 %v167
  %v553 = vunpack.c.l.b16 %v168
  %v554 = vunpack.c.h.b16 %v168
  %v555 = vunpack.c.l.b16 %v169
  %v556 = vunpack.c.h.b16 %v169
  %v557 = vunpack.c.l.b16 %v170
  %v558 = vunpack.c.h.b16 %v170
  %v559 = vunpack.c.l.b16 %v171
  %v560 = vunpack.c.h.b16 %v171
  %v561 = vunpack.c.l.b16 %v172
  %v562 = vunpack.c.h.b16 %v172
  %v563 = vunpack.c.l.b16 %v173
  %v564 = vunpack.c.h.b16 %v173
  %v565 = vunpack.c.l.b16 %v174
  %v566 = vunpack.c.h.b16 %v174
  %v567 = vunpack.c.l.b16 %v175
  %v568 = vunpack.c.h.b16 %v175
  %v569 = vunpack.c.l.b16 %v176
  %v570 = vunpack.c.h.b16 %v176
  %v571 = vunpack.c.l.b16 %v177
  %v572 = vunpack.c.h.b16 %v177
  %v573 = vunpack.c.l.b16 %v178
  %v574 = vunpack.c.h.b16 %v178
  %v575 = vpack.c.b16 %v321, %v319
  %v576 = vpack.c.b16 %v322, %v320
  %v577 = vpack.c.b16 %v325, %v323
  %v578 = vpack.c.b16 %v326, %v324
  %v579 = vpack.c.b16 %v329, %v327
  %v580 = vpack.c.b16 %v330, %v328
  %v581 = vpack.c.b16 %v333, %v331
  %v582 = vpack.c.b16 %v334, %v332
  %v583 = vpack.c.b16 %v337, %v335
  %v584 = vpack.c.b16 %v338, %v336
  %v585 = vpack.c.b16 %v341, %v339
  %v586 = vpack.c.b16 %v342, %v340
  %v587 = vpack.c.b16 %v345, %v343
  %v588 = vpack.c.b16 %v346, %v344
  %v589 = vpack.c.b16 %v349, %v347
  %v590 = vpack.c.b16 %v350, %v348
  %v591 = vpack.c.b16 %v353, %v351
  %v592 = vpack.c.b16 %v354, %v352
  %v593 = vpack.c.b16 %v357, %v355
  %v594 = vpack.c.b16 %v358, %v356
  %v595 = vpack.c.b16 %v361, %v359
  %v596 = vpack.c.b16 %v362, %v360
  %v597 = vpack.c.b16 %v365, %v363
  %v598 = vpack.c.b16 %v366, %v364
  %v599 = vpack.c.b16 %v369, %v367
  %v600 = vpack.c.b16 %v370, %v368
  %v601 = vpack.c.b16 %v373, %v371
  %v602 = vpack.c.b16 %v374, %v372
  %v603 = vpack.c.b16 %v377, %v375
  %v604 = vpack.c.b16 %v378, %v376
  %v605 = vpack.c.b16 %v381, %v379
  %v606 = vpack.c.b16 %v382, %v380
  %v607 = vpack.c.b16 %v385, %v383
  %v608 = vpack.c.b16 %v386, %v384
  %v609 = vpack.c.b16 %v389, %v387
  %v610 = vpack.c.b16 %v390, %v388
  %v611 = vpack.c.b16 %v393, %v391
  %v612 = vpack.c.b16 %v394, %v392
  %v613 = vpack.c.b16 %v397, %v395
  %v614 = vpack.c.b16 %v398, %v396
  %v615 = vpack.c.b16 %v401, %v399
  %v616 = vpack.c.b16 %v402, %v400
  %v617 = vpack.c.b16 %v405, %v403
  %v618 = vpack.c.b16 %v406, %v404
  %v619 = vpack.c.b16 %v409, %v407
  %v620 = vpack.c.b16 %v410, %v408
  %v621 = vpack.c.b16 %v413, %v411
  %v622 = vpack.c.b16 %v414, %v412
  %v623 = vpack.c.b16 %v417, %v415
  %v624 = vpack.c.b16 %v418, %v416
  %v625 = vpack.c.b16 %v421, %v419
  %v626 = vpack.c.b16 %v422, %v420
  %v627 = vpack.c.b16 %v425, %v423
  %v628 = vpack.c.b16 %v426, %v424
  %v629 = vpack.c.b16 %v429, %v427
  %v630 = vpack.c.b16 %v430, %v428
  %v631 = vpack.c.b16 %v433, %v431
  %v632 = vpack.c.b16 %v434, %v432
  %v633 = vpack.c.b16 %v437, %v435
  %v634 = vpack.c.b16 %v438, %v436
  %v635 = vpack.c.b16 %v441, %v439
  %v636 = vpack.c.b16 %v442, %v440
  %v637 = vpack.c.b16 %v445, %v443
  %v638 = vpack.c.b16 %v446, %v444
  %v639 = vpack.c.b16 %v449, %v447
  %v640 = vpack.c.b16 %v450, %v448
  %v641 = vpack.c.b16 %v453, %v451
  %v642 = vpack.c.b16 %v454, %v452
  %v643 = vpack.c.b16 %v457, %v455
  %v644 = vpack.c.b16 %v458, %v456
  %v645 = vpack.c.b16 %v461, %v459
  %v646 = vpack.c.b16 %v462, %v460
  %v647 = vpack.c.b16 %v465, %v463
  %v648 = vpack.c.b16 %v466, %v464
  %v649 = vpack.c.b16 %v469, %v467
  %v650 = vpack.c.b16 %v470, %v468
  %v651 = vpack.c.b16 %v473, %v471
  %v652 = vpack.c.b16 %v474, %v472
  %v653 = vpack.c.b16 %v477, %v475
  %v654 = vpack.c.b16 %v478, %v476
  %v655 = vpack.c.b16 %v481, %v479
  %v656 = vpack.c.b16 %v482, %v480
  %v657 = vpack.c.b16 %v485, %v483
  %v658 = vpack.c.b16 %v486, %v484
  %v659 = vpack.c.b16 %v489, %v487
  %v660 = vpack.c.b16 %v490, %v488
  %v661 = vpack.c.b16 %v493, %v491
  %v662 = vpack.c.b16 %v494, %v492
  %v663 = vpack.c.b16 %v497, %v495
  %v664 = vpack.c.b16 %v498, %v496
  %v665 = vpack.c.b16 %v501, %v499
  %v666 = vpack.c.b16 %v502, %v500
  %v667 = vpack.c.b16 %v505, %v503
  %v668 = vpack.c.b16 %v506, %v504
  %v669 = vpack.c.b16 %v509, %v507
  %v670 = vpack.c.b16 %v510, %v508
  %v671 = vpack.c.b16 %v513, %v511
  %v672 = vpack.c.b16 %v514, %v512
  %v673 = vpack.c.b16 %v517, %v515
  %v674 = vpack.c.b16 %v518, %v516
  %v675 = vpack.c.b16 %v521, %v519
  %v676 = vpack.c.b16 %v522, %v520
  %v677 = vpack.c.b16 %v525, %v523
  %v678 = vpack.c.b16 %v526, %v524
  %v679 = vpack.c.b16 %v529, %v527
  %v680 = vpack.c.b16 %v530, %v528
  %v681 = vpack.c.b16 %v533, %v531
  %v682 = vpack.c.b16 %v534, %v532
  %v683 = vpack.c.b16 %v537, %v535
  %v684 = vpack.c.b16 %v538, %v536
  %v685 = vpack.c.b16 %v541, %v539
  %v686 = vpack.c.b16 %v542, %v540
  %v687 = vpack.c.b16 %v545, %v543
  %v688 = vpack.c.b16 %v546, %v544
  %v689 = vpack.c.b16 %v549, %v547
  %v690 = vpack.c.b16 %v550, %v548
  %v691 = vpack.c.b16 %v553, %v551
  %v692 = vpack.c.b16 %v554, %v552
  %v693 = vpack.c.b16 %v557, %v555
  %v694 = vpack.c.b16 %v558, %v556
  %v695 = vpack.c.b16 %v561, %v559
  %v696 = vpack.c.b16 %v562, %v560
  %v697 = vpack.c.b16 %v565, %v563
  %v698 = vpack.c.b16 %v566, %v564
  %v699 = vpack.c.b16 %v569, %v567
  %v700 = vpack.c.b16 %v570, %v568
  %v701 = vpack.c.b16 %v573, %v571
  %v702 = vpack.c.b16 %v574, %v572
  %831 = vmatprep.subr.bf16.mxu0 %v576
  %832 = vmatpush1.bf16.msra.mxu0 %v575
  %833 = vmatprep.subr.bf16.mxu0 %v578
  %834 = vmatpush1.bf16.msra.mxu0 %v577
  %835 = vmatprep.subr.bf16.mxu0 %v580
  %836 = vmatpush1.bf16.msra.mxu0 %v579
  %837 = vmatprep.subr.bf16.mxu0 %v582
  %838 = vmatpush1.bf16.msra.mxu0 %v581
  %839 = vmatprep.subr.bf16.mxu0 %v584
  %840 = vmatpush1.bf16.msra.mxu0 %v583
  %841 = vmatprep.subr.bf16.mxu0 %v586
  %842 = vmatpush1.bf16.msra.mxu0 %v585
  %843 = vmatprep.subr.bf16.mxu0 %v588
  %844 = vmatpush1.bf16.msra.mxu0 %v587
  %845 = vmatprep.subr.bf16.mxu0 %v590
  %846 = vmatpush1.bf16.msra.mxu0 %v589
  %847 = vmatprep.subr.bf16.mxu0 %v592
  %848 = vmatpush1.bf16.msra.mxu0 %v591
  %849 = vmatprep.subr.bf16.mxu0 %v594
  %850 = vmatpush1.bf16.msra.mxu0 %v593
  %851 = vmatprep.subr.bf16.mxu0 %v596
  %852 = vmatpush1.bf16.msra.mxu0 %v595
  %853 = vmatprep.subr.bf16.mxu0 %v598
  %854 = vmatpush1.bf16.msra.mxu0 %v597
  %855 = vmatprep.subr.bf16.mxu0 %v600
  %856 = vmatpush1.bf16.msra.mxu0 %v599
  %857 = vmatprep.subr.bf16.mxu0 %v602
  %858 = vmatpush1.bf16.msra.mxu0 %v601
  %859 = vmatprep.subr.bf16.mxu0 %v604
  %860 = vmatpush1.bf16.msra.mxu0 %v603
  %861 = vmatprep.subr.bf16.mxu0 %v606
  %862 = vmatpush1.bf16.msra.mxu0 %v605
  %863 = vmatprep.mubr.bf16.mxu0 %v44
  %864 = vmatmul.mubr.bf16.gmra.mrb[0].mxu0 %v43
  %v865 = vpop.f32.mrb[0].mxu0
  %v866 = vadd.f32 %v184, %v865
  %v867 = vpop.f32.mrb[0].mxu0
  %v868 = vadd.f32 %v188, %v867
  %v869 = vpop.f32.mrb[0].mxu0
  %v870 = vpop.f32.mrb[0].mxu0
  %871 = vdwg.mxu0
  %872 = vmatprep.subr.bf16.mxu0 %v608
  %873 = vmatpush1.bf16.msra.mxu0 %v607
  %874 = vmatprep.subr.bf16.mxu0 %v610
  %875 = vmatpush1.bf16.msra.mxu0 %v609
  %876 = vmatprep.subr.bf16.mxu0 %v612
  %877 = vmatpush1.bf16.msra.mxu0 %v611
  %878 = vmatprep.subr.bf16.mxu0 %v614
  %879 = vmatpush1.bf16.msra.mxu0 %v613
  %880 = vmatprep.subr.bf16.mxu0 %v616
  %881 = vmatpush1.bf16.msra.mxu0 %v615
  %882 = vmatprep.subr.bf16.mxu0 %v618
  %883 = vmatpush1.bf16.msra.mxu0 %v617
  %884 = vmatprep.subr.bf16.mxu0 %v620
  %885 = vmatpush1.bf16.msra.mxu0 %v619
  %886 = vmatprep.subr.bf16.mxu0 %v622
  %887 = vmatpush1.bf16.msra.mxu0 %v621
  %888 = vmatprep.subr.bf16.mxu0 %v624
  %889 = vmatpush1.bf16.msra.mxu0 %v623
  %890 = vmatprep.subr.bf16.mxu0 %v626
  %891 = vmatpush1.bf16.msra.mxu0 %v625
  %892 = vmatprep.subr.bf16.mxu0 %v628
  %893 = vmatpush1.bf16.msra.mxu0 %v627
  %894 = vmatprep.subr.bf16.mxu0 %v630
  %895 = vmatpush1.bf16.msra.mxu0 %v629
  %896 = vmatprep.subr.bf16.mxu0 %v632
  %897 = vmatpush1.bf16.msra.mxu0 %v631
  %898 = vmatprep.subr.bf16.mxu0 %v634
  %899 = vmatpush1.bf16.msra.mxu0 %v633
  %900 = vmatprep.subr.bf16.mxu0 %v636
  %901 = vmatpush1.bf16.msra.mxu0 %v635
  %902 = vmatprep.subr.bf16.mxu0 %v638
  %903 = vmatpush1.bf16.msra.mxu0 %v637
  %904 = vmatprep.mubr.bf16.mxu0 %v46
  %905 = vmatmul.mubr.bf16.gmra.mrb[0].mxu0 %v45
  %v906 = vpop.f32.mrb[0].mxu0
  %v907 = vadd.f32 %v866, %v906
  %v908 = vpop.f32.mrb[0].mxu0
  %v909 = vadd.f32 %v868, %v908
  %v910 = vpop.f32.mrb[0].mxu0
  %v911 = vpop.f32.mrb[0].mxu0
  %912 = vdwg.mxu0
  %913 = vmatprep.subr.bf16.mxu0 %v640
  %914 = vmatpush1.bf16.msra.mxu0 %v639
  %915 = vmatprep.subr.bf16.mxu0 %v642
  %916 = vmatpush1.bf16.msra.mxu0 %v641
  %917 = vmatprep.subr.bf16.mxu0 %v644
  %918 = vmatpush1.bf16.msra.mxu0 %v643
  %919 = vmatprep.subr.bf16.mxu0 %v646
  %920 = vmatpush1.bf16.msra.mxu0 %v645
  %921 = vmatprep.subr.bf16.mxu0 %v648
  %922 = vmatpush1.bf16.msra.mxu0 %v647
  %923 = vmatprep.subr.bf16.mxu0 %v650
  %924 = vmatpush1.bf16.msra.mxu0 %v649
  %925 = vmatprep.subr.bf16.mxu0 %v652
  %926 = vmatpush1.bf16.msra.mxu0 %v651
  %927 = vmatprep.subr.bf16.mxu0 %v654
  %928 = vmatpush1.bf16.msra.mxu0 %v653
  %929 = vmatprep.subr.bf16.mxu0 %v656
  %930 = vmatpush1.bf16.msra.mxu0 %v655
  %931 = vmatprep.subr.bf16.mxu0 %v658
  %932 = vmatpush1.bf16.msra.mxu0 %v657
  %933 = vmatprep.subr.bf16.mxu0 %v660
  %934 = vmatpush1.bf16.msra.mxu0 %v659
  %935 = vmatprep.subr.bf16.mxu0 %v662
  %936 = vmatpush1.bf16.msra.mxu0 %v661
  %937 = vmatprep.subr.bf16.mxu0 %v664
  %938 = vmatpush1.bf16.msra.mxu0 %v663
  %939 = vmatprep.subr.bf16.mxu0 %v666
  %940 = vmatpush1.bf16.msra.mxu0 %v665
  %941 = vmatprep.subr.bf16.mxu0 %v668
  %942 = vmatpush1.bf16.msra.mxu0 %v667
  %943 = vmatprep.subr.bf16.mxu0 %v670
  %944 = vmatpush1.bf16.msra.mxu0 %v669
  %945 = vmatprep.mubr.bf16.mxu0 %v48
  %946 = vmatmul.mubr.bf16.gmra.mrb[0].mxu0 %v47
  %v947 = vpop.f32.mrb[0].mxu0
  %v948 = vadd.f32 %v907, %v947
  %v949 = vpop.f32.mrb[0].mxu0
  %v950 = vadd.f32 %v909, %v949
  %v951 = vpop.f32.mrb[0].mxu0
  %v952 = vpop.f32.mrb[0].mxu0
  %953 = vdwg.mxu0
  %954 = vmatprep.subr.bf16.mxu0 %v672
  %955 = vmatpush1.bf16.msra.mxu0 %v671
  %956 = vmatprep.subr.bf16.mxu0 %v674
  %957 = vmatpush1.bf16.msra.mxu0 %v673
  %958 = vmatprep.subr.bf16.mxu0 %v676
  %959 = vmatpush1.bf16.msra.mxu0 %v675
  %960 = vmatprep.subr.bf16.mxu0 %v678
  %961 = vmatpush1.bf16.msra.mxu0 %v677
  %962 = vmatprep.subr.bf16.mxu0 %v680
  %963 = vmatpush1.bf16.msra.mxu0 %v679
  %964 = vmatprep.subr.bf16.mxu0 %v682
  %965 = vmatpush1.bf16.msra.mxu0 %v681
  %966 = vmatprep.subr.bf16.mxu0 %v684
  %967 = vmatpush1.bf16.msra.mxu0 %v683
  %968 = vmatprep.subr.bf16.mxu0 %v686
  %969 = vmatpush1.bf16.msra.mxu0 %v685
  %970 = vmatprep.subr.bf16.mxu0 %v688
  %971 = vmatpush1.bf16.msra.mxu0 %v687
  %972 = vmatprep.subr.bf16.mxu0 %v690
  %973 = vmatpush1.bf16.msra.mxu0 %v689
  %974 = vmatprep.subr.bf16.mxu0 %v692
  %975 = vmatpush1.bf16.msra.mxu0 %v691
  %976 = vmatprep.subr.bf16.mxu0 %v694
  %977 = vmatpush1.bf16.msra.mxu0 %v693
  %978 = vmatprep.subr.bf16.mxu0 %v696
  %979 = vmatpush1.bf16.msra.mxu0 %v695
  %980 = vmatprep.subr.bf16.mxu0 %v698
  %981 = vmatpush1.bf16.msra.mxu0 %v697
  %982 = vmatprep.subr.bf16.mxu0 %v700
  %983 = vmatpush1.bf16.msra.mxu0 %v699
  %984 = vmatprep.subr.bf16.mxu0 %v702
  %985 = vmatpush1.bf16.msra.mxu0 %v701
  %986 = vmatprep.mubr.bf16.mxu0 %v50
  %987 = vmatmul.mubr.bf16.gmra.mrb[0].mxu0 %v49
  %v988 = vpop.f32.mrb[0].mxu0
  %v989 = vadd.f32 %v948, %v988
  %v990 = vpop.f32.mrb[0].mxu0
  %v991 = vadd.f32 %v950, %v990
  %v992 = vpop.f32.mrb[0].mxu0
  %v993 = vpop.f32.mrb[0].mxu0
  %994 = vdwg.mxu0
  %s995 = sld [smem:[#allocation2]]
  %vm996 = vcmp.ge.f32.partialorder %v989, 0.0
  %vm997 = vcmp.ge.f32.partialorder %v991, 0.0
  %v998 = vstv %s995
  %v999 = vmul.f32 %v998, %v989
  %v1000 = vmul.f32 %v998, %v991
  %v1001 = vsel %vm996, %v989, %v999
  %v1002 = vsel %vm997, %v991, %v1000
  %v1003 = vpack.c.bf16 %v1001, %v1001
  %v1004 = vpack.c.bf16 %v1002, %v1002
  %v1005 = vld [vmem:[%s4] sm:$0xff]
  %v1006 = vld [vmem:[%s4 + $0x8] sm:$0xff]
  %v1007 = vld [vmem:[%s4 + $0x10] sm:$0xff]
  %v1008 = vld [vmem:[%s4 + $0x18] sm:$0xff]
  %v1009 = vld [vmem:[%s4 + $0x20] sm:$0xff]
  %v1010 = vld [vmem:[%s4 + $0x28] sm:$0xff]
  %v1011 = vld [vmem:[%s4 + $0x30] sm:$0xff]
  %v1012 = vld [vmem:[%s4 + $0x38] sm:$0xff]
  %v1013 = vld [vmem:[%s4 + $0x40] sm:$0xff]
  %v1014 = vld [vmem:[%s4 + $0x48] sm:$0xff]
  %v1015 = vld [vmem:[%s4 + $0x50] sm:$0xff]
  %v1016 = vld [vmem:[%s4 + $0x58] sm:$0xff]
  %v1017 = vld [vmem:[%s4 + $0x60] sm:$0xff]
  %v1018 = vld [vmem:[%s4 + $0x68] sm:$0xff]
  %v1019 = vld [vmem:[%s4 + $0x70] sm:$0xff]
  %v1020 = vld [vmem:[%s4 + $0x78] sm:$0xff]
  %v1021 = vld [vmem:[%s4 + $0x80] sm:$0xff]
  %v1022 = vld [vmem:[%s4 + $0x88] sm:$0xff]
  %v1023 = vld [vmem:[%s4 + $0x90] sm:$0xff]
  %v1024 = vld [vmem:[%s4 + $0x98] sm:$0xff]
  %v1025 = vld [vmem:[%s4 + $0xa0] sm:$0xff]
  %v1026 = vld [vmem:[%s4 + $0xa8] sm:$0xff]
  %v1027 = vld [vmem:[%s4 + $0xb0] sm:$0xff]
  %v1028 = vld [vmem:[%s4 + $0xb8] sm:$0xff]
  %v1029 = vld [vmem:[%s4 + $0xc0] sm:$0xff]
  %v1030 = vld [vmem:[%s4 + $0xc8] sm:$0xff]
  %v1031 = vld [vmem:[%s4 + $0xd0] sm:$0xff]
  %v1032 = vld [vmem:[%s4 + $0xd8] sm:$0xff]
  %v1033 = vld [vmem:[%s4 + $0xe0] sm:$0xff]
  %v1034 = vld [vmem:[%s4 + $0xe8] sm:$0xff]
  %v1035 = vld [vmem:[%s4 + $0xf0] sm:$0xff]
  %v1036 = vld [vmem:[%s4 + $0xf8] sm:$0xff]
  %v1037 = vld [vmem:[%s5] sm:$0x3]
  %v1039 = vlaneseq
  %v1040 = vshrl.u32 %v1039, 7
  %v1041 = vsub.s32 0, %v1040
  %v1042 = vrot.slane %v1037, %v1041
  %v1043 = vlaneseq
  %v1044 = vshrl.u32 %v1043, 7
  %v1045 = vsub.s32 1, %v1044
  %v1046 = vrot.slane %v1037, %v1045
  %v1081 = vunpack.c.l.b16 %v1005
  %v1082 = vunpack.c.h.b16 %v1005
  %v1083 = vunpack.c.l.b16 %v1006
  %v1084 = vunpack.c.h.b16 %v1006
  %v1085 = vunpack.c.l.b16 %v1007
  %v1086 = vunpack.c.h.b16 %v1007
  %v1087 = vunpack.c.l.b16 %v1008
  %v1088 = vunpack.c.h.b16 %v1008
  %v1089 = vunpack.c.l.b16 %v1009
  %v1090 = vunpack.c.h.b16 %v1009
  %v1091 = vunpack.c.l.b16 %v1010
  %v1092 = vunpack.c.h.b16 %v1010
  %v1093 = vunpack.c.l.b16 %v1011
  %v1094 = vunpack.c.h.b16 %v1011
  %v1095 = vunpack.c.l.b16 %v1012
  %v1096 = vunpack.c.h.b16 %v1012
  %v1097 = vunpack.c.l.b16 %v1013
  %v1098 = vunpack.c.h.b16 %v1013
  %v1099 = vunpack.c.l.b16 %v1014
  %v1100 = vunpack.c.h.b16 %v1014
  %v1101 = vunpack.c.l.b16 %v1015
  %v1102 = vunpack.c.h.b16 %v1015
  %v1103 = vunpack.c.l.b16 %v1016
  %v1104 = vunpack.c.h.b16 %v1016
  %v1105 = vunpack.c.l.b16 %v1017
  %v1106 = vunpack.c.h.b16 %v1017
  %v1107 = vunpack.c.l.b16 %v1018
  %v1108 = vunpack.c.h.b16 %v1018
  %v1109 = vunpack.c.l.b16 %v1019
  %v1110 = vunpack.c.h.b16 %v1019
  %v1111 = vunpack.c.l.b16 %v1020
  %v1112 = vunpack.c.h.b16 %v1020
  %v1113 = vunpack.c.l.b16 %v1021
  %v1114 = vunpack.c.h.b16 %v1021
  %v1115 = vunpack.c.l.b16 %v1022
  %v1116 = vunpack.c.h.b16 %v1022
  %v1117 = vunpack.c.l.b16 %v1023
  %v1118 = vunpack.c.h.b16 %v1023
  %v1119 = vunpack.c.l.b16 %v1024
  %v1120 = vunpack.c.h.b16 %v1024
  %v1121 = vunpack.c.l.b16 %v1025
  %v1122 = vunpack.c.h.b16 %v1025
  %v1123 = vunpack.c.l.b16 %v1026
  %v1124 = vunpack.c.h.b16 %v1026
  %v1125 = vunpack.c.l.b16 %v1027
  %v1126 = vunpack.c.h.b16 %v1027
  %v1127 = vunpack.c.l.b16 %v1028
  %v1128 = vunpack.c.h.b16 %v1028
  %v1129 = vunpack.c.l.b16 %v1029
  %v1130 = vunpack.c.h.b16 %v1029
  %v1131 = vunpack.c.l.b16 %v1030
  %v1132 = vunpack.c.h.b16 %v1030
  %v1133 = vunpack.c.l.b16 %v1031
  %v1134 = vunpack.c.h.b16 %v1031
  %v1135 = vunpack.c.l.b16 %v1032
  %v1136 = vunpack.c.h.b16 %v1032
  %v1137 = vunpack.c.l.b16 %v1033
  %v1138 = vunpack.c.h.b16 %v1033
  %v1139 = vunpack.c.l.b16 %v1034
  %v1140 = vunpack.c.h.b16 %v1034
  %v1141 = vunpack.c.l.b16 %v1035
  %v1142 = vunpack.c.h.b16 %v1035
  %v1143 = vunpack.c.l.b16 %v1036
  %v1144 = vunpack.c.h.b16 %v1036
  %v1145 = vpack.c.b16 %v1083, %v1081
  %v1146 = vpack.c.b16 %v1084, %v1082
  %v1147 = vpack.c.b16 %v1087, %v1085
  %v1148 = vpack.c.b16 %v1088, %v1086
  %v1149 = vpack.c.b16 %v1091, %v1089
  %v1150 = vpack.c.b16 %v1092, %v1090
  %v1151 = vpack.c.b16 %v1095, %v1093
  %v1152 = vpack.c.b16 %v1096, %v1094
  %v1153 = vpack.c.b16 %v1099, %v1097
  %v1154 = vpack.c.b16 %v1100, %v1098
  %v1155 = vpack.c.b16 %v1103, %v1101
  %v1156 = vpack.c.b16 %v1104, %v1102
  %v1157 = vpack.c.b16 %v1107, %v1105
  %v1158 = vpack.c.b16 %v1108, %v1106
  %v1159 = vpack.c.b16 %v1111, %v1109
  %v1160 = vpack.c.b16 %v1112, %v1110
  %v1161 = vpack.c.b16 %v1115, %v1113
  %v1162 = vpack.c.b16 %v1116, %v1114
  %v1163 = vpack.c.b16 %v1119, %v1117
  %v1164 = vpack.c.b16 %v1120, %v1118
  %v1165 = vpack.c.b16 %v1123, %v1121
  %v1166 = vpack.c.b16 %v1124, %v1122
  %v1167 = vpack.c.b16 %v1127, %v1125
  %v1168 = vpack.c.b16 %v1128, %v1126
  %v1169 = vpack.c.b16 %v1131, %v1129
  %v1170 = vpack.c.b16 %v1132, %v1130
  %v1171 = vpack.c.b16 %v1135, %v1133
  %v1172 = vpack.c.b16 %v1136, %v1134
  %v1173 = vpack.c.b16 %v1139, %v1137
  %v1174 = vpack.c.b16 %v1140, %v1138
  %v1175 = vpack.c.b16 %v1143, %v1141
  %v1176 = vpack.c.b16 %v1144, %v1142
  %1209 = vmatprep.subr.bf16.mxu0 %v1146
  %1210 = vmatpush1.bf16.msra.mxu0 %v1145
  %1211 = vmatprep.subr.bf16.mxu0 %v1148
  %1212 = vmatpush1.bf16.msra.mxu0 %v1147
  %1213 = vmatprep.subr.bf16.mxu0 %v1150
  %1214 = vmatpush1.bf16.msra.mxu0 %v1149
  %1215 = vmatprep.subr.bf16.mxu0 %v1152
  %1216 = vmatpush1.bf16.msra.mxu0 %v1151
  %1217 = vmatprep.subr.bf16.mxu0 %v1154
  %1218 = vmatpush1.bf16.msra.mxu0 %v1153
  %1219 = vmatprep.subr.bf16.mxu0 %v1156
  %1220 = vmatpush1.bf16.msra.mxu0 %v1155
  %1221 = vmatprep.subr.bf16.mxu0 %v1158
  %1222 = vmatpush1.bf16.msra.mxu0 %v1157
  %1223 = vmatprep.subr.bf16.mxu0 %v1160
  %1224 = vmatpush1.bf16.msra.mxu0 %v1159
  %1225 = vmatprep.subr.bf16.mxu0 %v1162
  %1226 = vmatpush1.bf16.msra.mxu0 %v1161
  %1227 = vmatprep.subr.bf16.mxu0 %v1164
  %1228 = vmatpush1.bf16.msra.mxu0 %v1163
  %1229 = vmatprep.subr.bf16.mxu0 %v1166
  %1230 = vmatpush1.bf16.msra.mxu0 %v1165
  %1231 = vmatprep.subr.bf16.mxu0 %v1168
  %1232 = vmatpush1.bf16.msra.mxu0 %v1167
  %1233 = vmatprep.subr.bf16.mxu0 %v1170
  %1234 = vmatpush1.bf16.msra.mxu0 %v1169
  %1235 = vmatprep.subr.bf16.mxu0 %v1172
  %1236 = vmatpush1.bf16.msra.mxu0 %v1171
  %1237 = vmatprep.subr.bf16.mxu0 %v1174
  %1238 = vmatpush1.bf16.msra.mxu0 %v1173
  %1239 = vmatprep.subr.bf16.mxu0 %v1176
  %1240 = vmatpush1.bf16.msra.mxu0 %v1175
  %1241 = vmatprep.mubr.bf16.mxu0 %v1004
  %1242 = vmatmul.mubr.bf16.gmra.mrb[0].mxu0 %v1003
  %v1243 = vpop.f32.mrb[0].mxu0
  %v1244 = vadd.f32 %v1042, %v1243
  %v1245 = vpop.f32.mrb[0].mxu0
  %v1246 = vadd.f32 %v1046, %v1245
  %v1247 = vpop.f32.mrb[0].mxu0
  %v1248 = vpop.f32.mrb[0].mxu0
  %1249 = vdwg.mxu0
  %s1250 = sld [smem:[#allocation3]]
  %vm1251 = vcmp.ge.f32.partialorder %v1244, 0.0
  %vm1252 = vcmp.ge.f32.partialorder %v1246, 0.0
  %v1253 = vstv %s1250
  %v1254 = vmul.f32 %v1253, %v1244
  %v1255 = vmul.f32 %v1253, %v1246
  %v1256 = vsel %vm1251, %v1244, %v1254
  %v1257 = vsel %vm1252, %v1246, %v1255
  %v1258 = vpack.c.bf16 %v1256, %v1256
  %v1259 = vpack.c.bf16 %v1257, %v1257
  %v1260 = vld [vmem:[%s7] sm:$0xf]
  %v1261 = vld [vmem:[%s7 + $0x4] sm:$0xf]
  %v1262 = vld [vmem:[%s7 + $0x8] sm:$0xf]
  %v1263 = vld [vmem:[%s7 + $0xc] sm:$0xf]
  %v1264 = vld [vmem:[%s7 + $0x10] sm:$0xf]
  %v1265 = vld [vmem:[%s7 + $0x14] sm:$0xf]
  %v1266 = vld [vmem:[%s7 + $0x18] sm:$0xf]
  %v1267 = vld [vmem:[%s7 + $0x1c] sm:$0xf]
  %v1268 = vld [vmem:[%s7 + $0x20] sm:$0xf]
  %v1269 = vld [vmem:[%s7 + $0x24] sm:$0xf]
  %v1270 = vld [vmem:[%s7 + $0x28] sm:$0xf]
  %v1271 = vld [vmem:[%s7 + $0x2c] sm:$0xf]
  %v1272 = vld [vmem:[%s7 + $0x30] sm:$0xf]
  %v1273 = vld [vmem:[%s7 + $0x34] sm:$0xf]
  %v1274 = vld [vmem:[%s7 + $0x38] sm:$0xf]
  %v1275 = vld [vmem:[%s7 + $0x3c] sm:$0xf]
  %v1276 = vld [vmem:[%s7 + $0x40] sm:$0xf]
  %v1277 = vld [vmem:[%s7 + $0x44] sm:$0xf]
  %v1278 = vld [vmem:[%s7 + $0x48] sm:$0xf]
  %v1279 = vld [vmem:[%s7 + $0x4c] sm:$0xf]
  %v1280 = vld [vmem:[%s7 + $0x50] sm:$0xf]
  %v1281 = vld [vmem:[%s7 + $0x54] sm:$0xf]
  %v1282 = vld [vmem:[%s7 + $0x58] sm:$0xf]
  %v1283 = vld [vmem:[%s7 + $0x5c] sm:$0xf]
  %v1284 = vld [vmem:[%s7 + $0x60] sm:$0xf]
  %v1285 = vld [vmem:[%s7 + $0x64] sm:$0xf]
  %v1286 = vld [vmem:[%s7 + $0x68] sm:$0xf]
  %v1287 = vld [vmem:[%s7 + $0x6c] sm:$0xf]
  %v1288 = vld [vmem:[%s7 + $0x70] sm:$0xf]
  %v1289 = vld [vmem:[%s7 + $0x74] sm:$0xf]
  %v1290 = vld [vmem:[%s7 + $0x78] sm:$0xf]
  %v1291 = vld [vmem:[%s7 + $0x7c] sm:$0xf]
  %v1292 = vld [vmem:[%s8] sm:$0x1]
  %v1294 = vlaneseq
  %v1295 = vshrl.u32 %v1294, 7
  %v1296 = vsub.s32 0, %v1295
  %v1297 = vrot.slane %v1292, %v1296
  %v1331 = vunpack.c.l.b16 %v1260
  %v1332 = vunpack.c.l.b16 %v1261
  %v1333 = vunpack.c.l.b16 %v1262
  %v1334 = vunpack.c.l.b16 %v1263
  %v1335 = vunpack.c.l.b16 %v1264
  %v1336 = vunpack.c.l.b16 %v1265
  %v1337 = vunpack.c.l.b16 %v1266
  %v1338 = vunpack.c.l.b16 %v1267
  %v1339 = vunpack.c.l.b16 %v1268
  %v1340 = vunpack.c.l.b16 %v1269
  %v1341 = vunpack.c.l.b16 %v1270
  %v1342 = vunpack.c.l.b16 %v1271
  %v1343 = vunpack.c.l.b16 %v1272
  %v1344 = vunpack.c.l.b16 %v1273
  %v1345 = vunpack.c.l.b16 %v1274
  %v1346 = vunpack.c.l.b16 %v1275
  %v1347 = vunpack.c.l.b16 %v1276
  %v1348 = vunpack.c.l.b16 %v1277
  %v1349 = vunpack.c.l.b16 %v1278
  %v1350 = vunpack.c.l.b16 %v1279
  %v1351 = vunpack.c.l.b16 %v1280
  %v1352 = vunpack.c.l.b16 %v1281
  %v1353 = vunpack.c.l.b16 %v1282
  %v1354 = vunpack.c.l.b16 %v1283
  %v1355 = vunpack.c.l.b16 %v1284
  %v1356 = vunpack.c.l.b16 %v1285
  %v1357 = vunpack.c.l.b16 %v1286
  %v1358 = vunpack.c.l.b16 %v1287
  %v1359 = vunpack.c.l.b16 %v1288
  %v1360 = vunpack.c.l.b16 %v1289
  %v1361 = vunpack.c.l.b16 %v1290
  %v1362 = vunpack.c.l.b16 %v1291
  %v1363 = vpack.c.b16 %v1332, %v1331
  %v1364 = vpack.c.b16 %v1334, %v1333
  %v1365 = vpack.c.b16 %v1336, %v1335
  %v1366 = vpack.c.b16 %v1338, %v1337
  %v1367 = vpack.c.b16 %v1340, %v1339
  %v1368 = vpack.c.b16 %v1342, %v1341
  %v1369 = vpack.c.b16 %v1344, %v1343
  %v1370 = vpack.c.b16 %v1346, %v1345
  %v1371 = vpack.c.b16 %v1348, %v1347
  %v1372 = vpack.c.b16 %v1350, %v1349
  %v1373 = vpack.c.b16 %v1352, %v1351
  %v1374 = vpack.c.b16 %v1354, %v1353
  %v1375 = vpack.c.b16 %v1356, %v1355
  %v1376 = vpack.c.b16 %v1358, %v1357
  %v1377 = vpack.c.b16 %v1360, %v1359
  %v1378 = vpack.c.b16 %v1362, %v1361
  %1395 = vmatprep.subr.bf16.mxu0 0
  %1396 = vmatpush1.bf16.msra.mxu0 %v1363
  %1397 = vmatprep.subr.bf16.mxu0 0
  %1398 = vmatpush1.bf16.msra.mxu0 %v1364
  %1399 = vmatprep.subr.bf16.mxu0 0
  %1400 = vmatpush1.bf16.msra.mxu0 %v1365
  %1401 = vmatprep.subr.bf16.mxu0 0
  %1402 = vmatpush1.bf16.msra.mxu0 %v1366
  %1403 = vmatprep.subr.bf16.mxu0 0
  %1404 = vmatpush1.bf16.msra.mxu0 %v1367
  %1405 = vmatprep.subr.bf16.mxu0 0
  %1406 = vmatpush1.bf16.msra.mxu0 %v1368
  %1407 = vmatprep.subr.bf16.mxu0 0
  %1408 = vmatpush1.bf16.msra.mxu0 %v1369
  %1409 = vmatprep.subr.bf16.mxu0 0
  %1410 = vmatpush1.bf16.msra.mxu0 %v1370
  %1411 = vmatprep.subr.bf16.mxu0 0
  %1412 = vmatpush1.bf16.msra.mxu0 %v1371
  %1413 = vmatprep.subr.bf16.mxu0 0
  %1414 = vmatpush1.bf16.msra.mxu0 %v1372
  %1415 = vmatprep.subr.bf16.mxu0 0
  %1416 = vmatpush1.bf16.msra.mxu0 %v1373
  %1417 = vmatprep.subr.bf16.mxu0 0
  %1418 = vmatpush1.bf16.msra.mxu0 %v1374
  %1419 = vmatprep.subr.bf16.mxu0 0
  %1420 = vmatpush1.bf16.msra.mxu0 %v1375
  %1421 = vmatprep.subr.bf16.mxu0 0
  %1422 = vmatpush1.bf16.msra.mxu0 %v1376
  %1423 = vmatprep.subr.bf16.mxu0 0
  %1424 = vmatpush1.bf16.msra.mxu0 %v1377
  %1425 = vmatprep.subr.bf16.mxu0 0
  %1426 = vmatpush1.bf16.msra.mxu0 %v1378
  %1427 = vmatprep.mubr.bf16.mxu0 %v1259
  %1428 = vmatmul.mubr.bf16.gmra.mrb[0].mxu0 %v1258
  %v1429 = vpop.f32.mrb[0].mxu0
  %v1430 = vadd.f32 %v1297, %v1429
  %v1431 = vpop.f32.mrb[0].mxu0
  %v1432 = vpop.f32.mrb[0].mxu0
  %v1433 = vpop.f32.mrb[0].mxu0
  %1434 = vdwg.mxu0
  %v1435 = vmul.f32 %v1430, %v1430
  %vm1436 = vcmask 15360
  %v1437 = vsel %vm1436, %v1435, 0.0
  %1438 = vadd.xlane.f32.xlu0 %v1437
  %v1439 = vpop.xlane.xlu0 %1438
  %v1440 = vrsqrt.pop %v1439
  %v1441 = vmul.f32 %v1439, %v1440
  %vm1442 = vcmp.eq.f32.partialorder %v1439, inf
  %v1443 = vsel %vm1442, %v1439, %v1441
  %vm1444 = vcmp.eq.f32.partialorder %v1439, 0.0
  %v1445 = vand.u32 %v1439, 2147483648
  %v1446 = vsel %vm1444, %v1445, %v1443
  %v1447 = vrcp.pop %v1446
  %v1448 = vmul.f32 %v1430, %v1447
  %1449 = vst.msk [vmem:[%s9] sm:$0xff] %vm1436, %v1448
  // Predicated region
  $region38: #{embedding_net_l2_forward.5} parent=0 // pred_check
    _
  $region39: #{embedding_net_l2_forward.5} parent=0 // pred_check_branch
    %1451 = sbr.rel (0) target = $region41
  $region40: #{embedding_net_l2_forward.5} parent=0 // pred_region
    _
  $region41: #{embedding_net_l2_forward.5} parent=0 // pred_fallthru
    _
  // Predicated region
  $region42: #{embedding_net_l2_forward.5} parent=0 // pred_check
    _
  $region43: #{embedding_net_l2_forward.5} parent=0 // pred_check_branch
    %1453 = sbr.rel (0) target = $region45
  $region44: #{embedding_net_l2_forward.5} parent=0 // pred_region
    _
  $region45: #{embedding_net_l2_forward.5} parent=0 // pred_fallthru
    _

</llo_original>
